<compile_context>
chip_gen: v7x
topology: tpu7x:2x2x1
jax: 0.10.0
libtpu: 0.0.40
codegen_flags: <defaults>
</compile_context>

<pallas_src>
import functools

import jax
import jax.numpy as jnp
from jax.experimental import pallas as pl
from jax.experimental.pallas import tpu as pltpu

_GATE_STRIDE = 128  # each gate gets its own full 128-lane vreg slot


# ----------------------------------------------------------------------------
# Fused Pallas kernel: all LSTM layers + linear head in one invocation
# ----------------------------------------------------------------------------
def _fused_lstm_kernel(*refs, num_layers, hidden, seq_len, gate_stride):
    """Fused stacked-LSTM forward (wavefront across layers).

    refs layout (all VMEM):
      inputs:
        x_ref                 : (1, T, D_in)  f32
        w0ih_ref              : (D_in, 4G)    f32   layer-0 input weights
        w0hh_ref              : (G, 4G)       bf16  layer-0 recurrent weights
        b0_ref                : (1, 4G)       f32   layer-0 folded bias
        per layer l>0         : wcat_ref (2G, 4G) bf16, bias_ref (1, 4G) f32
        lw_ref                : (1, G)        f32   linear head weight (padded)
        lb_ref                : (1, 1)        f32   linear head bias
      outputs:
        out_ref (1,1) f32, hn_ref (1,H) f32, cn_ref (num_layers,H) f32
      scratch:
        gx_ref  (T, 4G) f32   layer-0 hoisted input projection

    Gate slots (host-prepped): slot 0=i, 1=f, 2=o, 3=g, each padded to G=128
    lanes; the g slot's weights/bias are pre-scaled by 2 so tanh is recovered
    as 2*sigmoid(2z)-1 inside the single per-step sigmoid pass.
    """
    G = gate_stride
    H = hidden
    T = seq_len
    L = num_layers

    x_ref = refs[0]
    w0ih_ref, w0hh_ref, b0_ref = refs[1], refs[2], refs[3]
    n_up = L - 1
    up_refs = refs[4:4 + 2 * n_up]
    base = 4 + 2 * n_up
    lw_ref, lb_ref = refs[base], refs[base + 1]
    out_ref, hn_ref, cn_ref = refs[base + 2], refs[base + 3], refs[base + 4]
    gx_ref = refs[base + 5]

    # Layer-0 hoisted full-sequence input projection -> VMEM scratch.
    # Runs once, off the serial critical path; rows are re-read per step so
    # no sublane extraction from a live vreg sits on the recurrence.
    gx_ref[...] = (jnp.dot(x_ref[0], w0ih_ref[...],
                           preferred_element_type=jnp.float32)
                   + b0_ref[...])                              # (T, 4G)

    # Hoist weight / bias loads out of the unrolled recurrence.
    w0hh = w0hh_ref[...]                                       # (G, 4G) bf16
    up_w = [up_refs[2 * i][...] for i in range(n_up)]          # (2G, 4G) bf16
    up_b = [up_refs[2 * i + 1][...] for i in range(n_up)]      # (1, 4G) f32

    def cell(gates, c):
        # One sigmoid pass over all 4 lane-aligned gate slots; tanh(g) was
        # folded on the host (g-gate pre-scaled by 2): tanh(z)=2*sigmoid(2z)-1.
        s = jax.nn.sigmoid(gates)                              # (1, 4G)
        i_g = s[:, 0 * G:1 * G]
        f_g = s[:, 1 * G:2 * G]
        o_g = s[:, 2 * G:3 * G]
        g_g = 2.0 * s[:, 3 * G:4 * G] - 1.0
        c_new = f_g * c + i_g * g_g
        h_new = o_g * jnp.tanh(c_new)
        return h_new, c_new

    h = [jnp.zeros((1, G), jnp.float32) for _ in range(L)]
    c = [jnp.zeros((1, G), jnp.float32) for _ in range(L)]

    # Fully unrolled wavefront recurrence: layer l at step t depends only on
    # layer l-1 at step t and layer l at step t-1 (no full-sequence barrier),
    # so the scheduler can overlap layer l step t with layer l-1 step t+1.
    for t in range(T):
        gates0 = gx_ref[t:t + 1, :] + jnp.dot(
            h[0].astype(jnp.bfloat16), w0hh,
            preferred_element_type=jnp.float32)                # (1, 4G)
        h[0], c[0] = cell(gates0, c[0])
        for l in range(1, L):
            # Fused per-step projection: [h_below(t), h_own(t-1)] @ [Wih;Whh].
            inp = jnp.concatenate([h[l - 1], h[l]],
                                  axis=-1).astype(jnp.bfloat16)  # (1, 2G)
            gates = (jnp.dot(inp, up_w[l - 1],
                             preferred_element_type=jnp.float32)
                     + up_b[l - 1])                             # (1, 4G)
            h[l], c[l] = cell(gates, c[l])

    # Linear head as a VPU multiply + lane reduce (no 1x1 MXU matmul).
    out_ref[...] = (jnp.sum(h[L - 1] * lw_ref[...], axis=-1, keepdims=True)
                    + lb_ref[...])
    hn_ref[...] = h[L - 1][:, :H]
    for l in range(L):
        cn_ref[l:l + 1, :] = c[l][:, :H]


# ----------------------------------------------------------------------------
# One-time host-side weight preparation (call at model-load time)
# ----------------------------------------------------------------------------
def _place_gates_t(w, H, G, dtype):
    """w: (4H, D) in PyTorch gate-row order (i, f, g, o).  Returns (D, 4G)
    transposed + lane-padded weights with gate k occupying lanes
    [k*G, k*G + H) in slot order (i, f, o, g); the g slot is pre-scaled by 2
    for the tanh->sigmoid fold."""
    D = w.shape[1]
    out = jnp.zeros((D, 4 * G), dtype)
    chunks = (w[0:H], w[H:2 * H], w[3 * H:4 * H], 2.0 * w[2 * H:3 * H])
    for k, wk in enumerate(chunks):
        out = out.at[:, k * G:k * G + H].set(wk.T.astype(dtype))
    return out


def _place_bias(b, H, G):
    out = jnp.zeros((1, 4 * G), jnp.float32)
    chunks = (b[0:H], b[H:2 * H], b[3 * H:4 * H], 2.0 * b[2 * H:3 * H])
    for k, bk in enumerate(chunks):
        out = out.at[0, k * G:k * G + H].set(bk.astype(jnp.float32))
    return out


def prepare_params(params, hidden_units, num_layers):
    """Gate re-slotting, transposition, b_ih+b_hh folding, tanh->sigmoid fold,
    per-layer [W_ih; W_hh] fusion for l>0, bf16 casts for recurrent MXU
    operands, and zero-padding.  Run ONCE, not per inference call."""
    H, G = hidden_units, _GATE_STRIDE
    prepped = []

    # Layer 0: the once-per-call input projection stays f32 (off critical path).
    w_ih, w_hh, b_ih, b_hh = params["lstm"][0]
    prepped.append(_place_gates_t(w_ih, H, G, jnp.float32))          # (D_in, 4G)
    w0hh = jnp.zeros((G, 4 * G), jnp.bfloat16)
    w0hh = w0hh.at[:H, :].set(_place_gates_t(w_hh, H, G, jnp.bfloat16))
    prepped.append(w0hh)                                             # (G, 4G)
    prepped.append(_place_bias(b_ih + b_hh, H, G))                   # (1, 4G)

    # Layers l > 0: single fused [h_below ; h_own] @ [W_ih ; W_hh] operand.
    for l in range(1, num_layers):
        w_ih, w_hh, b_ih, b_hh = params["lstm"][l]
        wcat = jnp.zeros((2 * G, 4 * G), jnp.bfloat16)
        wcat = wcat.at[0:H, :].set(_place_gates_t(w_ih, H, G, jnp.bfloat16))
        wcat = wcat.at[G:G + H, :].set(_place_gates_t(w_hh, H, G, jnp.bfloat16))
        prepped.append(wcat)                                         # (2G, 4G)
        prepped.append(_place_bias(b_ih + b_hh, H, G))               # (1, 4G)

    lw = jnp.zeros((1, G), jnp.float32)
    lw = lw.at[0, :H].set(params["linear_w"].reshape(H).astype(jnp.float32))
    prepped.append(lw)                                               # (1, G)
    prepped.append(params["linear_b"].reshape(1, 1).astype(jnp.float32))
    return tuple(prepped)


# ----------------------------------------------------------------------------
# Forward wrapper
# ----------------------------------------------------------------------------
@functools.partial(jax.jit, static_argnames=("num_layers", "hidden_units"))
def lstm_forward(x, prepped, num_layers, hidden_units):
    """Forward pass of the PyTorch `LSTM` module (eval mode), batch N=1.

    x: (1, T, D_in) batch_first float32.  `prepped` from prepare_params().
    Returns (out, (hn_unsq, cn)) matching torch:
      out (1,), hn_unsq (1, 1, H), cn (num_layers, 1, H)
    """
    H, G = hidden_units, _GATE_STRIDE
    T = x.shape[1]
    kernel = functools.partial(_fused_lstm_kernel, num_layers=num_layers,
                               hidden=H, seq_len=T, gate_stride=G)
    vmem = pl.BlockSpec(memory_space=pltpu.MemorySpace.VMEM)
    out, hn, cn = pl.pallas_call(
        kernel,
        out_shape=(jax.ShapeDtypeStruct((1, 1), jnp.float32),
                   jax.ShapeDtypeStruct((1, H), jnp.float32),
                   jax.ShapeDtypeStruct((num_layers, H), jnp.float32)),
        in_specs=[vmem] * (1 + len(prepped)),
        out_specs=(vmem, vmem, vmem),
        scratch_shapes=[pltpu.VMEM((T, 4 * G), jnp.float32)],
    )(x.astype(jnp.float32), *prepped)

    # TODO(synk): nn.Dropout(p=0.4) is identity in eval mode; training-mode
    # dropout masking is not implemented.
    # TODO(synk): the optional init_hc argument of the torch module is not
    # supported; only the default zero-initial-state path is implemented.
    return out.reshape(-1), (hn[None], cn[:, None, :])


# ----------------------------------------------------------------------------
# Deterministic parameter init (PyTorch default: U(-1/sqrt(H), 1/sqrt(H)))
# ----------------------------------------------------------------------------
def init_params(key, input_size, hidden_units, num_layers):
    H = hidden_units
    bound = 1.0 / (H ** 0.5)
    params = {"lstm": []}
    for l in range(num_layers):
        d_in = input_size if l == 0 else H
        key, k1, k2, k3, k4 = jax.random.split(key, 5)
        w_ih = jax.random.uniform(k1, (4 * H, d_in), jnp.float32, -bound, bound)
        w_hh = jax.random.uniform(k2, (4 * H, H), jnp.float32, -bound, bound)
        b_ih = jax.random.uniform(k3, (4 * H,), jnp.float32, -bound, bound)
        b_hh = jax.random.uniform(k4, (4 * H,), jnp.float32, -bound, bound)
        params["lstm"].append((w_ih, w_hh, b_ih, b_hh))
    key, k5, k6 = jax.random.split(key, 3)
    params["linear_w"] = jax.random.uniform(k5, (1, H), jnp.float32,
                                            -bound, bound)
    params["linear_b"] = jax.random.uniform(k6, (1,), jnp.float32,
                                            -bound, bound)
    return params


# ----------------------------------------------------------------------------
# Pure-JAX reference (PyTorch gate order/math, f32) for a correctness check
# ----------------------------------------------------------------------------
def reference_forward(x, params, num_layers, hidden_units):
    H = hidden_units
    seq = x[0]
    layer_in = seq
    hn_list, cn_list = [], []
    for l in range(num_layers):
        w_ih, w_hh, b_ih, b_hh = params["lstm"][l]
        h = jnp.zeros((H,), jnp.float32)
        c = jnp.zeros((H,), jnp.float32)
        ys = []
        for t in range(seq.shape[0]):
            g = layer_in[t] @ w_ih.T + b_ih + h @ w_hh.T + b_hh
            i = jax.nn.sigmoid(g[0 * H:1 * H])
            f = jax.nn.sigmoid(g[1 * H:2 * H])
            gg = jnp.tanh(g[2 * H:3 * H])
            o = jax.nn.sigmoid(g[3 * H:4 * H])
            c = f * c + i * gg
            h = o * jnp.tanh(c)
            ys.append(h)
        layer_in = jnp.stack(ys, axis=0)
        hn_list.append(h[None])
        cn_list.append(c[None])
    hn_last = hn_list[-1]
    out = (hn_last @ params["linear_w"].T + params["linear_b"]).reshape(-1)
    return out, (hn_last[None], jnp.stack(cn_list, axis=0))


# ----------------------------------------------------------------------------
if __name__ == "__main__":
    num_sensors = 3          # -> input_size = num_sensors + 1 = 4
    hidden_units = 32
    num_layers = 2
    T = 8
    input_size = num_sensors + 1

    key = jax.random.PRNGKey(0)
    key, kx = jax.random.split(key)
    x = jax.random.normal(kx, (1, T, input_size), jnp.float32)  # batch_first, N=1

    params = init_params(key, input_size, hidden_units, num_layers)
    prepped = prepare_params(params, hidden_units, num_layers)  # once, at load

    out, (hn_unsq, cn) = lstm_forward(x, prepped, num_layers, hidden_units)
    jax.block_until_ready((out, hn_unsq, cn))

    ref_out, (ref_hn, ref_cn) = reference_forward(x, params, num_layers,
                                                  hidden_units)
    assert out.shape == (1,)
    assert hn_unsq.shape == (1, 1, hidden_units)
    assert cn.shape == (num_layers, 1, hidden_units)
    # bf16 MXU operands on the recurrent path -> loosened tolerance vs f32 ref.
    assert jnp.allclose(out, ref_out, rtol=5e-2, atol=2e-2)
    assert jnp.allclose(hn_unsq, ref_hn, rtol=5e-2, atol=1e-2)
    assert jnp.allclose(cn, ref_cn, rtol=5e-2, atol=1e-2)

    print("KERNEL_OK")
</pallas_src>

<mosaic_0001>
module attributes {stable_mosaic.version = 11 : i64} {
  func.func @_fused_lstm_kernel(%arg0: memref<1x8x4xf32, #tpu.memory_space<vmem>>, %arg1: memref<4x512xf32, #tpu.memory_space<vmem>>, %arg2: memref<128x512xbf16, #tpu.memory_space<vmem>>, %arg3: memref<1x512xf32, #tpu.memory_space<vmem>>, %arg4: memref<256x512xbf16, #tpu.memory_space<vmem>>, %arg5: memref<1x512xf32, #tpu.memory_space<vmem>>, %arg6: memref<1x128xf32, #tpu.memory_space<vmem>>, %arg7: memref<1x1xf32, #tpu.memory_space<vmem>>, %arg8: memref<1x1xf32, #tpu.memory_space<vmem>>, %arg9: memref<1x32xf32, #tpu.memory_space<vmem>>, %arg10: memref<2x32xf32, #tpu.memory_space<vmem>>, %arg11: memref<8x512xf32, #tpu.memory_space<vmem>>) attributes {dimension_semantics = [], scalar_prefetch = 0 : i64, scratch_operands = 1 : i64, tpu.core_type = #tpu.core_type<tc>} {
    %c0 = arith.constant 0 : index
    %c0_0 = arith.constant 0 : index
    %c0_1 = arith.constant 0 : index
    %0 = vector.load %arg0[%c0, %c0_0, %c0_1] : memref<1x8x4xf32, #tpu.memory_space<vmem>>, vector<1x8x4xf32>
    %1 = vector.shape_cast %0 : vector<1x8x4xf32> to vector<8x4xf32>
    %c0_2 = arith.constant 0 : index
    %c0_3 = arith.constant 0 : index
    %2 = vector.load %arg1[%c0_2, %c0_3] : memref<4x512xf32, #tpu.memory_space<vmem>>, vector<4x512xf32>
    %cst = arith.constant dense<0.000000e+00> : vector<8x512xf32>
    %3 = tpu.matmul %1, %2, %cst {dimension_numbers = #tpu.dot_dimension_numbers<[1], [0], [0], [1], [0, 0, 1, 1], [], []>} : vector<8x4xf32>, vector<4x512xf32>, vector<8x512xf32> -> vector<8x512xf32>
    %c0_4 = arith.constant 0 : index
    %c0_5 = arith.constant 0 : index
    %4 = vector.load %arg3[%c0_4, %c0_5] : memref<1x512xf32, #tpu.memory_space<vmem>>, vector<1x512xf32>
    %5 = vector.broadcast %4 : vector<1x512xf32> to vector<8x512xf32>
    %6 = arith.addf %3, %5 : vector<8x512xf32>
    %c0_6 = arith.constant 0 : index
    %c0_7 = arith.constant 0 : index
    %7 = vector.load %arg11[%c0_6, %c0_7] : memref<8x512xf32, #tpu.memory_space<vmem>>, vector<8x512xf32>
    tpu.vector_store %arg11[%c0_6, %c0_7], %6 {strides = array<i32>} : memref<8x512xf32, #tpu.memory_space<vmem>>, vector<8x512xf32>,
    %c0_8 = arith.constant 0 : index
    %c0_9 = arith.constant 0 : index
    %8 = vector.load %arg2[%c0_8, %c0_9] : memref<128x512xbf16, #tpu.memory_space<vmem>>, vector<128x512xbf16>
    %c0_10 = arith.constant 0 : index
    %c0_11 = arith.constant 0 : index
    %9 = vector.load %arg4[%c0_10, %c0_11] : memref<256x512xbf16, #tpu.memory_space<vmem>>, vector<256x512xbf16>
    %c0_12 = arith.constant 0 : index
    %c0_13 = arith.constant 0 : index
    %10 = vector.load %arg5[%c0_12, %c0_13] : memref<1x512xf32, #tpu.memory_space<vmem>>, vector<1x512xf32>
    %cst_14 = arith.constant 0.000000e+00 : f32
    %11 = vector.broadcast %cst_14 : f32 to vector<1x128xf32>
    %cst_15 = arith.constant 0.000000e+00 : f32
    %12 = vector.broadcast %cst_15 : f32 to vector<1x128xf32>
    %cst_16 = arith.constant 0.000000e+00 : f32
    %13 = vector.broadcast %cst_16 : f32 to vector<1x128xf32>
    %cst_17 = arith.constant 0.000000e+00 : f32
    %14 = vector.broadcast %cst_17 : f32 to vector<1x128xf32>
    %c0_18 = arith.constant 0 : index
    %c0_19 = arith.constant 0 : index
    %15 = vector.load %arg11[%c0_18, %c0_19] : memref<8x512xf32, #tpu.memory_space<vmem>>, vector<1x512xf32>
    %16 = arith.truncf %11 : vector<1x128xf32> to vector<1x128xbf16>
    %cst_20 = arith.constant dense<0.000000e+00> : vector<1x512xf32>
    %17 = tpu.matmul %16, %8, %cst_20 {dimension_numbers = #tpu.dot_dimension_numbers<[1], [0], [0], [1], [0, 0, 1, 1], [], []>} : vector<1x128xbf16>, vector<128x512xbf16>, vector<1x512xf32> -> vector<1x512xf32>
    %18 = arith.addf %15, %17 : vector<1x512xf32>
    %19 = arith.negf %18 : vector<1x512xf32>
    %20 = math.exp %19 : vector<1x512xf32>
    %cst_21 = arith.constant 1.000000e+00 : f32
    %21 = vector.broadcast %cst_21 : f32 to vector<1x512xf32>
    %22 = arith.addf %21, %20 : vector<1x512xf32>
    %23 = arith.divf %21, %22 : vector<1x512xf32>
    %24 = vector.extract_strided_slice %23 {offsets = [0, 0], sizes = [1, 128], strides = [1, 1]} : vector<1x512xf32> to vector<1x128xf32>
    %25 = vector.extract_strided_slice %23 {offsets = [0, 128], sizes = [1, 128], strides = [1, 1]} : vector<1x512xf32> to vector<1x128xf32>
    %26 = vector.extract_strided_slice %23 {offsets = [0, 256], sizes = [1, 128], strides = [1, 1]} : vector<1x512xf32> to vector<1x128xf32>
    %27 = vector.extract_strided_slice %23 {offsets = [0, 384], sizes = [1, 128], strides = [1, 1]} : vector<1x512xf32> to vector<1x128xf32>
    %cst_22 = arith.constant 2.000000e+00 : f32
    %28 = vector.broadcast %cst_22 : f32 to vector<1x128xf32>
    %29 = arith.mulf %28, %27 : vector<1x128xf32>
    %cst_23 = arith.constant 1.000000e+00 : f32
    %30 = vector.broadcast %cst_23 : f32 to vector<1x128xf32>
    %31 = arith.subf %29, %30 : vector<1x128xf32>
    %32 = arith.mulf %25, %13 : vector<1x128xf32>
    %33 = arith.mulf %24, %31 : vector<1x128xf32>
    %34 = arith.addf %32, %33 : vector<1x128xf32>
    %35 = math.tanh %34 : vector<1x128xf32>
    %36 = arith.mulf %26, %35 : vector<1x128xf32>
    %37 = tpu.concatenate %36, %12 in 1 : vector<1x128xf32>, vector<1x128xf32> -> vector<1x256xf32>
    %38 = arith.truncf %37 : vector<1x256xf32> to vector<1x256xbf16>
    %cst_24 = arith.constant dense<0.000000e+00> : vector<1x512xf32>
    %39 = tpu.matmul %38, %9, %cst_24 {dimension_numbers = #tpu.dot_dimension_numbers<[1], [0], [0], [1], [0, 0, 1, 1], [], []>} : vector<1x256xbf16>, vector<256x512xbf16>, vector<1x512xf32> -> vector<1x512xf32>
    %40 = arith.addf %39, %10 : vector<1x512xf32>
    %41 = arith.negf %40 : vector<1x512xf32>
    %42 = math.exp %41 : vector<1x512xf32>
    %cst_25 = arith.constant 1.000000e+00 : f32
    %43 = vector.broadcast %cst_25 : f32 to vector<1x512xf32>
    %44 = arith.addf %43, %42 : vector<1x512xf32>
    %45 = arith.divf %43, %44 : vector<1x512xf32>
    %46 = vector.extract_strided_slice %45 {offsets = [0, 0], sizes = [1, 128], strides = [1, 1]} : vector<1x512xf32> to vector<1x128xf32>
    %47 = vector.extract_strided_slice %45 {offsets = [0, 128], sizes = [1, 128], strides = [1, 1]} : vector<1x512xf32> to vector<1x128xf32>
    %48 = vector.extract_strided_slice %45 {offsets = [0, 256], sizes = [1, 128], strides = [1, 1]} : vector<1x512xf32> to vector<1x128xf32>
    %49 = vector.extract_strided_slice %45 {offsets = [0, 384], sizes = [1, 128], strides = [1, 1]} : vector<1x512xf32> to vector<1x128xf32>
    %cst_26 = arith.constant 2.000000e+00 : f32
    %50 = vector.broadcast %cst_26 : f32 to vector<1x128xf32>
    %51 = arith.mulf %50, %49 : vector<1x128xf32>
    %cst_27 = arith.constant 1.000000e+00 : f32
    %52 = vector.broadcast %cst_27 : f32 to vector<1x128xf32>
    %53 = arith.subf %51, %52 : vector<1x128xf32>
    %54 = arith.mulf %47, %14 : vector<1x128xf32>
    %55 = arith.mulf %46, %53 : vector<1x128xf32>
    %56 = arith.addf %54, %55 : vector<1x128xf32>
    %57 = math.tanh %56 : vector<1x128xf32>
    %58 = arith.mulf %48, %57 : vector<1x128xf32>
    %c1 = arith.constant 1 : index
    %c0_28 = arith.constant 0 : index
    %59 = vector.load %arg11[%c1, %c0_28] : memref<8x512xf32, #tpu.memory_space<vmem>>, vector<1x512xf32>
    %60 = arith.truncf %36 : vector<1x128xf32> to vector<1x128xbf16>
    %cst_29 = arith.constant dense<0.000000e+00> : vector<1x512xf32>
    %61 = tpu.matmul %60, %8, %cst_29 {dimension_numbers = #tpu.dot_dimension_numbers<[1], [0], [0], [1], [0, 0, 1, 1], [], []>} : vector<1x128xbf16>, vector<128x512xbf16>, vector<1x512xf32> -> vector<1x512xf32>
    %62 = arith.addf %59, %61 : vector<1x512xf32>
    %63 = arith.negf %62 : vector<1x512xf32>
    %64 = math.exp %63 : vector<1x512xf32>
    %cst_30 = arith.constant 1.000000e+00 : f32
    %65 = vector.broadcast %cst_30 : f32 to vector<1x512xf32>
    %66 = arith.addf %65, %64 : vector<1x512xf32>
    %67 = arith.divf %65, %66 : vector<1x512xf32>
    %68 = vector.extract_strided_slice %67 {offsets = [0, 0], sizes = [1, 128], strides = [1, 1]} : vector<1x512xf32> to vector<1x128xf32>
    %69 = vector.extract_strided_slice %67 {offsets = [0, 128], sizes = [1, 128], strides = [1, 1]} : vector<1x512xf32> to vector<1x128xf32>
    %70 = vector.extract_strided_slice %67 {offsets = [0, 256], sizes = [1, 128], strides = [1, 1]} : vector<1x512xf32> to vector<1x128xf32>
    %71 = vector.extract_strided_slice %67 {offsets = [0, 384], sizes = [1, 128], strides = [1, 1]} : vector<1x512xf32> to vector<1x128xf32>
    %cst_31 = arith.constant 2.000000e+00 : f32
    %72 = vector.broadcast %cst_31 : f32 to vector<1x128xf32>
    %73 = arith.mulf %72, %71 : vector<1x128xf32>
    %cst_32 = arith.constant 1.000000e+00 : f32
    %74 = vector.broadcast %cst_32 : f32 to vector<1x128xf32>
    %75 = arith.subf %73, %74 : vector<1x128xf32>
    %76 = arith.mulf %69, %34 : vector<1x128xf32>
    %77 = arith.mulf %68, %75 : vector<1x128xf32>
    %78 = arith.addf %76, %77 : vector<1x128xf32>
    %79 = math.tanh %78 : vector<1x128xf32>
    %80 = arith.mulf %70, %79 : vector<1x128xf32>
    %81 = tpu.concatenate %80, %58 in 1 : vector<1x128xf32>, vector<1x128xf32> -> vector<1x256xf32>
    %82 = arith.truncf %81 : vector<1x256xf32> to vector<1x256xbf16>
    %cst_33 = arith.constant dense<0.000000e+00> : vector<1x512xf32>
    %83 = tpu.matmul %82, %9, %cst_33 {dimension_numbers = #tpu.dot_dimension_numbers<[1], [0], [0], [1], [0, 0, 1, 1], [], []>} : vector<1x256xbf16>, vector<256x512xbf16>, vector<1x512xf32> -> vector<1x512xf32>
    %84 = arith.addf %83, %10 : vector<1x512xf32>
    %85 = arith.negf %84 : vector<1x512xf32>
    %86 = math.exp %85 : vector<1x512xf32>
    %cst_34 = arith.constant 1.000000e+00 : f32
    %87 = vector.broadcast %cst_34 : f32 to vector<1x512xf32>
    %88 = arith.addf %87, %86 : vector<1x512xf32>
    %89 = arith.divf %87, %88 : vector<1x512xf32>
    %90 = vector.extract_strided_slice %89 {offsets = [0, 0], sizes = [1, 128], strides = [1, 1]} : vector<1x512xf32> to vector<1x128xf32>
    %91 = vector.extract_strided_slice %89 {offsets = [0, 128], sizes = [1, 128], strides = [1, 1]} : vector<1x512xf32> to vector<1x128xf32>
    %92 = vector.extract_strided_slice %89 {offsets = [0, 256], sizes = [1, 128], strides = [1, 1]} : vector<1x512xf32> to vector<1x128xf32>
    %93 = vector.extract_strided_slice %89 {offsets = [0, 384], sizes = [1, 128], strides = [1, 1]} : vector<1x512xf32> to vector<1x128xf32>
    %cst_35 = arith.constant 2.000000e+00 : f32
    %94 = vector.broadcast %cst_35 : f32 to vector<1x128xf32>
    %95 = arith.mulf %94, %93 : vector<1x128xf32>
    %cst_36 = arith.constant 1.000000e+00 : f32
    %96 = vector.broadcast %cst_36 : f32 to vector<1x128xf32>
    %97 = arith.subf %95, %96 : vector<1x128xf32>
    %98 = arith.mulf %91, %56 : vector<1x128xf32>
    %99 = arith.mulf %90, %97 : vector<1x128xf32>
    %100 = arith.addf %98, %99 : vector<1x128xf32>
    %101 = math.tanh %100 : vector<1x128xf32>
    %102 = arith.mulf %92, %101 : vector<1x128xf32>
    %c2 = arith.constant 2 : index
    %c0_37 = arith.constant 0 : index
    %103 = vector.load %arg11[%c2, %c0_37] : memref<8x512xf32, #tpu.memory_space<vmem>>, vector<1x512xf32>
    %104 = arith.truncf %80 : vector<1x128xf32> to vector<1x128xbf16>
    %cst_38 = arith.constant dense<0.000000e+00> : vector<1x512xf32>
    %105 = tpu.matmul %104, %8, %cst_38 {dimension_numbers = #tpu.dot_dimension_numbers<[1], [0], [0], [1], [0, 0, 1, 1], [], []>} : vector<1x128xbf16>, vector<128x512xbf16>, vector<1x512xf32> -> vector<1x512xf32>
    %106 = arith.addf %103, %105 : vector<1x512xf32>
    %107 = arith.negf %106 : vector<1x512xf32>
    %108 = math.exp %107 : vector<1x512xf32>
    %cst_39 = arith.constant 1.000000e+00 : f32
    %109 = vector.broadcast %cst_39 : f32 to vector<1x512xf32>
    %110 = arith.addf %109, %108 : vector<1x512xf32>
    %111 = arith.divf %109, %110 : vector<1x512xf32>
    %112 = vector.extract_strided_slice %111 {offsets = [0, 0], sizes = [1, 128], strides = [1, 1]} : vector<1x512xf32> to vector<1x128xf32>
    %113 = vector.extract_strided_slice %111 {offsets = [0, 128], sizes = [1, 128], strides = [1, 1]} : vector<1x512xf32> to vector<1x128xf32>
    %114 = vector.extract_strided_slice %111 {offsets = [0, 256], sizes = [1, 128], strides = [1, 1]} : vector<1x512xf32> to vector<1x128xf32>
    %115 = vector.extract_strided_slice %111 {offsets = [0, 384], sizes = [1, 128], strides = [1, 1]} : vector<1x512xf32> to vector<1x128xf32>
    %cst_40 = arith.constant 2.000000e+00 : f32
    %116 = vector.broadcast %cst_40 : f32 to vector<1x128xf32>
    %117 = arith.mulf %116, %115 : vector<1x128xf32>
    %cst_41 = arith.constant 1.000000e+00 : f32
    %118 = vector.broadcast %cst_41 : f32 to vector<1x128xf32>
    %119 = arith.subf %117, %118 : vector<1x128xf32>
    %120 = arith.mulf %113, %78 : vector<1x128xf32>
    %121 = arith.mulf %112, %119 : vector<1x128xf32>
    %122 = arith.addf %120, %121 : vector<1x128xf32>
    %123 = math.tanh %122 : vector<1x128xf32>
    %124 = arith.mulf %114, %123 : vector<1x128xf32>
    %125 = tpu.concatenate %124, %102 in 1 : vector<1x128xf32>, vector<1x128xf32> -> vector<1x256xf32>
    %126 = arith.truncf %125 : vector<1x256xf32> to vector<1x256xbf16>
    %cst_42 = arith.constant dense<0.000000e+00> : vector<1x512xf32>
    %127 = tpu.matmul %126, %9, %cst_42 {dimension_numbers = #tpu.dot_dimension_numbers<[1], [0], [0], [1], [0, 0, 1, 1], [], []>} : vector<1x256xbf16>, vector<256x512xbf16>, vector<1x512xf32> -> vector<1x512xf32>
    %128 = arith.addf %127, %10 : vector<1x512xf32>
    %129 = arith.negf %128 : vector<1x512xf32>
    %130 = math.exp %129 : vector<1x512xf32>
    %cst_43 = arith.constant 1.000000e+00 : f32
    %131 = vector.broadcast %cst_43 : f32 to vector<1x512xf32>
    %132 = arith.addf %131, %130 : vector<1x512xf32>
    %133 = arith.divf %131, %132 : vector<1x512xf32>
    %134 = vector.extract_strided_slice %133 {offsets = [0, 0], sizes = [1, 128], strides = [1, 1]} : vector<1x512xf32> to vector<1x128xf32>
    %135 = vector.extract_strided_slice %133 {offsets = [0, 128], sizes = [1, 128], strides = [1, 1]} : vector<1x512xf32> to vector<1x128xf32>
    %136 = vector.extract_strided_slice %133 {offsets = [0, 256], sizes = [1, 128], strides = [1, 1]} : vector<1x512xf32> to vector<1x128xf32>
    %137 = vector.extract_strided_slice %133 {offsets = [0, 384], sizes = [1, 128], strides = [1, 1]} : vector<1x512xf32> to vector<1x128xf32>
    %cst_44 = arith.constant 2.000000e+00 : f32
    %138 = vector.broadcast %cst_44 : f32 to vector<1x128xf32>
    %139 = arith.mulf %138, %137 : vector<1x128xf32>
    %cst_45 = arith.constant 1.000000e+00 : f32
    %140 = vector.broadcast %cst_45 : f32 to vector<1x128xf32>
    %141 = arith.subf %139, %140 : vector<1x128xf32>
    %142 = arith.mulf %135, %100 : vector<1x128xf32>
    %143 = arith.mulf %134, %141 : vector<1x128xf32>
    %144 = arith.addf %142, %143 : vector<1x128xf32>
    %145 = math.tanh %144 : vector<1x128xf32>
    %146 = arith.mulf %136, %145 : vector<1x128xf32>
    %c3 = arith.constant 3 : index
    %c0_46 = arith.constant 0 : index
    %147 = vector.load %arg11[%c3, %c0_46] : memref<8x512xf32, #tpu.memory_space<vmem>>, vector<1x512xf32>
    %148 = arith.truncf %124 : vector<1x128xf32> to vector<1x128xbf16>
    %cst_47 = arith.constant dense<0.000000e+00> : vector<1x512xf32>
    %149 = tpu.matmul %148, %8, %cst_47 {dimension_numbers = #tpu.dot_dimension_numbers<[1], [0], [0], [1], [0, 0, 1, 1], [], []>} : vector<1x128xbf16>, vector<128x512xbf16>, vector<1x512xf32> -> vector<1x512xf32>
    %150 = arith.addf %147, %149 : vector<1x512xf32>
    %151 = arith.negf %150 : vector<1x512xf32>
    %152 = math.exp %151 : vector<1x512xf32>
    %cst_48 = arith.constant 1.000000e+00 : f32
    %153 = vector.broadcast %cst_48 : f32 to vector<1x512xf32>
    %154 = arith.addf %153, %152 : vector<1x512xf32>
    %155 = arith.divf %153, %154 : vector<1x512xf32>
    %156 = vector.extract_strided_slice %155 {offsets = [0, 0], sizes = [1, 128], strides = [1, 1]} : vector<1x512xf32> to vector<1x128xf32>
    %157 = vector.extract_strided_slice %155 {offsets = [0, 128], sizes = [1, 128], strides = [1, 1]} : vector<1x512xf32> to vector<1x128xf32>
    %158 = vector.extract_strided_slice %155 {offsets = [0, 256], sizes = [1, 128], strides = [1, 1]} : vector<1x512xf32> to vector<1x128xf32>
    %159 = vector.extract_strided_slice %155 {offsets = [0, 384], sizes = [1, 128], strides = [1, 1]} : vector<1x512xf32> to vector<1x128xf32>
    %cst_49 = arith.constant 2.000000e+00 : f32
    %160 = vector.broadcast %cst_49 : f32 to vector<1x128xf32>
    %161 = arith.mulf %160, %159 : vector<1x128xf32>
    %cst_50 = arith.constant 1.000000e+00 : f32
    %162 = vector.broadcast %cst_50 : f32 to vector<1x128xf32>
    %163 = arith.subf %161, %162 : vector<1x128xf32>
    %164 = arith.mulf %157, %122 : vector<1x128xf32>
    %165 = arith.mulf %156, %163 : vector<1x128xf32>
    %166 = arith.addf %164, %165 : vector<1x128xf32>
    %167 = math.tanh %166 : vector<1x128xf32>
    %168 = arith.mulf %158, %167 : vector<1x128xf32>
    %169 = tpu.concatenate %168, %146 in 1 : vector<1x128xf32>, vector<1x128xf32> -> vector<1x256xf32>
    %170 = arith.truncf %169 : vector<1x256xf32> to vector<1x256xbf16>
    %cst_51 = arith.constant dense<0.000000e+00> : vector<1x512xf32>
    %171 = tpu.matmul %170, %9, %cst_51 {dimension_numbers = #tpu.dot_dimension_numbers<[1], [0], [0], [1], [0, 0, 1, 1], [], []>} : vector<1x256xbf16>, vector<256x512xbf16>, vector<1x512xf32> -> vector<1x512xf32>
    %172 = arith.addf %171, %10 : vector<1x512xf32>
    %173 = arith.negf %172 : vector<1x512xf32>
    %174 = math.exp %173 : vector<1x512xf32>
    %cst_52 = arith.constant 1.000000e+00 : f32
    %175 = vector.broadcast %cst_52 : f32 to vector<1x512xf32>
    %176 = arith.addf %175, %174 : vector<1x512xf32>
    %177 = arith.divf %175, %176 : vector<1x512xf32>
    %178 = vector.extract_strided_slice %177 {offsets = [0, 0], sizes = [1, 128], strides = [1, 1]} : vector<1x512xf32> to vector<1x128xf32>
    %179 = vector.extract_strided_slice %177 {offsets = [0, 128], sizes = [1, 128], strides = [1, 1]} : vector<1x512xf32> to vector<1x128xf32>
    %180 = vector.extract_strided_slice %177 {offsets = [0, 256], sizes = [1, 128], strides = [1, 1]} : vector<1x512xf32> to vector<1x128xf32>
    %181 = vector.extract_strided_slice %177 {offsets = [0, 384], sizes = [1, 128], strides = [1, 1]} : vector<1x512xf32> to vector<1x128xf32>
    %cst_53 = arith.constant 2.000000e+00 : f32
    %182 = vector.broadcast %cst_53 : f32 to vector<1x128xf32>
    %183 = arith.mulf %182, %181 : vector<1x128xf32>
    %cst_54 = arith.constant 1.000000e+00 : f32
    %184 = vector.broadcast %cst_54 : f32 to vector<1x128xf32>
    %185 = arith.subf %183, %184 : vector<1x128xf32>
    %186 = arith.mulf %179, %144 : vector<1x128xf32>
    %187 = arith.mulf %178, %185 : vector<1x128xf32>
    %188 = arith.addf %186, %187 : vector<1x128xf32>
    %189 = math.tanh %188 : vector<1x128xf32>
    %190 = arith.mulf %180, %189 : vector<1x128xf32>
    %c4 = arith.constant 4 : index
    %c0_55 = arith.constant 0 : index
    %191 = vector.load %arg11[%c4, %c0_55] : memref<8x512xf32, #tpu.memory_space<vmem>>, vector<1x512xf32>
    %192 = arith.truncf %168 : vector<1x128xf32> to vector<1x128xbf16>
    %cst_56 = arith.constant dense<0.000000e+00> : vector<1x512xf32>
    %193 = tpu.matmul %192, %8, %cst_56 {dimension_numbers = #tpu.dot_dimension_numbers<[1], [0], [0], [1], [0, 0, 1, 1], [], []>} : vector<1x128xbf16>, vector<128x512xbf16>, vector<1x512xf32> -> vector<1x512xf32>
    %194 = arith.addf %191, %193 : vector<1x512xf32>
    %195 = arith.negf %194 : vector<1x512xf32>
    %196 = math.exp %195 : vector<1x512xf32>
    %cst_57 = arith.constant 1.000000e+00 : f32
    %197 = vector.broadcast %cst_57 : f32 to vector<1x512xf32>
    %198 = arith.addf %197, %196 : vector<1x512xf32>
    %199 = arith.divf %197, %198 : vector<1x512xf32>
    %200 = vector.extract_strided_slice %199 {offsets = [0, 0], sizes = [1, 128], strides = [1, 1]} : vector<1x512xf32> to vector<1x128xf32>
    %201 = vector.extract_strided_slice %199 {offsets = [0, 128], sizes = [1, 128], strides = [1, 1]} : vector<1x512xf32> to vector<1x128xf32>
    %202 = vector.extract_strided_slice %199 {offsets = [0, 256], sizes = [1, 128], strides = [1, 1]} : vector<1x512xf32> to vector<1x128xf32>
    %203 = vector.extract_strided_slice %199 {offsets = [0, 384], sizes = [1, 128], strides = [1, 1]} : vector<1x512xf32> to vector<1x128xf32>
    %cst_58 = arith.constant 2.000000e+00 : f32
    %204 = vector.broadcast %cst_58 : f32 to vector<1x128xf32>
    %205 = arith.mulf %204, %203 : vector<1x128xf32>
    %cst_59 = arith.constant 1.000000e+00 : f32
    %206 = vector.broadcast %cst_59 : f32 to vector<1x128xf32>
    %207 = arith.subf %205, %206 : vector<1x128xf32>
    %208 = arith.mulf %201, %166 : vector<1x128xf32>
    %209 = arith.mulf %200, %207 : vector<1x128xf32>
    %210 = arith.addf %208, %209 : vector<1x128xf32>
    %211 = math.tanh %210 : vector<1x128xf32>
    %212 = arith.mulf %202, %211 : vector<1x128xf32>
    %213 = tpu.concatenate %212, %190 in 1 : vector<1x128xf32>, vector<1x128xf32> -> vector<1x256xf32>
    %214 = arith.truncf %213 : vector<1x256xf32> to vector<1x256xbf16>
    %cst_60 = arith.constant dense<0.000000e+00> : vector<1x512xf32>
    %215 = tpu.matmul %214, %9, %cst_60 {dimension_numbers = #tpu.dot_dimension_numbers<[1], [0], [0], [1], [0, 0, 1, 1], [], []>} : vector<1x256xbf16>, vector<256x512xbf16>, vector<1x512xf32> -> vector<1x512xf32>
    %216 = arith.addf %215, %10 : vector<1x512xf32>
    %217 = arith.negf %216 : vector<1x512xf32>
    %218 = math.exp %217 : vector<1x512xf32>
    %cst_61 = arith.constant 1.000000e+00 : f32
    %219 = vector.broadcast %cst_61 : f32 to vector<1x512xf32>
    %220 = arith.addf %219, %218 : vector<1x512xf32>
    %221 = arith.divf %219, %220 : vector<1x512xf32>
    %222 = vector.extract_strided_slice %221 {offsets = [0, 0], sizes = [1, 128], strides = [1, 1]} : vector<1x512xf32> to vector<1x128xf32>
    %223 = vector.extract_strided_slice %221 {offsets = [0, 128], sizes = [1, 128], strides = [1, 1]} : vector<1x512xf32> to vector<1x128xf32>
    %224 = vector.extract_strided_slice %221 {offsets = [0, 256], sizes = [1, 128], strides = [1, 1]} : vector<1x512xf32> to vector<1x128xf32>
    %225 = vector.extract_strided_slice %221 {offsets = [0, 384], sizes = [1, 128], strides = [1, 1]} : vector<1x512xf32> to vector<1x128xf32>
    %cst_62 = arith.constant 2.000000e+00 : f32
    %226 = vector.broadcast %cst_62 : f32 to vector<1x128xf32>
    %227 = arith.mulf %226, %225 : vector<1x128xf32>
    %cst_63 = arith.constant 1.000000e+00 : f32
    %228 = vector.broadcast %cst_63 : f32 to vector<1x128xf32>
    %229 = arith.subf %227, %228 : vector<1x128xf32>
    %230 = arith.mulf %223, %188 : vector<1x128xf32>
    %231 = arith.mulf %222, %229 : vector<1x128xf32>
    %232 = arith.addf %230, %231 : vector<1x128xf32>
    %233 = math.tanh %232 : vector<1x128xf32>
    %234 = arith.mulf %224, %233 : vector<1x128xf32>
    %c5 = arith.constant 5 : index
    %c0_64 = arith.constant 0 : index
    %235 = vector.load %arg11[%c5, %c0_64] : memref<8x512xf32, #tpu.memory_space<vmem>>, vector<1x512xf32>
    %236 = arith.truncf %212 : vector<1x128xf32> to vector<1x128xbf16>
    %cst_65 = arith.constant dense<0.000000e+00> : vector<1x512xf32>
    %237 = tpu.matmul %236, %8, %cst_65 {dimension_numbers = #tpu.dot_dimension_numbers<[1], [0], [0], [1], [0, 0, 1, 1], [], []>} : vector<1x128xbf16>, vector<128x512xbf16>, vector<1x512xf32> -> vector<1x512xf32>
    %238 = arith.addf %235, %237 : vector<1x512xf32>
    %239 = arith.negf %238 : vector<1x512xf32>
    %240 = math.exp %239 : vector<1x512xf32>
    %cst_66 = arith.constant 1.000000e+00 : f32
    %241 = vector.broadcast %cst_66 : f32 to vector<1x512xf32>
    %242 = arith.addf %241, %240 : vector<1x512xf32>
    %243 = arith.divf %241, %242 : vector<1x512xf32>
    %244 = vector.extract_strided_slice %243 {offsets = [0, 0], sizes = [1, 128], strides = [1, 1]} : vector<1x512xf32> to vector<1x128xf32>
    %245 = vector.extract_strided_slice %243 {offsets = [0, 128], sizes = [1, 128], strides = [1, 1]} : vector<1x512xf32> to vector<1x128xf32>
    %246 = vector.extract_strided_slice %243 {offsets = [0, 256], sizes = [1, 128], strides = [1, 1]} : vector<1x512xf32> to vector<1x128xf32>
    %247 = vector.extract_strided_slice %243 {offsets = [0, 384], sizes = [1, 128], strides = [1, 1]} : vector<1x512xf32> to vector<1x128xf32>
    %cst_67 = arith.constant 2.000000e+00 : f32
    %248 = vector.broadcast %cst_67 : f32 to vector<1x128xf32>
    %249 = arith.mulf %248, %247 : vector<1x128xf32>
    %cst_68 = arith.constant 1.000000e+00 : f32
    %250 = vector.broadcast %cst_68 : f32 to vector<1x128xf32>
    %251 = arith.subf %249, %250 : vector<1x128xf32>
    %252 = arith.mulf %245, %210 : vector<1x128xf32>
    %253 = arith.mulf %244, %251 : vector<1x128xf32>
    %254 = arith.addf %252, %253 : vector<1x128xf32>
    %255 = math.tanh %254 : vector<1x128xf32>
    %256 = arith.mulf %246, %255 : vector<1x128xf32>
    %257 = tpu.concatenate %256, %234 in 1 : vector<1x128xf32>, vector<1x128xf32> -> vector<1x256xf32>
    %258 = arith.truncf %257 : vector<1x256xf32> to vector<1x256xbf16>
    %cst_69 = arith.constant dense<0.000000e+00> : vector<1x512xf32>
    %259 = tpu.matmul %258, %9, %cst_69 {dimension_numbers = #tpu.dot_dimension_numbers<[1], [0], [0], [1], [0, 0, 1, 1], [], []>} : vector<1x256xbf16>, vector<256x512xbf16>, vector<1x512xf32> -> vector<1x512xf32>
    %260 = arith.addf %259, %10 : vector<1x512xf32>
    %261 = arith.negf %260 : vector<1x512xf32>
    %262 = math.exp %261 : vector<1x512xf32>
    %cst_70 = arith.constant 1.000000e+00 : f32
    %263 = vector.broadcast %cst_70 : f32 to vector<1x512xf32>
    %264 = arith.addf %263, %262 : vector<1x512xf32>
    %265 = arith.divf %263, %264 : vector<1x512xf32>
    %266 = vector.extract_strided_slice %265 {offsets = [0, 0], sizes = [1, 128], strides = [1, 1]} : vector<1x512xf32> to vector<1x128xf32>
    %267 = vector.extract_strided_slice %265 {offsets = [0, 128], sizes = [1, 128], strides = [1, 1]} : vector<1x512xf32> to vector<1x128xf32>
    %268 = vector.extract_strided_slice %265 {offsets = [0, 256], sizes = [1, 128], strides = [1, 1]} : vector<1x512xf32> to vector<1x128xf32>
    %269 = vector.extract_strided_slice %265 {offsets = [0, 384], sizes = [1, 128], strides = [1, 1]} : vector<1x512xf32> to vector<1x128xf32>
    %cst_71 = arith.constant 2.000000e+00 : f32
    %270 = vector.broadcast %cst_71 : f32 to vector<1x128xf32>
    %271 = arith.mulf %270, %269 : vector<1x128xf32>
    %cst_72 = arith.constant 1.000000e+00 : f32
    %272 = vector.broadcast %cst_72 : f32 to vector<1x128xf32>
    %273 = arith.subf %271, %272 : vector<1x128xf32>
    %274 = arith.mulf %267, %232 : vector<1x128xf32>
    %275 = arith.mulf %266, %273 : vector<1x128xf32>
    %276 = arith.addf %274, %275 : vector<1x128xf32>
    %277 = math.tanh %276 : vector<1x128xf32>
    %278 = arith.mulf %268, %277 : vector<1x128xf32>
    %c6 = arith.constant 6 : index
    %c0_73 = arith.constant 0 : index
    %279 = vector.load %arg11[%c6, %c0_73] : memref<8x512xf32, #tpu.memory_space<vmem>>, vector<1x512xf32>
    %280 = arith.truncf %256 : vector<1x128xf32> to vector<1x128xbf16>
    %cst_74 = arith.constant dense<0.000000e+00> : vector<1x512xf32>
    %281 = tpu.matmul %280, %8, %cst_74 {dimension_numbers = #tpu.dot_dimension_numbers<[1], [0], [0], [1], [0, 0, 1, 1], [], []>} : vector<1x128xbf16>, vector<128x512xbf16>, vector<1x512xf32> -> vector<1x512xf32>
    %282 = arith.addf %279, %281 : vector<1x512xf32>
    %283 = arith.negf %282 : vector<1x512xf32>
    %284 = math.exp %283 : vector<1x512xf32>
    %cst_75 = arith.constant 1.000000e+00 : f32
    %285 = vector.broadcast %cst_75 : f32 to vector<1x512xf32>
    %286 = arith.addf %285, %284 : vector<1x512xf32>
    %287 = arith.divf %285, %286 : vector<1x512xf32>
    %288 = vector.extract_strided_slice %287 {offsets = [0, 0], sizes = [1, 128], strides = [1, 1]} : vector<1x512xf32> to vector<1x128xf32>
    %289 = vector.extract_strided_slice %287 {offsets = [0, 128], sizes = [1, 128], strides = [1, 1]} : vector<1x512xf32> to vector<1x128xf32>
    %290 = vector.extract_strided_slice %287 {offsets = [0, 256], sizes = [1, 128], strides = [1, 1]} : vector<1x512xf32> to vector<1x128xf32>
    %291 = vector.extract_strided_slice %287 {offsets = [0, 384], sizes = [1, 128], strides = [1, 1]} : vector<1x512xf32> to vector<1x128xf32>
    %cst_76 = arith.constant 2.000000e+00 : f32
    %292 = vector.broadcast %cst_76 : f32 to vector<1x128xf32>
    %293 = arith.mulf %292, %291 : vector<1x128xf32>
    %cst_77 = arith.constant 1.000000e+00 : f32
    %294 = vector.broadcast %cst_77 : f32 to vector<1x128xf32>
    %295 = arith.subf %293, %294 : vector<1x128xf32>
    %296 = arith.mulf %289, %254 : vector<1x128xf32>
    %297 = arith.mulf %288, %295 : vector<1x128xf32>
    %298 = arith.addf %296, %297 : vector<1x128xf32>
    %299 = math.tanh %298 : vector<1x128xf32>
    %300 = arith.mulf %290, %299 : vector<1x128xf32>
    %301 = tpu.concatenate %300, %278 in 1 : vector<1x128xf32>, vector<1x128xf32> -> vector<1x256xf32>
    %302 = arith.truncf %301 : vector<1x256xf32> to vector<1x256xbf16>
    %cst_78 = arith.constant dense<0.000000e+00> : vector<1x512xf32>
    %303 = tpu.matmul %302, %9, %cst_78 {dimension_numbers = #tpu.dot_dimension_numbers<[1], [0], [0], [1], [0, 0, 1, 1], [], []>} : vector<1x256xbf16>, vector<256x512xbf16>, vector<1x512xf32> -> vector<1x512xf32>
    %304 = arith.addf %303, %10 : vector<1x512xf32>
    %305 = arith.negf %304 : vector<1x512xf32>
    %306 = math.exp %305 : vector<1x512xf32>
    %cst_79 = arith.constant 1.000000e+00 : f32
    %307 = vector.broadcast %cst_79 : f32 to vector<1x512xf32>
    %308 = arith.addf %307, %306 : vector<1x512xf32>
    %309 = arith.divf %307, %308 : vector<1x512xf32>
    %310 = vector.extract_strided_slice %309 {offsets = [0, 0], sizes = [1, 128], strides = [1, 1]} : vector<1x512xf32> to vector<1x128xf32>
    %311 = vector.extract_strided_slice %309 {offsets = [0, 128], sizes = [1, 128], strides = [1, 1]} : vector<1x512xf32> to vector<1x128xf32>
    %312 = vector.extract_strided_slice %309 {offsets = [0, 256], sizes = [1, 128], strides = [1, 1]} : vector<1x512xf32> to vector<1x128xf32>
    %313 = vector.extract_strided_slice %309 {offsets = [0, 384], sizes = [1, 128], strides = [1, 1]} : vector<1x512xf32> to vector<1x128xf32>
    %cst_80 = arith.constant 2.000000e+00 : f32
    %314 = vector.broadcast %cst_80 : f32 to vector<1x128xf32>
    %315 = arith.mulf %314, %313 : vector<1x128xf32>
    %cst_81 = arith.constant 1.000000e+00 : f32
    %316 = vector.broadcast %cst_81 : f32 to vector<1x128xf32>
    %317 = arith.subf %315, %316 : vector<1x128xf32>
    %318 = arith.mulf %311, %276 : vector<1x128xf32>
    %319 = arith.mulf %310, %317 : vector<1x128xf32>
    %320 = arith.addf %318, %319 : vector<1x128xf32>
    %321 = math.tanh %320 : vector<1x128xf32>
    %322 = arith.mulf %312, %321 : vector<1x128xf32>
    %c7 = arith.constant 7 : index
    %c0_82 = arith.constant 0 : index
    %323 = vector.load %arg11[%c7, %c0_82] : memref<8x512xf32, #tpu.memory_space<vmem>>, vector<1x512xf32>
    %324 = arith.truncf %300 : vector<1x128xf32> to vector<1x128xbf16>
    %cst_83 = arith.constant dense<0.000000e+00> : vector<1x512xf32>
    %325 = tpu.matmul %324, %8, %cst_83 {dimension_numbers = #tpu.dot_dimension_numbers<[1], [0], [0], [1], [0, 0, 1, 1], [], []>} : vector<1x128xbf16>, vector<128x512xbf16>, vector<1x512xf32> -> vector<1x512xf32>
    %326 = arith.addf %323, %325 : vector<1x512xf32>
    %327 = arith.negf %326 : vector<1x512xf32>
    %328 = math.exp %327 : vector<1x512xf32>
    %cst_84 = arith.constant 1.000000e+00 : f32
    %329 = vector.broadcast %cst_84 : f32 to vector<1x512xf32>
    %330 = arith.addf %329, %328 : vector<1x512xf32>
    %331 = arith.divf %329, %330 : vector<1x512xf32>
    %332 = vector.extract_strided_slice %331 {offsets = [0, 0], sizes = [1, 128], strides = [1, 1]} : vector<1x512xf32> to vector<1x128xf32>
    %333 = vector.extract_strided_slice %331 {offsets = [0, 128], sizes = [1, 128], strides = [1, 1]} : vector<1x512xf32> to vector<1x128xf32>
    %334 = vector.extract_strided_slice %331 {offsets = [0, 256], sizes = [1, 128], strides = [1, 1]} : vector<1x512xf32> to vector<1x128xf32>
    %335 = vector.extract_strided_slice %331 {offsets = [0, 384], sizes = [1, 128], strides = [1, 1]} : vector<1x512xf32> to vector<1x128xf32>
    %cst_85 = arith.constant 2.000000e+00 : f32
    %336 = vector.broadcast %cst_85 : f32 to vector<1x128xf32>
    %337 = arith.mulf %336, %335 : vector<1x128xf32>
    %cst_86 = arith.constant 1.000000e+00 : f32
    %338 = vector.broadcast %cst_86 : f32 to vector<1x128xf32>
    %339 = arith.subf %337, %338 : vector<1x128xf32>
    %340 = arith.mulf %333, %298 : vector<1x128xf32>
    %341 = arith.mulf %332, %339 : vector<1x128xf32>
    %342 = arith.addf %340, %341 : vector<1x128xf32>
    %343 = math.tanh %342 : vector<1x128xf32>
    %344 = arith.mulf %334, %343 : vector<1x128xf32>
    %345 = tpu.concatenate %344, %322 in 1 : vector<1x128xf32>, vector<1x128xf32> -> vector<1x256xf32>
    %346 = arith.truncf %345 : vector<1x256xf32> to vector<1x256xbf16>
    %cst_87 = arith.constant dense<0.000000e+00> : vector<1x512xf32>
    %347 = tpu.matmul %346, %9, %cst_87 {dimension_numbers = #tpu.dot_dimension_numbers<[1], [0], [0], [1], [0, 0, 1, 1], [], []>} : vector<1x256xbf16>, vector<256x512xbf16>, vector<1x512xf32> -> vector<1x512xf32>
    %348 = arith.addf %347, %10 : vector<1x512xf32>
    %349 = arith.negf %348 : vector<1x512xf32>
    %350 = math.exp %349 : vector<1x512xf32>
    %cst_88 = arith.constant 1.000000e+00 : f32
    %351 = vector.broadcast %cst_88 : f32 to vector<1x512xf32>
    %352 = arith.addf %351, %350 : vector<1x512xf32>
    %353 = arith.divf %351, %352 : vector<1x512xf32>
    %354 = vector.extract_strided_slice %353 {offsets = [0, 0], sizes = [1, 128], strides = [1, 1]} : vector<1x512xf32> to vector<1x128xf32>
    %355 = vector.extract_strided_slice %353 {offsets = [0, 128], sizes = [1, 128], strides = [1, 1]} : vector<1x512xf32> to vector<1x128xf32>
    %356 = vector.extract_strided_slice %353 {offsets = [0, 256], sizes = [1, 128], strides = [1, 1]} : vector<1x512xf32> to vector<1x128xf32>
    %357 = vector.extract_strided_slice %353 {offsets = [0, 384], sizes = [1, 128], strides = [1, 1]} : vector<1x512xf32> to vector<1x128xf32>
    %cst_89 = arith.constant 2.000000e+00 : f32
    %358 = vector.broadcast %cst_89 : f32 to vector<1x128xf32>
    %359 = arith.mulf %358, %357 : vector<1x128xf32>
    %cst_90 = arith.constant 1.000000e+00 : f32
    %360 = vector.broadcast %cst_90 : f32 to vector<1x128xf32>
    %361 = arith.subf %359, %360 : vector<1x128xf32>
    %362 = arith.mulf %355, %320 : vector<1x128xf32>
    %363 = arith.mulf %354, %361 : vector<1x128xf32>
    %364 = arith.addf %362, %363 : vector<1x128xf32>
    %365 = math.tanh %364 : vector<1x128xf32>
    %366 = arith.mulf %356, %365 : vector<1x128xf32>
    %c0_91 = arith.constant 0 : index
    %c0_92 = arith.constant 0 : index
    %367 = vector.load %arg6[%c0_91, %c0_92] : memref<1x128xf32, #tpu.memory_space<vmem>>, vector<1x128xf32>
    %368 = arith.mulf %366, %367 : vector<1x128xf32>
    %cst_93 = arith.constant dense<0.000000e+00> : vector<1xf32>
    %369 = vector.multi_reduction <add>, %368, %cst_93 [1] : vector<1x128xf32> to vector<1xf32>
    %370 = vector.shape_cast %369 : vector<1xf32> to vector<1x1xf32>
    %c0_94 = arith.constant 0 : index
    %c0_95 = arith.constant 0 : index
    %371 = vector.load %arg7[%c0_94, %c0_95] : memref<1x1xf32, #tpu.memory_space<vmem>>, vector<1x1xf32>
    %372 = arith.addf %370, %371 : vector<1x1xf32>
    %c0_96 = arith.constant 0 : index
    %c0_97 = arith.constant 0 : index
    %373 = vector.load %arg8[%c0_96, %c0_97] : memref<1x1xf32, #tpu.memory_space<vmem>>, vector<1x1xf32>
    tpu.vector_store %arg8[%c0_96, %c0_97], %372 {strides = array<i32>} : memref<1x1xf32, #tpu.memory_space<vmem>>, vector<1x1xf32>,
    %374 = vector.extract_strided_slice %366 {offsets = [0, 0], sizes = [1, 32], strides = [1, 1]} : vector<1x128xf32> to vector<1x32xf32>
    %c0_98 = arith.constant 0 : index
    %c0_99 = arith.constant 0 : index
    %375 = vector.load %arg9[%c0_98, %c0_99] : memref<1x32xf32, #tpu.memory_space<vmem>>, vector<1x32xf32>
    tpu.vector_store %arg9[%c0_98, %c0_99], %374 {strides = array<i32>} : memref<1x32xf32, #tpu.memory_space<vmem>>, vector<1x32xf32>,
    %376 = vector.extract_strided_slice %342 {offsets = [0, 0], sizes = [1, 32], strides = [1, 1]} : vector<1x128xf32> to vector<1x32xf32>
    %c0_100 = arith.constant 0 : index
    %c0_101 = arith.constant 0 : index
    %377 = vector.load %arg10[%c0_100, %c0_101] : memref<2x32xf32, #tpu.memory_space<vmem>>, vector<1x32xf32>
    tpu.vector_store %arg10[%c0_100, %c0_101], %376 {strides = array<i32>} : memref<2x32xf32, #tpu.memory_space<vmem>>, vector<1x32xf32>,
    %378 = vector.extract_strided_slice %364 {offsets = [0, 0], sizes = [1, 32], strides = [1, 1]} : vector<1x128xf32> to vector<1x32xf32>
    %c1_102 = arith.constant 1 : index
    %c0_103 = arith.constant 0 : index
    %379 = vector.load %arg10[%c1_102, %c0_103] : memref<2x32xf32, #tpu.memory_space<vmem>>, vector<1x32xf32>
    tpu.vector_store %arg10[%c1_102, %c0_103], %378 {strides = array<i32>} : memref<2x32xf32, #tpu.memory_space<vmem>>, vector<1x32xf32>,
    return
  }
}

</mosaic_0001>

<llo_original>
// kernel: lstm_forward.1
$region0: #{lstm_forward.1}
  #allocation0 [shape = 'u32[]', space=smem, size = 0x4, offset = 0x4, fixed_abs, tag = 'smem constant byte address 0x4 - core index']
  #allocation1 [shape = 'u32[144,128]{1,0:T(1,128)}', space=vmem, size = 0x12000, scoped, tag = 'internal scratch']
  #allocation2 [shape = 'f32[8,512]{1,0:T(8,128)}', space=vmem, size = 0x4000, scoped, tag = 'scratch operand']
  #allocation3 [shape = 'f32[1,1]{1,0:T(1,128)S(1)}', space=vmem, size = 0x200, scoped, tag = 'scoped memory for lstm_forward.1']
  %s0 = inlined_call_operand.vmem [shape: f32[1,8,4], index: 0, kind: input, shape index: {}]
  %s1 = inlined_call_operand.vmem [shape: f32[4,512], index: 1, kind: input, shape index: {}]
  %s2 = inlined_call_operand.hbm [shape: bf16[128,512], index: 2, kind: input, shape index: {}]
  %s3 = inlined_call_operand.vmem [shape: f32[1,512], index: 3, kind: input, shape index: {}]
  %s4 = inlined_call_operand.hbm [shape: bf16[256,512], index: 4, kind: input, shape index: {}]
  %s5 = inlined_call_operand.vmem [shape: f32[1,512], index: 5, kind: input, shape index: {}]
  %s6 = inlined_call_operand.vmem [shape: f32[1,128], index: 6, kind: input, shape index: {}]
  %s7 = inlined_call_operand.<no memory space> [shape: f32[1,1], index: 7, kind: input, shape index: {}]
  %s8 = inlined_call_operand.hbm [shape: f32[1,1], index: 8, kind: output, shape index: {0}]
  %s9 = inlined_call_operand.hbm [shape: f32[1,32], index: 9, kind: output, shape index: {1}]
  %s10 = inlined_call_operand.hbm [shape: f32[2,32], index: 10, kind: output, shape index: {2}]
  %11 = xla_tuple %s8, %s9, %s10
  %s12 = sld [smem:[#allocation0]]
  $region66: #{lstm_forward.1} parent=0
    _
  %s14 = ssub.s32 1, %s12
  %s15 = scalar_select 0, %s14, %s12
  %v16 = vstv %s7
  %17 = vst [vmem:[#allocation3] sm:$0x1] %v16
  $region1: #{lstm_forward.1} parent=0
    #allocation4 [shape = 'u8[131072]{0}', space=vmem, size = 0x20000, scoped, tag = 'input window, operand 2, single buffered']
    #allocation5 [shape = 's32[1]{0}', space=sflag, size = 0x4, scoped, tag = 'scoped memory for lstm_forward.1']
    #allocation6 [shape = 's32[1]{0}', space=sflag, size = 0x4, scoped, tag = 'scoped memory for lstm_forward.1']
    #allocation7 [shape = 'u8[262144]{0}', space=vmem, size = 0x40000, scoped, tag = 'input window, operand 4, single buffered']
    #allocation8 [shape = 's32[1]{0}', space=sflag, size = 0x4, scoped, tag = 'scoped memory for lstm_forward.1']
    #allocation9 [shape = 'u8[512]{0}', space=vmem, size = 0x400, scoped, tag = 'output window, operand 0, single buffered']
    #allocation10 [shape = 'u8[512]{0}', space=vmem, size = 0x400, scoped, tag = 'output window, operand 1, single buffered']
    #allocation11 [shape = 's32[1]{0}', space=sflag, size = 0x4, scoped, tag = 'scoped memory for lstm_forward.1']
    #allocation12 [shape = 'u8[1024]{0}', space=vmem, size = 0x400, scoped, tag = 'output window, operand 2, single buffered']
    %18 = vsyncpa [#allocation5], 0
    %19 = vsyncpa [#allocation8], 0
    %20 = vsyncpa [#allocation6], 0
    %21 = vsyncpa [#allocation11], 0
    // Predicated region
    $region2: #{lstm_forward.1} parent=1 // pred_check
      _
    $region3: #{lstm_forward.1} parent=1 // pred_check_branch
      %23 = sbr.rel (0) target = $region5
    $region4: #{lstm_forward.1} parent=1 // pred_region
      _
    $region5: #{lstm_forward.1} parent=1 // pred_fallthru
      _
    // Predicated region
    $region6: #{lstm_forward.1} parent=1 // pred_check
      _
    $region7: #{lstm_forward.1} parent=1 // pred_check_branch
      %25 = sbr.rel (0) target = $region9
    $region8: #{lstm_forward.1} parent=1 // pred_region
      _
    $region9: #{lstm_forward.1} parent=1 // pred_fallthru
      _
    // Predicated region
    $region10: #{lstm_forward.1} parent=1 // pred_check
      _
    $region11: #{lstm_forward.1} parent=1 // pred_check_branch
      %27 = sbr.rel (0) target = $region13
    $region12: #{lstm_forward.1} parent=1 // pred_region
      %s29 = ssub.s32 4096, 4096
      %30 = vsyncadd [#allocation5], %s29
      %s31 = sshll.u32 [#allocation4], 4
      %s32 = int_to_ptr.vmem [resolvable:$true] %s31
      %37 = dma.hbm_to_vmem [thread:$0]  %s2, 4096, %s32, [#allocation5], 256, 256, 16
    $region13: #{lstm_forward.1} parent=1 // pred_fallthru
      _
    // Predicated region
    $region14: #{lstm_forward.1} parent=1 // pred_check
      _
    $region15: #{lstm_forward.1} parent=1 // pred_check_branch
      %39 = sbr.rel (0) target = $region17
    $region16: #{lstm_forward.1} parent=1 // pred_region
      _
    $region17: #{lstm_forward.1} parent=1 // pred_fallthru
      _
    // Predicated region
    $region18: #{lstm_forward.1} parent=1 // pred_check
      _
    $region19: #{lstm_forward.1} parent=1 // pred_check_branch
      %41 = sbr.rel (0) target = $region21
    $region20: #{lstm_forward.1} parent=1 // pred_region
      %s43 = ssub.s32 8192, 8192
      %44 = vsyncadd [#allocation8], %s43
      %s45 = sshll.u32 [#allocation7], 4
      %s46 = int_to_ptr.vmem [resolvable:$true] %s45
      %51 = dma.hbm_to_vmem [thread:$0]  %s4, 8192, %s46, [#allocation8], 256, 256, 16
    $region21: #{lstm_forward.1} parent=1 // pred_fallthru
      _
    // Predicated region
    $region22: #{lstm_forward.1} parent=1 // pred_check
      _
    $region23: #{lstm_forward.1} parent=1 // pred_check_branch
      %53 = sbr.rel (0) target = $region25
    $region24: #{lstm_forward.1} parent=1 // pred_region
      _
    $region25: #{lstm_forward.1} parent=1 // pred_fallthru
      _
    // Predicated region
    $region26: #{lstm_forward.1} parent=1 // pred_check
      _
    $region27: #{lstm_forward.1} parent=1 // pred_check_branch
      %55 = sbr.rel (0) target = $region29
    $region28: #{lstm_forward.1} parent=1 // pred_region
      _
    $region29: #{lstm_forward.1} parent=1 // pred_fallthru
      _
    // Predicated region
    $region30: #{lstm_forward.1} parent=1 // pred_check
      _
    $region31: #{lstm_forward.1} parent=1 // pred_check_branch
      %57 = sbr.rel (0) target = $region33
    $region32: #{lstm_forward.1} parent=1 // pred_region
      _
    $region33: #{lstm_forward.1} parent=1 // pred_fallthru
      _
    // Predicated region
    $region34: #{lstm_forward.1} parent=1 // pred_check
      _
    $region35: #{lstm_forward.1} parent=1 // pred_check_branch
      %59 = sbr.rel (0) target = $region37
    $region36: #{lstm_forward.1} parent=1 // pred_region
      %60 = dma.done [#allocation5], 4096
    $region37: #{lstm_forward.1} parent=1 // pred_fallthru
      _
    // Predicated region
    $region38: #{lstm_forward.1} parent=1 // pred_check
      _
    $region39: #{lstm_forward.1} parent=1 // pred_check_branch
      %62 = sbr.rel (0) target = $region41
    $region40: #{lstm_forward.1} parent=1 // pred_region
      %63 = dma.done [#allocation8], 8192
    $region41: #{lstm_forward.1} parent=1 // pred_fallthru
      _
    %v65 = vld [vmem:[%s0] sm:$0xff]
    %v66 = vld [vmem:[%s1] sm:$0xff]
    %v67 = vld [vmem:[%s1 + $0x8] sm:$0xff]
    %v68 = vld [vmem:[%s3] sm:$0xf]
    %v70 = vlaneseq
    %v71 = vshrl.u32 %v70, 7
    %v72 = vsub.s32 0, %v71
    %v73 = vrot.slane %v68, %v72
    %v74 = vlaneseq
    %v75 = vshrl.u32 %v74, 7
    %v76 = vsub.s32 1, %v75
    %v77 = vrot.slane %v68, %v76
    %v78 = vlaneseq
    %v79 = vshrl.u32 %v78, 7
    %v80 = vsub.s32 2, %v79
    %v81 = vrot.slane %v68, %v80
    %v82 = vlaneseq
    %v83 = vshrl.u32 %v82, 7
    %v84 = vsub.s32 3, %v83
    %v85 = vrot.slane %v68, %v84
    %v92 = vcombine.high %v66, %v66
    %v93 = vcombine.high %v67, %v67
    %vm94 = vcmask 31744
    %v96 = vsel %vm94, %v65, 0
    %vm98 = vcmask 1043456
    %v99 = vsel %vm98, %v66, 0
    %v101 = vsel %vm98, %v92, 0
    %v103 = vsel %vm98, %v67, 0
    %v105 = vsel %vm98, %v93, 0
    %107 = vmatprep.subr.mxu0 %v101
    %108 = vmatpush1.msra.mxu0 %v99
    %109 = vmatprep.subr.mxu0 0.0
    %110 = vmatpush1.msra.mxu0 0.0
    %111 = vmatprep.subr.mxu0 0.0
    %112 = vmatpush1.msra.mxu0 0.0
    %113 = vmatprep.subr.mxu0 0.0
    %114 = vmatpush1.msra.mxu0 0.0
    %115 = vmatprep.subr.mxu0 0.0
    %116 = vmatpush1.msra.mxu0 0.0
    %117 = vmatprep.subr.mxu0 0.0
    %118 = vmatpush1.msra.mxu0 0.0
    %119 = vmatprep.subr.mxu0 0.0
    %120 = vmatpush1.msra.mxu0 0.0
    %121 = vmatprep.subr.mxu0 0.0
    %122 = vmatpush1.msra.mxu0 0.0
    %123 = vmatprep.subr.mxu0 0.0
    %124 = vmatpush1.msra.mxu0 0.0
    %125 = vmatprep.subr.mxu0 0.0
    %126 = vmatpush1.msra.mxu0 0.0
    %127 = vmatprep.subr.mxu0 0.0
    %128 = vmatpush1.msra.mxu0 0.0
    %129 = vmatprep.subr.mxu0 0.0
    %130 = vmatpush1.msra.mxu0 0.0
    %131 = vmatprep.subr.mxu0 0.0
    %132 = vmatpush1.msra.mxu0 0.0
    %133 = vmatprep.subr.mxu0 0.0
    %134 = vmatpush1.msra.mxu0 0.0
    %135 = vmatprep.subr.mxu0 0.0
    %136 = vmatpush1.msra.mxu0 0.0
    %137 = vmatprep.subr.mxu0 0.0
    %138 = vmatpush1.msra.mxu0 0.0
    %139 = vmatprep.subr.mxu0 0.0
    %140 = vmatpush1.msra.mxu0 0.0
    %141 = vmatprep.subr.mxu0 0.0
    %142 = vmatpush1.msra.mxu0 0.0
    %143 = vmatprep.subr.mxu0 0.0
    %144 = vmatpush1.msra.mxu0 0.0
    %145 = vmatprep.subr.mxu0 0.0
    %146 = vmatpush1.msra.mxu0 0.0
    %147 = vmatprep.subr.mxu0 0.0
    %148 = vmatpush1.msra.mxu0 0.0
    %149 = vmatprep.subr.mxu0 0.0
    %150 = vmatpush1.msra.mxu0 0.0
    %151 = vmatprep.subr.mxu0 0.0
    %152 = vmatpush1.msra.mxu0 0.0
    %153 = vmatprep.subr.mxu0 0.0
    %154 = vmatpush1.msra.mxu0 0.0
    %155 = vmatprep.subr.mxu0 0.0
    %156 = vmatpush1.msra.mxu0 0.0
    %157 = vmatprep.subr.mxu0 0.0
    %158 = vmatpush1.msra.mxu0 0.0
    %159 = vmatprep.subr.mxu0 0.0
    %160 = vmatpush1.msra.mxu0 0.0
    %161 = vmatprep.subr.mxu0 0.0
    %162 = vmatpush1.msra.mxu0 0.0
    %163 = vmatprep.subr.mxu0 0.0
    %164 = vmatpush1.msra.mxu0 0.0
    %165 = vmatprep.subr.mxu0 0.0
    %166 = vmatpush1.msra.mxu0 0.0
    %167 = vmatprep.subr.mxu0 0.0
    %168 = vmatpush1.msra.mxu0 0.0
    %169 = vmatprep.subr.mxu0 0.0
    %170 = vmatpush1.msra.mxu0 0.0
    %171 = vmatprep.mubr.f32.mxu0 0.0
    %172 = vmatmul.mubr.f32.gmra.mrb[0].mxu0 %v96
    %v173 = vpop.f32.mrb[0].mxu0
    %v174 = vadd.f32 %v73, %v173
    %v175 = vpop.f32.mrb[0].mxu0
    %v176 = vadd.f32 %v77, %v175
    %177 = vdwg.mxu0
    %178 = vmatprep.subr.mxu0 %v105
    %179 = vmatpush1.msra.mxu0 %v103
    %180 = vmatprep.subr.mxu0 0.0
    %181 = vmatpush1.msra.mxu0 0.0
    %182 = vmatprep.subr.mxu0 0.0
    %183 = vmatpush1.msra.mxu0 0.0
    %184 = vmatprep.subr.mxu0 0.0
    %185 = vmatpush1.msra.mxu0 0.0
    %186 = vmatprep.subr.mxu0 0.0
    %187 = vmatpush1.msra.mxu0 0.0
    %188 = vmatprep.subr.mxu0 0.0
    %189 = vmatpush1.msra.mxu0 0.0
    %190 = vmatprep.subr.mxu0 0.0
    %191 = vmatpush1.msra.mxu0 0.0
    %192 = vmatprep.subr.mxu0 0.0
    %193 = vmatpush1.msra.mxu0 0.0
    %194 = vmatprep.subr.mxu0 0.0
    %195 = vmatpush1.msra.mxu0 0.0
    %196 = vmatprep.subr.mxu0 0.0
    %197 = vmatpush1.msra.mxu0 0.0
    %198 = vmatprep.subr.mxu0 0.0
    %199 = vmatpush1.msra.mxu0 0.0
    %200 = vmatprep.subr.mxu0 0.0
    %201 = vmatpush1.msra.mxu0 0.0
    %202 = vmatprep.subr.mxu0 0.0
    %203 = vmatpush1.msra.mxu0 0.0
    %204 = vmatprep.subr.mxu0 0.0
    %205 = vmatpush1.msra.mxu0 0.0
    %206 = vmatprep.subr.mxu0 0.0
    %207 = vmatpush1.msra.mxu0 0.0
    %208 = vmatprep.subr.mxu0 0.0
    %209 = vmatpush1.msra.mxu0 0.0
    %210 = vmatprep.subr.mxu0 0.0
    %211 = vmatpush1.msra.mxu0 0.0
    %212 = vmatprep.subr.mxu0 0.0
    %213 = vmatpush1.msra.mxu0 0.0
    %214 = vmatprep.subr.mxu0 0.0
    %215 = vmatpush1.msra.mxu0 0.0
    %216 = vmatprep.subr.mxu0 0.0
    %217 = vmatpush1.msra.mxu0 0.0
    %218 = vmatprep.subr.mxu0 0.0
    %219 = vmatpush1.msra.mxu0 0.0
    %220 = vmatprep.subr.mxu0 0.0
    %221 = vmatpush1.msra.mxu0 0.0
    %222 = vmatprep.subr.mxu0 0.0
    %223 = vmatpush1.msra.mxu0 0.0
    %224 = vmatprep.subr.mxu0 0.0
    %225 = vmatpush1.msra.mxu0 0.0
    %226 = vmatprep.subr.mxu0 0.0
    %227 = vmatpush1.msra.mxu0 0.0
    %228 = vmatprep.subr.mxu0 0.0
    %229 = vmatpush1.msra.mxu0 0.0
    %230 = vmatprep.subr.mxu0 0.0
    %231 = vmatpush1.msra.mxu0 0.0
    %232 = vmatprep.subr.mxu0 0.0
    %233 = vmatpush1.msra.mxu0 0.0
    %234 = vmatprep.subr.mxu0 0.0
    %235 = vmatpush1.msra.mxu0 0.0
    %236 = vmatprep.subr.mxu0 0.0
    %237 = vmatpush1.msra.mxu0 0.0
    %238 = vmatprep.subr.mxu0 0.0
    %239 = vmatpush1.msra.mxu0 0.0
    %240 = vmatprep.subr.mxu0 0.0
    %241 = vmatpush1.msra.mxu0 0.0
    %242 = vmatprep.mubr.f32.mxu0 0.0
    %243 = vmatmul.mubr.f32.gmra.mrb[0].mxu0 %v96
    %v244 = vpop.f32.mrb[0].mxu0
    %v245 = vadd.f32 %v81, %v244
    %v246 = vpop.f32.mrb[0].mxu0
    %v247 = vadd.f32 %v85, %v246
    %248 = vdwg.mxu0
    %249 = vst [vmem:[#allocation2] sm:$0xff] %v174
    %250 = vst [vmem:[#allocation2 + $0x8] sm:$0xff] %v176
    %251 = vst [vmem:[#allocation2 + $0x10] sm:$0xff] %v245
    %252 = vst [vmem:[#allocation2 + $0x18] sm:$0xff] %v247
    %v253 = vld [vmem:[#allocation4] sm:$0xff]
    %v254 = vld [vmem:[#allocation4 + $0x8] sm:$0xff]
    %v255 = vld [vmem:[#allocation4 + $0x10] sm:$0xff]
    %v256 = vld [vmem:[#allocation4 + $0x18] sm:$0xff]
    %v257 = vld [vmem:[#allocation4 + $0x20] sm:$0xff]
    %v258 = vld [vmem:[#allocation4 + $0x28] sm:$0xff]
    %v259 = vld [vmem:[#allocation4 + $0x30] sm:$0xff]
    %v260 = vld [vmem:[#allocation4 + $0x38] sm:$0xff]
    %v261 = vld [vmem:[#allocation4 + $0x40] sm:$0xff]
    %v262 = vld [vmem:[#allocation4 + $0x48] sm:$0xff]
    %v263 = vld [vmem:[#allocation4 + $0x50] sm:$0xff]
    %v264 = vld [vmem:[#allocation4 + $0x58] sm:$0xff]
    %v265 = vld [vmem:[#allocation4 + $0x60] sm:$0xff]
    %v266 = vld [vmem:[#allocation4 + $0x68] sm:$0xff]
    %v267 = vld [vmem:[#allocation4 + $0x70] sm:$0xff]
    %v268 = vld [vmem:[#allocation4 + $0x78] sm:$0xff]
    %v269 = vld [vmem:[#allocation4 + $0x80] sm:$0xff]
    %v270 = vld [vmem:[#allocation4 + $0x88] sm:$0xff]
    %v271 = vld [vmem:[#allocation4 + $0x90] sm:$0xff]
    %v272 = vld [vmem:[#allocation4 + $0x98] sm:$0xff]
    %v273 = vld [vmem:[#allocation4 + $0xa0] sm:$0xff]
    %v274 = vld [vmem:[#allocation4 + $0xa8] sm:$0xff]
    %v275 = vld [vmem:[#allocation4 + $0xb0] sm:$0xff]
    %v276 = vld [vmem:[#allocation4 + $0xb8] sm:$0xff]
    %v277 = vld [vmem:[#allocation4 + $0xc0] sm:$0xff]
    %v278 = vld [vmem:[#allocation4 + $0xc8] sm:$0xff]
    %v279 = vld [vmem:[#allocation4 + $0xd0] sm:$0xff]
    %v280 = vld [vmem:[#allocation4 + $0xd8] sm:$0xff]
    %v281 = vld [vmem:[#allocation4 + $0xe0] sm:$0xff]
    %v282 = vld [vmem:[#allocation4 + $0xe8] sm:$0xff]
    %v283 = vld [vmem:[#allocation4 + $0xf0] sm:$0xff]
    %v284 = vld [vmem:[#allocation4 + $0xf8] sm:$0xff]
    %v285 = vld [vmem:[#allocation7] sm:$0xff]
    %v286 = vld [vmem:[#allocation7 + $0x8] sm:$0xff]
    %v287 = vld [vmem:[#allocation7 + $0x10] sm:$0xff]
    %v288 = vld [vmem:[#allocation7 + $0x18] sm:$0xff]
    %v289 = vld [vmem:[#allocation7 + $0x20] sm:$0xff]
    %v290 = vld [vmem:[#allocation7 + $0x28] sm:$0xff]
    %v291 = vld [vmem:[#allocation7 + $0x30] sm:$0xff]
    %v292 = vld [vmem:[#allocation7 + $0x38] sm:$0xff]
    %v293 = vld [vmem:[#allocation7 + $0x40] sm:$0xff]
    %v294 = vld [vmem:[#allocation7 + $0x48] sm:$0xff]
    %v295 = vld [vmem:[#allocation7 + $0x50] sm:$0xff]
    %v296 = vld [vmem:[#allocation7 + $0x58] sm:$0xff]
    %v297 = vld [vmem:[#allocation7 + $0x60] sm:$0xff]
    %v298 = vld [vmem:[#allocation7 + $0x68] sm:$0xff]
    %v299 = vld [vmem:[#allocation7 + $0x70] sm:$0xff]
    %v300 = vld [vmem:[#allocation7 + $0x78] sm:$0xff]
    %v301 = vld [vmem:[#allocation7 + $0x80] sm:$0xff]
    %v302 = vld [vmem:[#allocation7 + $0x88] sm:$0xff]
    %v303 = vld [vmem:[#allocation7 + $0x90] sm:$0xff]
    %v304 = vld [vmem:[#allocation7 + $0x98] sm:$0xff]
    %v305 = vld [vmem:[#allocation7 + $0xa0] sm:$0xff]
    %v306 = vld [vmem:[#allocation7 + $0xa8] sm:$0xff]
    %v307 = vld [vmem:[#allocation7 + $0xb0] sm:$0xff]
    %v308 = vld [vmem:[#allocation7 + $0xb8] sm:$0xff]
    %v309 = vld [vmem:[#allocation7 + $0xc0] sm:$0xff]
    %v310 = vld [vmem:[#allocation7 + $0xc8] sm:$0xff]
    %v311 = vld [vmem:[#allocation7 + $0xd0] sm:$0xff]
    %v312 = vld [vmem:[#allocation7 + $0xd8] sm:$0xff]
    %v313 = vld [vmem:[#allocation7 + $0xe0] sm:$0xff]
    %v314 = vld [vmem:[#allocation7 + $0xe8] sm:$0xff]
    %v315 = vld [vmem:[#allocation7 + $0xf0] sm:$0xff]
    %v316 = vld [vmem:[#allocation7 + $0xf8] sm:$0xff]
    %v317 = vld [vmem:[#allocation7 + $0x100] sm:$0xff]
    %v318 = vld [vmem:[#allocation7 + $0x108] sm:$0xff]
    %v319 = vld [vmem:[#allocation7 + $0x110] sm:$0xff]
    %v320 = vld [vmem:[#allocation7 + $0x118] sm:$0xff]
    %v321 = vld [vmem:[#allocation7 + $0x120] sm:$0xff]
    %v322 = vld [vmem:[#allocation7 + $0x128] sm:$0xff]
    %v323 = vld [vmem:[#allocation7 + $0x130] sm:$0xff]
    %v324 = vld [vmem:[#allocation7 + $0x138] sm:$0xff]
    %v325 = vld [vmem:[#allocation7 + $0x140] sm:$0xff]
    %v326 = vld [vmem:[#allocation7 + $0x148] sm:$0xff]
    %v327 = vld [vmem:[#allocation7 + $0x150] sm:$0xff]
    %v328 = vld [vmem:[#allocation7 + $0x158] sm:$0xff]
    %v329 = vld [vmem:[#allocation7 + $0x160] sm:$0xff]
    %v330 = vld [vmem:[#allocation7 + $0x168] sm:$0xff]
    %v331 = vld [vmem:[#allocation7 + $0x170] sm:$0xff]
    %v332 = vld [vmem:[#allocation7 + $0x178] sm:$0xff]
    %v333 = vld [vmem:[#allocation7 + $0x180] sm:$0xff]
    %v334 = vld [vmem:[#allocation7 + $0x188] sm:$0xff]
    %v335 = vld [vmem:[#allocation7 + $0x190] sm:$0xff]
    %v336 = vld [vmem:[#allocation7 + $0x198] sm:$0xff]
    %v337 = vld [vmem:[#allocation7 + $0x1a0] sm:$0xff]
    %v338 = vld [vmem:[#allocation7 + $0x1a8] sm:$0xff]
    %v339 = vld [vmem:[#allocation7 + $0x1b0] sm:$0xff]
    %v340 = vld [vmem:[#allocation7 + $0x1b8] sm:$0xff]
    %v341 = vld [vmem:[#allocation7 + $0x1c0] sm:$0xff]
    %v342 = vld [vmem:[#allocation7 + $0x1c8] sm:$0xff]
    %v343 = vld [vmem:[#allocation7 + $0x1d0] sm:$0xff]
    %v344 = vld [vmem:[#allocation7 + $0x1d8] sm:$0xff]
    %v345 = vld [vmem:[#allocation7 + $0x1e0] sm:$0xff]
    %v346 = vld [vmem:[#allocation7 + $0x1e8] sm:$0xff]
    %v347 = vld [vmem:[#allocation7 + $0x1f0] sm:$0xff]
    %v348 = vld [vmem:[#allocation7 + $0x1f8] sm:$0xff]
    %v349 = vld [vmem:[%s5] sm:$0xf]
    %v350 = vld [vmem:[#allocation2] ss:$8 sm:$0xf]
    %v383 = vunpack.c.l.b16 %v253
    %v384 = vunpack.c.h.b16 %v253
    %v385 = vunpack.c.l.b16 %v254
    %v386 = vunpack.c.h.b16 %v254
    %v387 = vunpack.c.l.b16 %v255
    %v388 = vunpack.c.h.b16 %v255
    %v389 = vunpack.c.l.b16 %v256
    %v390 = vunpack.c.h.b16 %v256
    %v391 = vunpack.c.l.b16 %v257
    %v392 = vunpack.c.h.b16 %v257
    %v393 = vunpack.c.l.b16 %v258
    %v394 = vunpack.c.h.b16 %v258
    %v395 = vunpack.c.l.b16 %v259
    %v396 = vunpack.c.h.b16 %v259
    %v397 = vunpack.c.l.b16 %v260
    %v398 = vunpack.c.h.b16 %v260
    %v399 = vunpack.c.l.b16 %v261
    %v400 = vunpack.c.h.b16 %v261
    %v401 = vunpack.c.l.b16 %v262
    %v402 = vunpack.c.h.b16 %v262
    %v403 = vunpack.c.l.b16 %v263
    %v404 = vunpack.c.h.b16 %v263
    %v405 = vunpack.c.l.b16 %v264
    %v406 = vunpack.c.h.b16 %v264
    %v407 = vunpack.c.l.b16 %v265
    %v408 = vunpack.c.h.b16 %v265
    %v409 = vunpack.c.l.b16 %v266
    %v410 = vunpack.c.h.b16 %v266
    %v411 = vunpack.c.l.b16 %v267
    %v412 = vunpack.c.h.b16 %v267
    %v413 = vunpack.c.l.b16 %v268
    %v414 = vunpack.c.h.b16 %v268
    %v415 = vunpack.c.l.b16 %v269
    %v416 = vunpack.c.h.b16 %v269
    %v417 = vunpack.c.l.b16 %v270
    %v418 = vunpack.c.h.b16 %v270
    %v419 = vunpack.c.l.b16 %v271
    %v420 = vunpack.c.h.b16 %v271
    %v421 = vunpack.c.l.b16 %v272
    %v422 = vunpack.c.h.b16 %v272
    %v423 = vunpack.c.l.b16 %v273
    %v424 = vunpack.c.h.b16 %v273
    %v425 = vunpack.c.l.b16 %v274
    %v426 = vunpack.c.h.b16 %v274
    %v427 = vunpack.c.l.b16 %v275
    %v428 = vunpack.c.h.b16 %v275
    %v429 = vunpack.c.l.b16 %v276
    %v430 = vunpack.c.h.b16 %v276
    %v431 = vunpack.c.l.b16 %v277
    %v432 = vunpack.c.h.b16 %v277
    %v433 = vunpack.c.l.b16 %v278
    %v434 = vunpack.c.h.b16 %v278
    %v435 = vunpack.c.l.b16 %v279
    %v436 = vunpack.c.h.b16 %v279
    %v437 = vunpack.c.l.b16 %v280
    %v438 = vunpack.c.h.b16 %v280
    %v439 = vunpack.c.l.b16 %v281
    %v440 = vunpack.c.h.b16 %v281
    %v441 = vunpack.c.l.b16 %v282
    %v442 = vunpack.c.h.b16 %v282
    %v443 = vunpack.c.l.b16 %v283
    %v444 = vunpack.c.h.b16 %v283
    %v445 = vunpack.c.l.b16 %v284
    %v446 = vunpack.c.h.b16 %v284
    %v447 = vpack.c.b16 %v387, %v383
    %v448 = vpack.c.b16 %v388, %v384
    %v449 = vpack.c.b16 %v389, %v385
    %v450 = vpack.c.b16 %v390, %v386
    %v451 = vpack.c.b16 %v395, %v391
    %v452 = vpack.c.b16 %v396, %v392
    %v453 = vpack.c.b16 %v397, %v393
    %v454 = vpack.c.b16 %v398, %v394
    %v455 = vpack.c.b16 %v403, %v399
    %v456 = vpack.c.b16 %v404, %v400
    %v457 = vpack.c.b16 %v405, %v401
    %v458 = vpack.c.b16 %v406, %v402
    %v459 = vpack.c.b16 %v411, %v407
    %v460 = vpack.c.b16 %v412, %v408
    %v461 = vpack.c.b16 %v413, %v409
    %v462 = vpack.c.b16 %v414, %v410
    %v463 = vpack.c.b16 %v419, %v415
    %v464 = vpack.c.b16 %v420, %v416
    %v465 = vpack.c.b16 %v421, %v417
    %v466 = vpack.c.b16 %v422, %v418
    %v467 = vpack.c.b16 %v427, %v423
    %v468 = vpack.c.b16 %v428, %v424
    %v469 = vpack.c.b16 %v429, %v425
    %v470 = vpack.c.b16 %v430, %v426
    %v471 = vpack.c.b16 %v435, %v431
    %v472 = vpack.c.b16 %v436, %v432
    %v473 = vpack.c.b16 %v437, %v433
    %v474 = vpack.c.b16 %v438, %v434
    %v475 = vpack.c.b16 %v443, %v439
    %v476 = vpack.c.b16 %v444, %v440
    %v477 = vpack.c.b16 %v445, %v441
    %v478 = vpack.c.b16 %v446, %v442
    %511 = vmatprep.subr.bf16.mxu0 %v448
    %512 = vmatpush1.bf16.msra.mxu0 %v447
    %513 = vmatprep.subr.bf16.mxu0 %v452
    %514 = vmatpush1.bf16.msra.mxu0 %v451
    %515 = vmatprep.subr.bf16.mxu0 %v456
    %516 = vmatpush1.bf16.msra.mxu0 %v455
    %517 = vmatprep.subr.bf16.mxu0 %v460
    %518 = vmatpush1.bf16.msra.mxu0 %v459
    %519 = vmatprep.subr.bf16.mxu0 %v464
    %520 = vmatpush1.bf16.msra.mxu0 %v463
    %521 = vmatprep.subr.bf16.mxu0 %v468
    %522 = vmatpush1.bf16.msra.mxu0 %v467
    %523 = vmatprep.subr.bf16.mxu0 %v472
    %524 = vmatpush1.bf16.msra.mxu0 %v471
    %525 = vmatprep.subr.bf16.mxu0 %v476
    %526 = vmatpush1.bf16.msra.mxu0 %v475
    %527 = vmatprep.subr.bf16.mxu0 0
    %528 = vmatpush1.bf16.msra.mxu0 0
    %529 = vmatprep.subr.bf16.mxu0 0
    %530 = vmatpush1.bf16.msra.mxu0 0
    %531 = vmatprep.subr.bf16.mxu0 0
    %532 = vmatpush1.bf16.msra.mxu0 0
    %533 = vmatprep.subr.bf16.mxu0 0
    %534 = vmatpush1.bf16.msra.mxu0 0
    %535 = vmatprep.subr.bf16.mxu0 0
    %536 = vmatpush1.bf16.msra.mxu0 0
    %537 = vmatprep.subr.bf16.mxu0 0
    %538 = vmatpush1.bf16.msra.mxu0 0
    %539 = vmatprep.subr.bf16.mxu0 0
    %540 = vmatpush1.bf16.msra.mxu0 0
    %541 = vmatprep.subr.bf16.mxu0 0
    %542 = vmatpush1.bf16.msra.mxu0 0
    %543 = vmatprep.mubr.bf16.mxu0 0
    %544 = vmatmul.mubr.bf16.gmra.mrb[0].mxu0 0
    %v545 = vpop.f32.mrb[0].mxu0
    %v546 = vadd.f32 0.0, %v545
    %v547 = vpop.f32.mrb[0].mxu0
    %v548 = vadd.f32 0.0, %v547
    %v549 = vpop.f32.mrb[0].mxu0
    %v550 = vpop.f32.mrb[0].mxu0
    %551 = vdwg.mxu0
    %552 = vmatprep.subr.bf16.mxu0 %v450
    %553 = vmatpush1.bf16.msra.mxu0 %v449
    %554 = vmatprep.subr.bf16.mxu0 %v454
    %555 = vmatpush1.bf16.msra.mxu0 %v453
    %556 = vmatprep.subr.bf16.mxu0 %v458
    %557 = vmatpush1.bf16.msra.mxu0 %v457
    %558 = vmatprep.subr.bf16.mxu0 %v462
    %559 = vmatpush1.bf16.msra.mxu0 %v461
    %560 = vmatprep.subr.bf16.mxu0 %v466
    %561 = vmatpush1.bf16.msra.mxu0 %v465
    %562 = vmatprep.subr.bf16.mxu0 %v470
    %563 = vmatpush1.bf16.msra.mxu0 %v469
    %564 = vmatprep.subr.bf16.mxu0 %v474
    %565 = vmatpush1.bf16.msra.mxu0 %v473
    %566 = vmatprep.subr.bf16.mxu0 %v478
    %567 = vmatpush1.bf16.msra.mxu0 %v477
    %568 = vmatprep.subr.bf16.mxu0 0
    %569 = vmatpush1.bf16.msra.mxu0 0
    %570 = vmatprep.subr.bf16.mxu0 0
    %571 = vmatpush1.bf16.msra.mxu0 0
    %572 = vmatprep.subr.bf16.mxu0 0
    %573 = vmatpush1.bf16.msra.mxu0 0
    %574 = vmatprep.subr.bf16.mxu0 0
    %575 = vmatpush1.bf16.msra.mxu0 0
    %576 = vmatprep.subr.bf16.mxu0 0
    %577 = vmatpush1.bf16.msra.mxu0 0
    %578 = vmatprep.subr.bf16.mxu0 0
    %579 = vmatpush1.bf16.msra.mxu0 0
    %580 = vmatprep.subr.bf16.mxu0 0
    %581 = vmatpush1.bf16.msra.mxu0 0
    %582 = vmatprep.subr.bf16.mxu0 0
    %583 = vmatpush1.bf16.msra.mxu0 0
    %584 = vmatprep.mubr.bf16.mxu0 0
    %585 = vmatmul.mubr.bf16.gmra.mrb[0].mxu0 0
    %v586 = vpop.f32.mrb[0].mxu0
    %v587 = vadd.f32 0.0, %v586
    %v588 = vpop.f32.mrb[0].mxu0
    %v589 = vadd.f32 0.0, %v588
    %v590 = vpop.f32.mrb[0].mxu0
    %v591 = vpop.f32.mrb[0].mxu0
    %592 = vdwg.mxu0
    %v597 = vcombine.low %v546, %v548
    %v598 = vcombine.low %v587, %v589
    %v600 = vunpack.c.l.s4 1966171168
    %v601 = vunpack.c.0.s8 %v600
    %v602 = vlaneseq
    %v603 = vshrl.u32 %v602, 7
    %v604 = vsub.s32 %v601, %v603
    %v605 = vrot.slane %v597, %v604
    %v607 = vunpack.c.l.s4 1966171168
    %v608 = vunpack.c.0.s8 %v607
    %v609 = vlaneseq
    %v610 = vshrl.u32 %v609, 7
    %v611 = vsub.s32 %v608, %v610
    %v612 = vrot.slane %v598, %v611
    %v613 = vcombine.low %v605, %v612
    %v615 = vunpack.c.l.s4 1966171168
    %v616 = vunpack.c.0.s8 %v615
    %v617 = vlaneseq
    %v618 = vshrl.u32 %v617, 7
    %v619 = vsub.s32 %v616, %v618
    %v620 = vrot.slane %v613, %v619
    %v622 = vadd.f32 %v350, %v620
    %v623 = vxor.u32 %v622, 2147483648
    %v624 = vmul.f32 %v623, 1.442695
    %v625 = vpow.pop %v624
    %v626 = vadd.f32 %v625, 1.0
    %v627 = vrcp.pop %v626
    %v628 = vmul.f32 1.0, %v627
    %v630 = vrot.slane %v628, 3
    %v632 = vmul.f32 %v630, 2.0
    %v633 = vsub.f32 %v632, 1.0
    %v634 = vrot.slane %v628, 1
    %v636 = vmul.f32 %v634, 0.0
    %v637 = vmul.f32 %v628, %v633
    %v638 = vadd.f32 %v636, %v637
    %v639 = vtanh.pop %v638
    %v640 = vrot.slane %v628, 2
    %v642 = vmul.f32 %v640, %v639
    %v643 = vpack.c.bf16 %v642, %v642
    %v644 = vpack.c.bf16 0.0, 0.0
    %v709 = vunpack.c.l.b16 %v285
    %v710 = vunpack.c.h.b16 %v285
    %v711 = vunpack.c.l.b16 %v286
    %v712 = vunpack.c.h.b16 %v286
    %v713 = vunpack.c.l.b16 %v287
    %v714 = vunpack.c.h.b16 %v287
    %v715 = vunpack.c.l.b16 %v288
    %v716 = vunpack.c.h.b16 %v288
    %v717 = vunpack.c.l.b16 %v289
    %v718 = vunpack.c.h.b16 %v289
    %v719 = vunpack.c.l.b16 %v290
    %v720 = vunpack.c.h.b16 %v290
    %v721 = vunpack.c.l.b16 %v291
    %v722 = vunpack.c.h.b16 %v291
    %v723 = vunpack.c.l.b16 %v292
    %v724 = vunpack.c.h.b16 %v292
    %v725 = vunpack.c.l.b16 %v293
    %v726 = vunpack.c.h.b16 %v293
    %v727 = vunpack.c.l.b16 %v294
    %v728 = vunpack.c.h.b16 %v294
    %v729 = vunpack.c.l.b16 %v295
    %v730 = vunpack.c.h.b16 %v295
    %v731 = vunpack.c.l.b16 %v296
    %v732 = vunpack.c.h.b16 %v296
    %v733 = vunpack.c.l.b16 %v297
    %v734 = vunpack.c.h.b16 %v297
    %v735 = vunpack.c.l.b16 %v298
    %v736 = vunpack.c.h.b16 %v298
    %v737 = vunpack.c.l.b16 %v299
    %v738 = vunpack.c.h.b16 %v299
    %v739 = vunpack.c.l.b16 %v300
    %v740 = vunpack.c.h.b16 %v300
    %v741 = vunpack.c.l.b16 %v301
    %v742 = vunpack.c.h.b16 %v301
    %v743 = vunpack.c.l.b16 %v302
    %v744 = vunpack.c.h.b16 %v302
    %v745 = vunpack.c.l.b16 %v303
    %v746 = vunpack.c.h.b16 %v303
    %v747 = vunpack.c.l.b16 %v304
    %v748 = vunpack.c.h.b16 %v304
    %v749 = vunpack.c.l.b16 %v305
    %v750 = vunpack.c.h.b16 %v305
    %v751 = vunpack.c.l.b16 %v306
    %v752 = vunpack.c.h.b16 %v306
    %v753 = vunpack.c.l.b16 %v307
    %v754 = vunpack.c.h.b16 %v307
    %v755 = vunpack.c.l.b16 %v308
    %v756 = vunpack.c.h.b16 %v308
    %v757 = vunpack.c.l.b16 %v309
    %v758 = vunpack.c.h.b16 %v309
    %v759 = vunpack.c.l.b16 %v310
    %v760 = vunpack.c.h.b16 %v310
    %v761 = vunpack.c.l.b16 %v311
    %v762 = vunpack.c.h.b16 %v311
    %v763 = vunpack.c.l.b16 %v312
    %v764 = vunpack.c.h.b16 %v312
    %v765 = vunpack.c.l.b16 %v313
    %v766 = vunpack.c.h.b16 %v313
    %v767 = vunpack.c.l.b16 %v314
    %v768 = vunpack.c.h.b16 %v314
    %v769 = vunpack.c.l.b16 %v315
    %v770 = vunpack.c.h.b16 %v315
    %v771 = vunpack.c.l.b16 %v316
    %v772 = vunpack.c.h.b16 %v316
    %v773 = vunpack.c.l.b16 %v317
    %v774 = vunpack.c.h.b16 %v317
    %v775 = vunpack.c.l.b16 %v318
    %v776 = vunpack.c.h.b16 %v318
    %v777 = vunpack.c.l.b16 %v319
    %v778 = vunpack.c.h.b16 %v319
    %v779 = vunpack.c.l.b16 %v320
    %v780 = vunpack.c.h.b16 %v320
    %v781 = vunpack.c.l.b16 %v321
    %v782 = vunpack.c.h.b16 %v321
    %v783 = vunpack.c.l.b16 %v322
    %v784 = vunpack.c.h.b16 %v322
    %v785 = vunpack.c.l.b16 %v323
    %v786 = vunpack.c.h.b16 %v323
    %v787 = vunpack.c.l.b16 %v324
    %v788 = vunpack.c.h.b16 %v324
    %v789 = vunpack.c.l.b16 %v325
    %v790 = vunpack.c.h.b16 %v325
    %v791 = vunpack.c.l.b16 %v326
    %v792 = vunpack.c.h.b16 %v326
    %v793 = vunpack.c.l.b16 %v327
    %v794 = vunpack.c.h.b16 %v327
    %v795 = vunpack.c.l.b16 %v328
    %v796 = vunpack.c.h.b16 %v328
    %v797 = vunpack.c.l.b16 %v329
    %v798 = vunpack.c.h.b16 %v329
    %v799 = vunpack.c.l.b16 %v330
    %v800 = vunpack.c.h.b16 %v330
    %v801 = vunpack.c.l.b16 %v331
    %v802 = vunpack.c.h.b16 %v331
    %v803 = vunpack.c.l.b16 %v332
    %v804 = vunpack.c.h.b16 %v332
    %v805 = vunpack.c.l.b16 %v333
    %v806 = vunpack.c.h.b16 %v333
    %v807 = vunpack.c.l.b16 %v334
    %v808 = vunpack.c.h.b16 %v334
    %v809 = vunpack.c.l.b16 %v335
    %v810 = vunpack.c.h.b16 %v335
    %v811 = vunpack.c.l.b16 %v336
    %v812 = vunpack.c.h.b16 %v336
    %v813 = vunpack.c.l.b16 %v337
    %v814 = vunpack.c.h.b16 %v337
    %v815 = vunpack.c.l.b16 %v338
    %v816 = vunpack.c.h.b16 %v338
    %v817 = vunpack.c.l.b16 %v339
    %v818 = vunpack.c.h.b16 %v339
    %v819 = vunpack.c.l.b16 %v340
    %v820 = vunpack.c.h.b16 %v340
    %v821 = vunpack.c.l.b16 %v341
    %v822 = vunpack.c.h.b16 %v341
    %v823 = vunpack.c.l.b16 %v342
    %v824 = vunpack.c.h.b16 %v342
    %v825 = vunpack.c.l.b16 %v343
    %v826 = vunpack.c.h.b16 %v343
    %v827 = vunpack.c.l.b16 %v344
    %v828 = vunpack.c.h.b16 %v344
    %v829 = vunpack.c.l.b16 %v345
    %v830 = vunpack.c.h.b16 %v345
    %v831 = vunpack.c.l.b16 %v346
    %v832 = vunpack.c.h.b16 %v346
    %v833 = vunpack.c.l.b16 %v347
    %v834 = vunpack.c.h.b16 %v347
    %v835 = vunpack.c.l.b16 %v348
    %v836 = vunpack.c.h.b16 %v348
    %v837 = vpack.c.b16 %v713, %v709
    %v838 = vpack.c.b16 %v714, %v710
    %v839 = vpack.c.b16 %v715, %v711
    %v840 = vpack.c.b16 %v716, %v712
    %v841 = vpack.c.b16 %v721, %v717
    %v842 = vpack.c.b16 %v722, %v718
    %v843 = vpack.c.b16 %v723, %v719
    %v844 = vpack.c.b16 %v724, %v720
    %v845 = vpack.c.b16 %v729, %v725
    %v846 = vpack.c.b16 %v730, %v726
    %v847 = vpack.c.b16 %v731, %v727
    %v848 = vpack.c.b16 %v732, %v728
    %v849 = vpack.c.b16 %v737, %v733
    %v850 = vpack.c.b16 %v738, %v734
    %v851 = vpack.c.b16 %v739, %v735
    %v852 = vpack.c.b16 %v740, %v736
    %v853 = vpack.c.b16 %v745, %v741
    %v854 = vpack.c.b16 %v746, %v742
    %v855 = vpack.c.b16 %v747, %v743
    %v856 = vpack.c.b16 %v748, %v744
    %v857 = vpack.c.b16 %v753, %v749
    %v858 = vpack.c.b16 %v754, %v750
    %v859 = vpack.c.b16 %v755, %v751
    %v860 = vpack.c.b16 %v756, %v752
    %v861 = vpack.c.b16 %v761, %v757
    %v862 = vpack.c.b16 %v762, %v758
    %v863 = vpack.c.b16 %v763, %v759
    %v864 = vpack.c.b16 %v764, %v760
    %v865 = vpack.c.b16 %v769, %v765
    %v866 = vpack.c.b16 %v770, %v766
    %v867 = vpack.c.b16 %v771, %v767
    %v868 = vpack.c.b16 %v772, %v768
    %v869 = vpack.c.b16 %v777, %v773
    %v870 = vpack.c.b16 %v778, %v774
    %v871 = vpack.c.b16 %v779, %v775
    %v872 = vpack.c.b16 %v780, %v776
    %v873 = vpack.c.b16 %v785, %v781
    %v874 = vpack.c.b16 %v786, %v782
    %v875 = vpack.c.b16 %v787, %v783
    %v876 = vpack.c.b16 %v788, %v784
    %v877 = vpack.c.b16 %v793, %v789
    %v878 = vpack.c.b16 %v794, %v790
    %v879 = vpack.c.b16 %v795, %v791
    %v880 = vpack.c.b16 %v796, %v792
    %v881 = vpack.c.b16 %v801, %v797
    %v882 = vpack.c.b16 %v802, %v798
    %v883 = vpack.c.b16 %v803, %v799
    %v884 = vpack.c.b16 %v804, %v800
    %v885 = vpack.c.b16 %v809, %v805
    %v886 = vpack.c.b16 %v810, %v806
    %v887 = vpack.c.b16 %v811, %v807
    %v888 = vpack.c.b16 %v812, %v808
    %v889 = vpack.c.b16 %v817, %v813
    %v890 = vpack.c.b16 %v818, %v814
    %v891 = vpack.c.b16 %v819, %v815
    %v892 = vpack.c.b16 %v820, %v816
    %v893 = vpack.c.b16 %v825, %v821
    %v894 = vpack.c.b16 %v826, %v822
    %v895 = vpack.c.b16 %v827, %v823
    %v896 = vpack.c.b16 %v828, %v824
    %v897 = vpack.c.b16 %v833, %v829
    %v898 = vpack.c.b16 %v834, %v830
    %v899 = vpack.c.b16 %v835, %v831
    %v900 = vpack.c.b16 %v836, %v832
    %v966 = vlaneseq
    %v967 = vshrl.u32 %v966, 7
    %v968 = vsub.s32 0, %v967
    %v969 = vrot.slane %v349, %v968
    %v970 = vlaneseq
    %v971 = vshrl.u32 %v970, 7
    %v972 = vsub.s32 1, %v971
    %v973 = vrot.slane %v349, %v972
    %v974 = vlaneseq
    %v975 = vshrl.u32 %v974, 7
    %v976 = vsub.s32 2, %v975
    %v977 = vrot.slane %v349, %v976
    %v978 = vlaneseq
    %v979 = vshrl.u32 %v978, 7
    %v980 = vsub.s32 3, %v979
    %v981 = vrot.slane %v349, %v980
    %986 = vmatprep.subr.bf16.mxu0 %v838
    %987 = vmatpush1.bf16.msra.mxu0 %v837
    %988 = vmatprep.subr.bf16.mxu0 %v842
    %989 = vmatpush1.bf16.msra.mxu0 %v841
    %990 = vmatprep.subr.bf16.mxu0 %v846
    %991 = vmatpush1.bf16.msra.mxu0 %v845
    %992 = vmatprep.subr.bf16.mxu0 %v850
    %993 = vmatpush1.bf16.msra.mxu0 %v849
    %994 = vmatprep.subr.bf16.mxu0 %v854
    %995 = vmatpush1.bf16.msra.mxu0 %v853
    %996 = vmatprep.subr.bf16.mxu0 %v858
    %997 = vmatpush1.bf16.msra.mxu0 %v857
    %998 = vmatprep.subr.bf16.mxu0 %v862
    %999 = vmatpush1.bf16.msra.mxu0 %v861
    %1000 = vmatprep.subr.bf16.mxu0 %v866
    %1001 = vmatpush1.bf16.msra.mxu0 %v865
    %1002 = vmatprep.subr.bf16.mxu0 %v870
    %1003 = vmatpush1.bf16.msra.mxu0 %v869
    %1004 = vmatprep.subr.bf16.mxu0 %v874
    %1005 = vmatpush1.bf16.msra.mxu0 %v873
    %1006 = vmatprep.subr.bf16.mxu0 %v878
    %1007 = vmatpush1.bf16.msra.mxu0 %v877
    %1008 = vmatprep.subr.bf16.mxu0 %v882
    %1009 = vmatpush1.bf16.msra.mxu0 %v881
    %1010 = vmatprep.subr.bf16.mxu0 %v886
    %1011 = vmatpush1.bf16.msra.mxu0 %v885
    %1012 = vmatprep.subr.bf16.mxu0 %v890
    %1013 = vmatpush1.bf16.msra.mxu0 %v889
    %1014 = vmatprep.subr.bf16.mxu0 %v894
    %1015 = vmatpush1.bf16.msra.mxu0 %v893
    %1016 = vmatprep.subr.bf16.mxu0 %v898
    %1017 = vmatpush1.bf16.msra.mxu0 %v897
    %1018 = vmatprep.mubr.bf16.mxu0 %v644
    %1019 = vmatmul.mubr.bf16.gmra.mrb[0].mxu0 %v643
    %v1020 = vpop.f32.mrb[0].mxu0
    %v1021 = vadd.f32 %v969, %v1020
    %v1022 = vpop.f32.mrb[0].mxu0
    %v1023 = vadd.f32 %v973, %v1022
    %v1024 = vpop.f32.mrb[0].mxu0
    %v1025 = vpop.f32.mrb[0].mxu0
    %1026 = vdwg.mxu0
    %1027 = vmatprep.subr.bf16.mxu0 %v840
    %1028 = vmatpush1.bf16.msra.mxu0 %v839
    %1029 = vmatprep.subr.bf16.mxu0 %v844
    %1030 = vmatpush1.bf16.msra.mxu0 %v843
    %1031 = vmatprep.subr.bf16.mxu0 %v848
    %1032 = vmatpush1.bf16.msra.mxu0 %v847
    %1033 = vmatprep.subr.bf16.mxu0 %v852
    %1034 = vmatpush1.bf16.msra.mxu0 %v851
    %1035 = vmatprep.subr.bf16.mxu0 %v856
    %1036 = vmatpush1.bf16.msra.mxu0 %v855
    %1037 = vmatprep.subr.bf16.mxu0 %v860
    %1038 = vmatpush1.bf16.msra.mxu0 %v859
    %1039 = vmatprep.subr.bf16.mxu0 %v864
    %1040 = vmatpush1.bf16.msra.mxu0 %v863
    %1041 = vmatprep.subr.bf16.mxu0 %v868
    %1042 = vmatpush1.bf16.msra.mxu0 %v867
    %1043 = vmatprep.subr.bf16.mxu0 %v872
    %1044 = vmatpush1.bf16.msra.mxu0 %v871
    %1045 = vmatprep.subr.bf16.mxu0 %v876
    %1046 = vmatpush1.bf16.msra.mxu0 %v875
    %1047 = vmatprep.subr.bf16.mxu0 %v880
    %1048 = vmatpush1.bf16.msra.mxu0 %v879
    %1049 = vmatprep.subr.bf16.mxu0 %v884
    %1050 = vmatpush1.bf16.msra.mxu0 %v883
    %1051 = vmatprep.subr.bf16.mxu0 %v888
    %1052 = vmatpush1.bf16.msra.mxu0 %v887
    %1053 = vmatprep.subr.bf16.mxu0 %v892
    %1054 = vmatpush1.bf16.msra.mxu0 %v891
    %1055 = vmatprep.subr.bf16.mxu0 %v896
    %1056 = vmatpush1.bf16.msra.mxu0 %v895
    %1057 = vmatprep.subr.bf16.mxu0 %v900
    %1058 = vmatpush1.bf16.msra.mxu0 %v899
    %1059 = vmatprep.mubr.bf16.mxu0 %v644
    %1060 = vmatmul.mubr.bf16.gmra.mrb[0].mxu0 %v643
    %v1061 = vpop.f32.mrb[0].mxu0
    %v1062 = vadd.f32 %v977, %v1061
    %v1063 = vpop.f32.mrb[0].mxu0
    %v1064 = vadd.f32 %v981, %v1063
    %v1065 = vpop.f32.mrb[0].mxu0
    %v1066 = vpop.f32.mrb[0].mxu0
    %1067 = vdwg.mxu0
    %v1068 = vxor.u32 %v1021, 2147483648
    %v1069 = vxor.u32 %v1023, 2147483648
    %v1070 = vxor.u32 %v1062, 2147483648
    %v1071 = vxor.u32 %v1064, 2147483648
    %v1072 = vmul.f32 %v1068, 1.442695
    %v1073 = vpow.pop %v1072
    %v1074 = vmul.f32 %v1069, 1.442695
    %v1075 = vpow.pop %v1074
    %v1076 = vmul.f32 %v1070, 1.442695
    %v1077 = vpow.pop %v1076
    %v1078 = vmul.f32 %v1071, 1.442695
    %v1079 = vpow.pop %v1078
    %v1080 = vadd.f32 %v1073, 1.0
    %v1081 = vadd.f32 %v1075, 1.0
    %v1082 = vadd.f32 %v1077, 1.0
    %v1083 = vadd.f32 %v1079, 1.0
    %v1084 = vrcp.pop %v1080
    %v1085 = vmul.f32 1.0, %v1084
    %v1086 = vrcp.pop %v1081
    %v1087 = vmul.f32 1.0, %v1086
    %v1088 = vrcp.pop %v1082
    %v1089 = vmul.f32 1.0, %v1088
    %v1090 = vrcp.pop %v1083
    %v1091 = vmul.f32 1.0, %v1090
    %v1092 = vmul.f32 %v1091, 2.0
    %v1093 = vsub.f32 %v1092, 1.0
    %v1094 = vmul.f32 %v1087, 0.0
    %v1095 = vmul.f32 %v1085, %v1093
    %v1096 = vadd.f32 %v1094, %v1095
    %v1097 = vtanh.pop %v1096
    %v1098 = vmul.f32 %v1089, %v1097
    %s1099 = scalar_lea.vmem [#allocation2], 1
    %v1100 = vld [vmem:[%s1099] ss:$8 sm:$0xf]
    %1101 = vmatprep.subr.bf16.mxu0 %v448
    %1102 = vmatpush1.bf16.msra.mxu0 %v447
    %1103 = vmatprep.subr.bf16.mxu0 %v452
    %1104 = vmatpush1.bf16.msra.mxu0 %v451
    %1105 = vmatprep.subr.bf16.mxu0 %v456
    %1106 = vmatpush1.bf16.msra.mxu0 %v455
    %1107 = vmatprep.subr.bf16.mxu0 %v460
    %1108 = vmatpush1.bf16.msra.mxu0 %v459
    %1109 = vmatprep.subr.bf16.mxu0 %v464
    %1110 = vmatpush1.bf16.msra.mxu0 %v463
    %1111 = vmatprep.subr.bf16.mxu0 %v468
    %1112 = vmatpush1.bf16.msra.mxu0 %v467
    %1113 = vmatprep.subr.bf16.mxu0 %v472
    %1114 = vmatpush1.bf16.msra.mxu0 %v471
    %1115 = vmatprep.subr.bf16.mxu0 %v476
    %1116 = vmatpush1.bf16.msra.mxu0 %v475
    %1117 = vmatprep.subr.bf16.mxu0 0
    %1118 = vmatpush1.bf16.msra.mxu0 0
    %1119 = vmatprep.subr.bf16.mxu0 0
    %1120 = vmatpush1.bf16.msra.mxu0 0
    %1121 = vmatprep.subr.bf16.mxu0 0
    %1122 = vmatpush1.bf16.msra.mxu0 0
    %1123 = vmatprep.subr.bf16.mxu0 0
    %1124 = vmatpush1.bf16.msra.mxu0 0
    %1125 = vmatprep.subr.bf16.mxu0 0
    %1126 = vmatpush1.bf16.msra.mxu0 0
    %1127 = vmatprep.subr.bf16.mxu0 0
    %1128 = vmatpush1.bf16.msra.mxu0 0
    %1129 = vmatprep.subr.bf16.mxu0 0
    %1130 = vmatpush1.bf16.msra.mxu0 0
    %1131 = vmatprep.subr.bf16.mxu0 0
    %1132 = vmatpush1.bf16.msra.mxu0 0
    %1133 = vmatprep.mubr.bf16.mxu0 0
    %1134 = vmatmul.mubr.bf16.gmra.mrb[0].mxu0 %v643
    %v1135 = vpop.f32.mrb[0].mxu0
    %v1136 = vadd.f32 0.0, %v1135
    %v1137 = vpop.f32.mrb[0].mxu0
    %v1138 = vadd.f32 0.0, %v1137
    %v1139 = vpop.f32.mrb[0].mxu0
    %v1140 = vpop.f32.mrb[0].mxu0
    %1141 = vdwg.mxu0
    %1142 = vmatprep.subr.bf16.mxu0 %v450
    %1143 = vmatpush1.bf16.msra.mxu0 %v449
    %1144 = vmatprep.subr.bf16.mxu0 %v454
    %1145 = vmatpush1.bf16.msra.mxu0 %v453
    %1146 = vmatprep.subr.bf16.mxu0 %v458
    %1147 = vmatpush1.bf16.msra.mxu0 %v457
    %1148 = vmatprep.subr.bf16.mxu0 %v462
    %1149 = vmatpush1.bf16.msra.mxu0 %v461
    %1150 = vmatprep.subr.bf16.mxu0 %v466
    %1151 = vmatpush1.bf16.msra.mxu0 %v465
    %1152 = vmatprep.subr.bf16.mxu0 %v470
    %1153 = vmatpush1.bf16.msra.mxu0 %v469
    %1154 = vmatprep.subr.bf16.mxu0 %v474
    %1155 = vmatpush1.bf16.msra.mxu0 %v473
    %1156 = vmatprep.subr.bf16.mxu0 %v478
    %1157 = vmatpush1.bf16.msra.mxu0 %v477
    %1158 = vmatprep.subr.bf16.mxu0 0
    %1159 = vmatpush1.bf16.msra.mxu0 0
    %1160 = vmatprep.subr.bf16.mxu0 0
    %1161 = vmatpush1.bf16.msra.mxu0 0
    %1162 = vmatprep.subr.bf16.mxu0 0
    %1163 = vmatpush1.bf16.msra.mxu0 0
    %1164 = vmatprep.subr.bf16.mxu0 0
    %1165 = vmatpush1.bf16.msra.mxu0 0
    %1166 = vmatprep.subr.bf16.mxu0 0
    %1167 = vmatpush1.bf16.msra.mxu0 0
    %1168 = vmatprep.subr.bf16.mxu0 0
    %1169 = vmatpush1.bf16.msra.mxu0 0
    %1170 = vmatprep.subr.bf16.mxu0 0
    %1171 = vmatpush1.bf16.msra.mxu0 0
    %1172 = vmatprep.subr.bf16.mxu0 0
    %1173 = vmatpush1.bf16.msra.mxu0 0
    %1174 = vmatprep.mubr.bf16.mxu0 0
    %1175 = vmatmul.mubr.bf16.gmra.mrb[0].mxu0 %v643
    %v1176 = vpop.f32.mrb[0].mxu0
    %v1177 = vadd.f32 0.0, %v1176
    %v1178 = vpop.f32.mrb[0].mxu0
    %v1179 = vadd.f32 0.0, %v1178
    %v1180 = vpop.f32.mrb[0].mxu0
    %v1181 = vpop.f32.mrb[0].mxu0
    %1182 = vdwg.mxu0
    %v1187 = vcombine.low %v1136, %v1138
    %v1188 = vcombine.low %v1177, %v1179
    %v1190 = vunpack.c.l.s4 1966171168
    %v1191 = vunpack.c.0.s8 %v1190
    %v1192 = vlaneseq
    %v1193 = vshrl.u32 %v1192, 7
    %v1194 = vsub.s32 %v1191, %v1193
    %v1195 = vrot.slane %v1187, %v1194
    %v1197 = vunpack.c.l.s4 1966171168
    %v1198 = vunpack.c.0.s8 %v1197
    %v1199 = vlaneseq
    %v1200 = vshrl.u32 %v1199, 7
    %v1201 = vsub.s32 %v1198, %v1200
    %v1202 = vrot.slane %v1188, %v1201
    %v1203 = vcombine.low %v1195, %v1202
    %v1205 = vunpack.c.l.s4 1966171168
    %v1206 = vunpack.c.0.s8 %v1205
    %v1207 = vlaneseq
    %v1208 = vshrl.u32 %v1207, 7
    %v1209 = vsub.s32 %v1206, %v1208
    %v1210 = vrot.slane %v1203, %v1209
    %v1212 = vadd.f32 %v1100, %v1210
    %v1213 = vxor.u32 %v1212, 2147483648
    %v1214 = vmul.f32 %v1213, 1.442695
    %v1215 = vpow.pop %v1214
    %v1216 = vadd.f32 %v1215, 1.0
    %v1217 = vrcp.pop %v1216
    %v1218 = vmul.f32 1.0, %v1217
    %v1220 = vrot.slane %v1218, 3
    %v1222 = vmul.f32 %v1220, 2.0
    %v1223 = vsub.f32 %v1222, 1.0
    %v1224 = vrot.slane %v1218, 1
    %v1226 = vmul.f32 %v1224, %v638
    %v1227 = vmul.f32 %v1218, %v1223
    %v1228 = vadd.f32 %v1226, %v1227
    %v1229 = vtanh.pop %v1228
    %v1230 = vrot.slane %v1218, 2
    %v1232 = vmul.f32 %v1230, %v1229
    %v1233 = vpack.c.bf16 %v1232, %v1232
    %v1234 = vpack.c.bf16 %v1098, %v1098
    %1235 = vmatprep.subr.bf16.mxu0 %v838
    %1236 = vmatpush1.bf16.msra.mxu0 %v837
    %1237 = vmatprep.subr.bf16.mxu0 %v842
    %1238 = vmatpush1.bf16.msra.mxu0 %v841
    %1239 = vmatprep.subr.bf16.mxu0 %v846
    %1240 = vmatpush1.bf16.msra.mxu0 %v845
    %1241 = vmatprep.subr.bf16.mxu0 %v850
    %1242 = vmatpush1.bf16.msra.mxu0 %v849
    %1243 = vmatprep.subr.bf16.mxu0 %v854
    %1244 = vmatpush1.bf16.msra.mxu0 %v853
    %1245 = vmatprep.subr.bf16.mxu0 %v858
    %1246 = vmatpush1.bf16.msra.mxu0 %v857
    %1247 = vmatprep.subr.bf16.mxu0 %v862
    %1248 = vmatpush1.bf16.msra.mxu0 %v861
    %1249 = vmatprep.subr.bf16.mxu0 %v866
    %1250 = vmatpush1.bf16.msra.mxu0 %v865
    %1251 = vmatprep.subr.bf16.mxu0 %v870
    %1252 = vmatpush1.bf16.msra.mxu0 %v869
    %1253 = vmatprep.subr.bf16.mxu0 %v874
    %1254 = vmatpush1.bf16.msra.mxu0 %v873
    %1255 = vmatprep.subr.bf16.mxu0 %v878
    %1256 = vmatpush1.bf16.msra.mxu0 %v877
    %1257 = vmatprep.subr.bf16.mxu0 %v882
    %1258 = vmatpush1.bf16.msra.mxu0 %v881
    %1259 = vmatprep.subr.bf16.mxu0 %v886
    %1260 = vmatpush1.bf16.msra.mxu0 %v885
    %1261 = vmatprep.subr.bf16.mxu0 %v890
    %1262 = vmatpush1.bf16.msra.mxu0 %v889
    %1263 = vmatprep.subr.bf16.mxu0 %v894
    %1264 = vmatpush1.bf16.msra.mxu0 %v893
    %1265 = vmatprep.subr.bf16.mxu0 %v898
    %1266 = vmatpush1.bf16.msra.mxu0 %v897
    %1267 = vmatprep.mubr.bf16.mxu0 %v1234
    %1268 = vmatmul.mubr.bf16.gmra.mrb[0].mxu0 %v1233
    %v1269 = vpop.f32.mrb[0].mxu0
    %v1270 = vadd.f32 %v969, %v1269
    %v1271 = vpop.f32.mrb[0].mxu0
    %v1272 = vadd.f32 %v973, %v1271
    %v1273 = vpop.f32.mrb[0].mxu0
    %v1274 = vpop.f32.mrb[0].mxu0
    %1275 = vdwg.mxu0
    %1276 = vmatprep.subr.bf16.mxu0 %v840
    %1277 = vmatpush1.bf16.msra.mxu0 %v839
    %1278 = vmatprep.subr.bf16.mxu0 %v844
    %1279 = vmatpush1.bf16.msra.mxu0 %v843
    %1280 = vmatprep.subr.bf16.mxu0 %v848
    %1281 = vmatpush1.bf16.msra.mxu0 %v847
    %1282 = vmatprep.subr.bf16.mxu0 %v852
    %1283 = vmatpush1.bf16.msra.mxu0 %v851
    %1284 = vmatprep.subr.bf16.mxu0 %v856
    %1285 = vmatpush1.bf16.msra.mxu0 %v855
    %1286 = vmatprep.subr.bf16.mxu0 %v860
    %1287 = vmatpush1.bf16.msra.mxu0 %v859
    %1288 = vmatprep.subr.bf16.mxu0 %v864
    %1289 = vmatpush1.bf16.msra.mxu0 %v863
    %1290 = vmatprep.subr.bf16.mxu0 %v868
    %1291 = vmatpush1.bf16.msra.mxu0 %v867
    %1292 = vmatprep.subr.bf16.mxu0 %v872
    %1293 = vmatpush1.bf16.msra.mxu0 %v871
    %1294 = vmatprep.subr.bf16.mxu0 %v876
    %1295 = vmatpush1.bf16.msra.mxu0 %v875
    %1296 = vmatprep.subr.bf16.mxu0 %v880
    %1297 = vmatpush1.bf16.msra.mxu0 %v879
    %1298 = vmatprep.subr.bf16.mxu0 %v884
    %1299 = vmatpush1.bf16.msra.mxu0 %v883
    %1300 = vmatprep.subr.bf16.mxu0 %v888
    %1301 = vmatpush1.bf16.msra.mxu0 %v887
    %1302 = vmatprep.subr.bf16.mxu0 %v892
    %1303 = vmatpush1.bf16.msra.mxu0 %v891
    %1304 = vmatprep.subr.bf16.mxu0 %v896
    %1305 = vmatpush1.bf16.msra.mxu0 %v895
    %1306 = vmatprep.subr.bf16.mxu0 %v900
    %1307 = vmatpush1.bf16.msra.mxu0 %v899
    %1308 = vmatprep.mubr.bf16.mxu0 %v1234
    %1309 = vmatmul.mubr.bf16.gmra.mrb[0].mxu0 %v1233
    %v1310 = vpop.f32.mrb[0].mxu0
    %v1311 = vadd.f32 %v977, %v1310
    %v1312 = vpop.f32.mrb[0].mxu0
    %v1313 = vadd.f32 %v981, %v1312
    %v1314 = vpop.f32.mrb[0].mxu0
    %v1315 = vpop.f32.mrb[0].mxu0
    %1316 = vdwg.mxu0
    %v1317 = vxor.u32 %v1270, 2147483648
    %v1318 = vxor.u32 %v1272, 2147483648
    %v1319 = vxor.u32 %v1311, 2147483648
    %v1320 = vxor.u32 %v1313, 2147483648
    %v1321 = vmul.f32 %v1317, 1.442695
    %v1322 = vpow.pop %v1321
    %v1323 = vmul.f32 %v1318, 1.442695
    %v1324 = vpow.pop %v1323
    %v1325 = vmul.f32 %v1319, 1.442695
    %v1326 = vpow.pop %v1325
    %v1327 = vmul.f32 %v1320, 1.442695
    %v1328 = vpow.pop %v1327
    %v1329 = vadd.f32 %v1322, 1.0
    %v1330 = vadd.f32 %v1324, 1.0
    %v1331 = vadd.f32 %v1326, 1.0
    %v1332 = vadd.f32 %v1328, 1.0
    %v1333 = vrcp.pop %v1329
    %v1334 = vmul.f32 1.0, %v1333
    %v1335 = vrcp.pop %v1330
    %v1336 = vmul.f32 1.0, %v1335
    %v1337 = vrcp.pop %v1331
    %v1338 = vmul.f32 1.0, %v1337
    %v1339 = vrcp.pop %v1332
    %v1340 = vmul.f32 1.0, %v1339
    %v1341 = vmul.f32 %v1340, 2.0
    %v1342 = vsub.f32 %v1341, 1.0
    %v1343 = vmul.f32 %v1336, %v1096
    %v1344 = vmul.f32 %v1334, %v1342
    %v1345 = vadd.f32 %v1343, %v1344
    %v1346 = vtanh.pop %v1345
    %v1347 = vmul.f32 %v1338, %v1346
    %s1348 = scalar_lea.vmem [#allocation2], 2
    %v1349 = vld [vmem:[%s1348] ss:$8 sm:$0xf]
    %1350 = vmatprep.subr.bf16.mxu0 %v448
    %1351 = vmatpush1.bf16.msra.mxu0 %v447
    %1352 = vmatprep.subr.bf16.mxu0 %v452
    %1353 = vmatpush1.bf16.msra.mxu0 %v451
    %1354 = vmatprep.subr.bf16.mxu0 %v456
    %1355 = vmatpush1.bf16.msra.mxu0 %v455
    %1356 = vmatprep.subr.bf16.mxu0 %v460
    %1357 = vmatpush1.bf16.msra.mxu0 %v459
    %1358 = vmatprep.subr.bf16.mxu0 %v464
    %1359 = vmatpush1.bf16.msra.mxu0 %v463
    %1360 = vmatprep.subr.bf16.mxu0 %v468
    %1361 = vmatpush1.bf16.msra.mxu0 %v467
    %1362 = vmatprep.subr.bf16.mxu0 %v472
    %1363 = vmatpush1.bf16.msra.mxu0 %v471
    %1364 = vmatprep.subr.bf16.mxu0 %v476
    %1365 = vmatpush1.bf16.msra.mxu0 %v475
    %1366 = vmatprep.subr.bf16.mxu0 0
    %1367 = vmatpush1.bf16.msra.mxu0 0
    %1368 = vmatprep.subr.bf16.mxu0 0
    %1369 = vmatpush1.bf16.msra.mxu0 0
    %1370 = vmatprep.subr.bf16.mxu0 0
    %1371 = vmatpush1.bf16.msra.mxu0 0
    %1372 = vmatprep.subr.bf16.mxu0 0
    %1373 = vmatpush1.bf16.msra.mxu0 0
    %1374 = vmatprep.subr.bf16.mxu0 0
    %1375 = vmatpush1.bf16.msra.mxu0 0
    %1376 = vmatprep.subr.bf16.mxu0 0
    %1377 = vmatpush1.bf16.msra.mxu0 0
    %1378 = vmatprep.subr.bf16.mxu0 0
    %1379 = vmatpush1.bf16.msra.mxu0 0
    %1380 = vmatprep.subr.bf16.mxu0 0
    %1381 = vmatpush1.bf16.msra.mxu0 0
    %1382 = vmatprep.mubr.bf16.mxu0 0
    %1383 = vmatmul.mubr.bf16.gmra.mrb[0].mxu0 %v1233
    %v1384 = vpop.f32.mrb[0].mxu0
    %v1385 = vadd.f32 0.0, %v1384
    %v1386 = vpop.f32.mrb[0].mxu0
    %v1387 = vadd.f32 0.0, %v1386
    %v1388 = vpop.f32.mrb[0].mxu0
    %v1389 = vpop.f32.mrb[0].mxu0
    %1390 = vdwg.mxu0
    %1391 = vmatprep.subr.bf16.mxu0 %v450
    %1392 = vmatpush1.bf16.msra.mxu0 %v449
    %1393 = vmatprep.subr.bf16.mxu0 %v454
    %1394 = vmatpush1.bf16.msra.mxu0 %v453
    %1395 = vmatprep.subr.bf16.mxu0 %v458
    %1396 = vmatpush1.bf16.msra.mxu0 %v457
    %1397 = vmatprep.subr.bf16.mxu0 %v462
    %1398 = vmatpush1.bf16.msra.mxu0 %v461
    %1399 = vmatprep.subr.bf16.mxu0 %v466
    %1400 = vmatpush1.bf16.msra.mxu0 %v465
    %1401 = vmatprep.subr.bf16.mxu0 %v470
    %1402 = vmatpush1.bf16.msra.mxu0 %v469
    %1403 = vmatprep.subr.bf16.mxu0 %v474
    %1404 = vmatpush1.bf16.msra.mxu0 %v473
    %1405 = vmatprep.subr.bf16.mxu0 %v478
    %1406 = vmatpush1.bf16.msra.mxu0 %v477
    %1407 = vmatprep.subr.bf16.mxu0 0
    %1408 = vmatpush1.bf16.msra.mxu0 0
    %1409 = vmatprep.subr.bf16.mxu0 0
    %1410 = vmatpush1.bf16.msra.mxu0 0
    %1411 = vmatprep.subr.bf16.mxu0 0
    %1412 = vmatpush1.bf16.msra.mxu0 0
    %1413 = vmatprep.subr.bf16.mxu0 0
    %1414 = vmatpush1.bf16.msra.mxu0 0
    %1415 = vmatprep.subr.bf16.mxu0 0
    %1416 = vmatpush1.bf16.msra.mxu0 0
    %1417 = vmatprep.subr.bf16.mxu0 0
    %1418 = vmatpush1.bf16.msra.mxu0 0
    %1419 = vmatprep.subr.bf16.mxu0 0
    %1420 = vmatpush1.bf16.msra.mxu0 0
    %1421 = vmatprep.subr.bf16.mxu0 0
    %1422 = vmatpush1.bf16.msra.mxu0 0
    %1423 = vmatprep.mubr.bf16.mxu0 0
    %1424 = vmatmul.mubr.bf16.gmra.mrb[0].mxu0 %v1233
    %v1425 = vpop.f32.mrb[0].mxu0
    %v1426 = vadd.f32 0.0, %v1425
    %v1427 = vpop.f32.mrb[0].mxu0
    %v1428 = vadd.f32 0.0, %v1427
    %v1429 = vpop.f32.mrb[0].mxu0
    %v1430 = vpop.f32.mrb[0].mxu0
    %1431 = vdwg.mxu0
    %v1436 = vcombine.low %v1385, %v1387
    %v1437 = vcombine.low %v1426, %v1428
    %v1439 = vunpack.c.l.s4 1966171168
    %v1440 = vunpack.c.0.s8 %v1439
    %v1441 = vlaneseq
    %v1442 = vshrl.u32 %v1441, 7
    %v1443 = vsub.s32 %v1440, %v1442
    %v1444 = vrot.slane %v1436, %v1443
    %v1446 = vunpack.c.l.s4 1966171168
    %v1447 = vunpack.c.0.s8 %v1446
    %v1448 = vlaneseq
    %v1449 = vshrl.u32 %v1448, 7
    %v1450 = vsub.s32 %v1447, %v1449
    %v1451 = vrot.slane %v1437, %v1450
    %v1452 = vcombine.low %v1444, %v1451
    %v1454 = vunpack.c.l.s4 1966171168
    %v1455 = vunpack.c.0.s8 %v1454
    %v1456 = vlaneseq
    %v1457 = vshrl.u32 %v1456, 7
    %v1458 = vsub.s32 %v1455, %v1457
    %v1459 = vrot.slane %v1452, %v1458
    %v1461 = vadd.f32 %v1349, %v1459
    %v1462 = vxor.u32 %v1461, 2147483648
    %v1463 = vmul.f32 %v1462, 1.442695
    %v1464 = vpow.pop %v1463
    %v1465 = vadd.f32 %v1464, 1.0
    %v1466 = vrcp.pop %v1465
    %v1467 = vmul.f32 1.0, %v1466
    %v1469 = vrot.slane %v1467, 3
    %v1471 = vmul.f32 %v1469, 2.0
    %v1472 = vsub.f32 %v1471, 1.0
    %v1473 = vrot.slane %v1467, 1
    %v1475 = vmul.f32 %v1473, %v1228
    %v1476 = vmul.f32 %v1467, %v1472
    %v1477 = vadd.f32 %v1475, %v1476
    %v1478 = vtanh.pop %v1477
    %v1479 = vrot.slane %v1467, 2
    %v1481 = vmul.f32 %v1479, %v1478
    %v1482 = vpack.c.bf16 %v1481, %v1481
    %v1483 = vpack.c.bf16 %v1347, %v1347
    %1484 = vmatprep.subr.bf16.mxu0 %v838
    %1485 = vmatpush1.bf16.msra.mxu0 %v837
    %1486 = vmatprep.subr.bf16.mxu0 %v842
    %1487 = vmatpush1.bf16.msra.mxu0 %v841
    %1488 = vmatprep.subr.bf16.mxu0 %v846
    %1489 = vmatpush1.bf16.msra.mxu0 %v845
    %1490 = vmatprep.subr.bf16.mxu0 %v850
    %1491 = vmatpush1.bf16.msra.mxu0 %v849
    %1492 = vmatprep.subr.bf16.mxu0 %v854
    %1493 = vmatpush1.bf16.msra.mxu0 %v853
    %1494 = vmatprep.subr.bf16.mxu0 %v858
    %1495 = vmatpush1.bf16.msra.mxu0 %v857
    %1496 = vmatprep.subr.bf16.mxu0 %v862
    %1497 = vmatpush1.bf16.msra.mxu0 %v861
    %1498 = vmatprep.subr.bf16.mxu0 %v866
    %1499 = vmatpush1.bf16.msra.mxu0 %v865
    %1500 = vmatprep.subr.bf16.mxu0 %v870
    %1501 = vmatpush1.bf16.msra.mxu0 %v869
    %1502 = vmatprep.subr.bf16.mxu0 %v874
    %1503 = vmatpush1.bf16.msra.mxu0 %v873
    %1504 = vmatprep.subr.bf16.mxu0 %v878
    %1505 = vmatpush1.bf16.msra.mxu0 %v877
    %1506 = vmatprep.subr.bf16.mxu0 %v882
    %1507 = vmatpush1.bf16.msra.mxu0 %v881
    %1508 = vmatprep.subr.bf16.mxu0 %v886
    %1509 = vmatpush1.bf16.msra.mxu0 %v885
    %1510 = vmatprep.subr.bf16.mxu0 %v890
    %1511 = vmatpush1.bf16.msra.mxu0 %v889
    %1512 = vmatprep.subr.bf16.mxu0 %v894
    %1513 = vmatpush1.bf16.msra.mxu0 %v893
    %1514 = vmatprep.subr.bf16.mxu0 %v898
    %1515 = vmatpush1.bf16.msra.mxu0 %v897
    %1516 = vmatprep.mubr.bf16.mxu0 %v1483
    %1517 = vmatmul.mubr.bf16.gmra.mrb[0].mxu0 %v1482
    %v1518 = vpop.f32.mrb[0].mxu0
    %v1519 = vadd.f32 %v969, %v1518
    %v1520 = vpop.f32.mrb[0].mxu0
    %v1521 = vadd.f32 %v973, %v1520
    %v1522 = vpop.f32.mrb[0].mxu0
    %v1523 = vpop.f32.mrb[0].mxu0
    %1524 = vdwg.mxu0
    %1525 = vmatprep.subr.bf16.mxu0 %v840
    %1526 = vmatpush1.bf16.msra.mxu0 %v839
    %1527 = vmatprep.subr.bf16.mxu0 %v844
    %1528 = vmatpush1.bf16.msra.mxu0 %v843
    %1529 = vmatprep.subr.bf16.mxu0 %v848
    %1530 = vmatpush1.bf16.msra.mxu0 %v847
    %1531 = vmatprep.subr.bf16.mxu0 %v852
    %1532 = vmatpush1.bf16.msra.mxu0 %v851
    %1533 = vmatprep.subr.bf16.mxu0 %v856
    %1534 = vmatpush1.bf16.msra.mxu0 %v855
    %1535 = vmatprep.subr.bf16.mxu0 %v860
    %1536 = vmatpush1.bf16.msra.mxu0 %v859
    %1537 = vmatprep.subr.bf16.mxu0 %v864
    %1538 = vmatpush1.bf16.msra.mxu0 %v863
    %1539 = vmatprep.subr.bf16.mxu0 %v868
    %1540 = vmatpush1.bf16.msra.mxu0 %v867
    %1541 = vmatprep.subr.bf16.mxu0 %v872
    %1542 = vmatpush1.bf16.msra.mxu0 %v871
    %1543 = vmatprep.subr.bf16.mxu0 %v876
    %1544 = vmatpush1.bf16.msra.mxu0 %v875
    %1545 = vmatprep.subr.bf16.mxu0 %v880
    %1546 = vmatpush1.bf16.msra.mxu0 %v879
    %1547 = vmatprep.subr.bf16.mxu0 %v884
    %1548 = vmatpush1.bf16.msra.mxu0 %v883
    %1549 = vmatprep.subr.bf16.mxu0 %v888
    %1550 = vmatpush1.bf16.msra.mxu0 %v887
    %1551 = vmatprep.subr.bf16.mxu0 %v892
    %1552 = vmatpush1.bf16.msra.mxu0 %v891
    %1553 = vmatprep.subr.bf16.mxu0 %v896
    %1554 = vmatpush1.bf16.msra.mxu0 %v895
    %1555 = vmatprep.subr.bf16.mxu0 %v900
    %1556 = vmatpush1.bf16.msra.mxu0 %v899
    %1557 = vmatprep.mubr.bf16.mxu0 %v1483
    %1558 = vmatmul.mubr.bf16.gmra.mrb[0].mxu0 %v1482
    %v1559 = vpop.f32.mrb[0].mxu0
    %v1560 = vadd.f32 %v977, %v1559
    %v1561 = vpop.f32.mrb[0].mxu0
    %v1562 = vadd.f32 %v981, %v1561
    %v1563 = vpop.f32.mrb[0].mxu0
    %v1564 = vpop.f32.mrb[0].mxu0
    %1565 = vdwg.mxu0
    %v1566 = vxor.u32 %v1519, 2147483648
    %v1567 = vxor.u32 %v1521, 2147483648
    %v1568 = vxor.u32 %v1560, 2147483648
    %v1569 = vxor.u32 %v1562, 2147483648
    %v1570 = vmul.f32 %v1566, 1.442695
    %v1571 = vpow.pop %v1570
    %v1572 = vmul.f32 %v1567, 1.442695
    %v1573 = vpow.pop %v1572
    %v1574 = vmul.f32 %v1568, 1.442695
    %v1575 = vpow.pop %v1574
    %v1576 = vmul.f32 %v1569, 1.442695
    %v1577 = vpow.pop %v1576
    %v1578 = vadd.f32 %v1571, 1.0
    %v1579 = vadd.f32 %v1573, 1.0
    %v1580 = vadd.f32 %v1575, 1.0
    %v1581 = vadd.f32 %v1577, 1.0
    %v1582 = vrcp.pop %v1578
    %v1583 = vmul.f32 1.0, %v1582
    %v1584 = vrcp.pop %v1579
    %v1585 = vmul.f32 1.0, %v1584
    %v1586 = vrcp.pop %v1580
    %v1587 = vmul.f32 1.0, %v1586
    %v1588 = vrcp.pop %v1581
    %v1589 = vmul.f32 1.0, %v1588
    %v1590 = vmul.f32 %v1589, 2.0
    %v1591 = vsub.f32 %v1590, 1.0
    %v1592 = vmul.f32 %v1585, %v1345
    %v1593 = vmul.f32 %v1583, %v1591
    %v1594 = vadd.f32 %v1592, %v1593
    %v1595 = vtanh.pop %v1594
    %v1596 = vmul.f32 %v1587, %v1595
    %s1597 = scalar_lea.vmem [#allocation2], 3
    %v1598 = vld [vmem:[%s1597] ss:$8 sm:$0xf]
    %1599 = vmatprep.subr.bf16.mxu0 %v448
    %1600 = vmatpush1.bf16.msra.mxu0 %v447
    %1601 = vmatprep.subr.bf16.mxu0 %v452
    %1602 = vmatpush1.bf16.msra.mxu0 %v451
    %1603 = vmatprep.subr.bf16.mxu0 %v456
    %1604 = vmatpush1.bf16.msra.mxu0 %v455
    %1605 = vmatprep.subr.bf16.mxu0 %v460
    %1606 = vmatpush1.bf16.msra.mxu0 %v459
    %1607 = vmatprep.subr.bf16.mxu0 %v464
    %1608 = vmatpush1.bf16.msra.mxu0 %v463
    %1609 = vmatprep.subr.bf16.mxu0 %v468
    %1610 = vmatpush1.bf16.msra.mxu0 %v467
    %1611 = vmatprep.subr.bf16.mxu0 %v472
    %1612 = vmatpush1.bf16.msra.mxu0 %v471
    %1613 = vmatprep.subr.bf16.mxu0 %v476
    %1614 = vmatpush1.bf16.msra.mxu0 %v475
    %1615 = vmatprep.subr.bf16.mxu0 0
    %1616 = vmatpush1.bf16.msra.mxu0 0
    %1617 = vmatprep.subr.bf16.mxu0 0
    %1618 = vmatpush1.bf16.msra.mxu0 0
    %1619 = vmatprep.subr.bf16.mxu0 0
    %1620 = vmatpush1.bf16.msra.mxu0 0
    %1621 = vmatprep.subr.bf16.mxu0 0
    %1622 = vmatpush1.bf16.msra.mxu0 0
    %1623 = vmatprep.subr.bf16.mxu0 0
    %1624 = vmatpush1.bf16.msra.mxu0 0
    %1625 = vmatprep.subr.bf16.mxu0 0
    %1626 = vmatpush1.bf16.msra.mxu0 0
    %1627 = vmatprep.subr.bf16.mxu0 0
    %1628 = vmatpush1.bf16.msra.mxu0 0
    %1629 = vmatprep.subr.bf16.mxu0 0
    %1630 = vmatpush1.bf16.msra.mxu0 0
    %1631 = vmatprep.mubr.bf16.mxu0 0
    %1632 = vmatmul.mubr.bf16.gmra.mrb[0].mxu0 %v1482
    %v1633 = vpop.f32.mrb[0].mxu0
    %v1634 = vadd.f32 0.0, %v1633
    %v1635 = vpop.f32.mrb[0].mxu0
    %v1636 = vadd.f32 0.0, %v1635
    %v1637 = vpop.f32.mrb[0].mxu0
    %v1638 = vpop.f32.mrb[0].mxu0
    %1639 = vdwg.mxu0
    %1640 = vmatprep.subr.bf16.mxu0 %v450
    %1641 = vmatpush1.bf16.msra.mxu0 %v449
    %1642 = vmatprep.subr.bf16.mxu0 %v454
    %1643 = vmatpush1.bf16.msra.mxu0 %v453
    %1644 = vmatprep.subr.bf16.mxu0 %v458
    %1645 = vmatpush1.bf16.msra.mxu0 %v457
    %1646 = vmatprep.subr.bf16.mxu0 %v462
    %1647 = vmatpush1.bf16.msra.mxu0 %v461
    %1648 = vmatprep.subr.bf16.mxu0 %v466
    %1649 = vmatpush1.bf16.msra.mxu0 %v465
    %1650 = vmatprep.subr.bf16.mxu0 %v470
    %1651 = vmatpush1.bf16.msra.mxu0 %v469
    %1652 = vmatprep.subr.bf16.mxu0 %v474
    %1653 = vmatpush1.bf16.msra.mxu0 %v473
    %1654 = vmatprep.subr.bf16.mxu0 %v478
    %1655 = vmatpush1.bf16.msra.mxu0 %v477
    %1656 = vmatprep.subr.bf16.mxu0 0
    %1657 = vmatpush1.bf16.msra.mxu0 0
    %1658 = vmatprep.subr.bf16.mxu0 0
    %1659 = vmatpush1.bf16.msra.mxu0 0
    %1660 = vmatprep.subr.bf16.mxu0 0
    %1661 = vmatpush1.bf16.msra.mxu0 0
    %1662 = vmatprep.subr.bf16.mxu0 0
    %1663 = vmatpush1.bf16.msra.mxu0 0
    %1664 = vmatprep.subr.bf16.mxu0 0
    %1665 = vmatpush1.bf16.msra.mxu0 0
    %1666 = vmatprep.subr.bf16.mxu0 0
    %1667 = vmatpush1.bf16.msra.mxu0 0
    %1668 = vmatprep.subr.bf16.mxu0 0
    %1669 = vmatpush1.bf16.msra.mxu0 0
    %1670 = vmatprep.subr.bf16.mxu0 0
    %1671 = vmatpush1.bf16.msra.mxu0 0
    %1672 = vmatprep.mubr.bf16.mxu0 0
    %1673 = vmatmul.mubr.bf16.gmra.mrb[0].mxu0 %v1482
    %v1674 = vpop.f32.mrb[0].mxu0
    %v1675 = vadd.f32 0.0, %v1674
    %v1676 = vpop.f32.mrb[0].mxu0
    %v1677 = vadd.f32 0.0, %v1676
    %v1678 = vpop.f32.mrb[0].mxu0
    %v1679 = vpop.f32.mrb[0].mxu0
    %1680 = vdwg.mxu0
    %v1685 = vcombine.low %v1634, %v1636
    %v1686 = vcombine.low %v1675, %v1677
    %v1688 = vunpack.c.l.s4 1966171168
    %v1689 = vunpack.c.0.s8 %v1688
    %v1690 = vlaneseq
    %v1691 = vshrl.u32 %v1690, 7
    %v1692 = vsub.s32 %v1689, %v1691
    %v1693 = vrot.slane %v1685, %v1692
    %v1695 = vunpack.c.l.s4 1966171168
    %v1696 = vunpack.c.0.s8 %v1695
    %v1697 = vlaneseq
    %v1698 = vshrl.u32 %v1697, 7
    %v1699 = vsub.s32 %v1696, %v1698
    %v1700 = vrot.slane %v1686, %v1699
    %v1701 = vcombine.low %v1693, %v1700
    %v1703 = vunpack.c.l.s4 1966171168
    %v1704 = vunpack.c.0.s8 %v1703
    %v1705 = vlaneseq
    %v1706 = vshrl.u32 %v1705, 7
    %v1707 = vsub.s32 %v1704, %v1706
    %v1708 = vrot.slane %v1701, %v1707
    %v1710 = vadd.f32 %v1598, %v1708
    %v1711 = vxor.u32 %v1710, 2147483648
    %v1712 = vmul.f32 %v1711, 1.442695
    %v1713 = vpow.pop %v1712
    %v1714 = vadd.f32 %v1713, 1.0
    %v1715 = vrcp.pop %v1714
    %v1716 = vmul.f32 1.0, %v1715
    %v1718 = vrot.slane %v1716, 3
    %v1720 = vmul.f32 %v1718, 2.0
    %v1721 = vsub.f32 %v1720, 1.0
    %v1722 = vrot.slane %v1716, 1
    %v1724 = vmul.f32 %v1722, %v1477
    %v1725 = vmul.f32 %v1716, %v1721
    %v1726 = vadd.f32 %v1724, %v1725
    %v1727 = vtanh.pop %v1726
    %v1728 = vrot.slane %v1716, 2
    %v1730 = vmul.f32 %v1728, %v1727
    %v1731 = vpack.c.bf16 %v1730, %v1730
    %v1732 = vpack.c.bf16 %v1596, %v1596
    %1733 = vmatprep.subr.bf16.mxu0 %v838
    %1734 = vmatpush1.bf16.msra.mxu0 %v837
    %1735 = vmatprep.subr.bf16.mxu0 %v842
    %1736 = vmatpush1.bf16.msra.mxu0 %v841
    %1737 = vmatprep.subr.bf16.mxu0 %v846
    %1738 = vmatpush1.bf16.msra.mxu0 %v845
    %1739 = vmatprep.subr.bf16.mxu0 %v850
    %1740 = vmatpush1.bf16.msra.mxu0 %v849
    %1741 = vmatprep.subr.bf16.mxu0 %v854
    %1742 = vmatpush1.bf16.msra.mxu0 %v853
    %1743 = vmatprep.subr.bf16.mxu0 %v858
    %1744 = vmatpush1.bf16.msra.mxu0 %v857
    %1745 = vmatprep.subr.bf16.mxu0 %v862
    %1746 = vmatpush1.bf16.msra.mxu0 %v861
    %1747 = vmatprep.subr.bf16.mxu0 %v866
    %1748 = vmatpush1.bf16.msra.mxu0 %v865
    %1749 = vmatprep.subr.bf16.mxu0 %v870
    %1750 = vmatpush1.bf16.msra.mxu0 %v869
    %1751 = vmatprep.subr.bf16.mxu0 %v874
    %1752 = vmatpush1.bf16.msra.mxu0 %v873
    %1753 = vmatprep.subr.bf16.mxu0 %v878
    %1754 = vmatpush1.bf16.msra.mxu0 %v877
    %1755 = vmatprep.subr.bf16.mxu0 %v882
    %1756 = vmatpush1.bf16.msra.mxu0 %v881
    %1757 = vmatprep.subr.bf16.mxu0 %v886
    %1758 = vmatpush1.bf16.msra.mxu0 %v885
    %1759 = vmatprep.subr.bf16.mxu0 %v890
    %1760 = vmatpush1.bf16.msra.mxu0 %v889
    %1761 = vmatprep.subr.bf16.mxu0 %v894
    %1762 = vmatpush1.bf16.msra.mxu0 %v893
    %1763 = vmatprep.subr.bf16.mxu0 %v898
    %1764 = vmatpush1.bf16.msra.mxu0 %v897
    %1765 = vmatprep.mubr.bf16.mxu0 %v1732
    %1766 = vmatmul.mubr.bf16.gmra.mrb[0].mxu0 %v1731
    %v1767 = vpop.f32.mrb[0].mxu0
    %v1768 = vadd.f32 %v969, %v1767
    %v1769 = vpop.f32.mrb[0].mxu0
    %v1770 = vadd.f32 %v973, %v1769
    %v1771 = vpop.f32.mrb[0].mxu0
    %v1772 = vpop.f32.mrb[0].mxu0
    %1773 = vdwg.mxu0
    %1774 = vmatprep.subr.bf16.mxu0 %v840
    %1775 = vmatpush1.bf16.msra.mxu0 %v839
    %1776 = vmatprep.subr.bf16.mxu0 %v844
    %1777 = vmatpush1.bf16.msra.mxu0 %v843
    %1778 = vmatprep.subr.bf16.mxu0 %v848
    %1779 = vmatpush1.bf16.msra.mxu0 %v847
    %1780 = vmatprep.subr.bf16.mxu0 %v852
    %1781 = vmatpush1.bf16.msra.mxu0 %v851
    %1782 = vmatprep.subr.bf16.mxu0 %v856
    %1783 = vmatpush1.bf16.msra.mxu0 %v855
    %1784 = vmatprep.subr.bf16.mxu0 %v860
    %1785 = vmatpush1.bf16.msra.mxu0 %v859
    %1786 = vmatprep.subr.bf16.mxu0 %v864
    %1787 = vmatpush1.bf16.msra.mxu0 %v863
    %1788 = vmatprep.subr.bf16.mxu0 %v868
    %1789 = vmatpush1.bf16.msra.mxu0 %v867
    %1790 = vmatprep.subr.bf16.mxu0 %v872
    %1791 = vmatpush1.bf16.msra.mxu0 %v871
    %1792 = vmatprep.subr.bf16.mxu0 %v876
    %1793 = vmatpush1.bf16.msra.mxu0 %v875
    %1794 = vmatprep.subr.bf16.mxu0 %v880
    %1795 = vmatpush1.bf16.msra.mxu0 %v879
    %1796 = vmatprep.subr.bf16.mxu0 %v884
    %1797 = vmatpush1.bf16.msra.mxu0 %v883
    %1798 = vmatprep.subr.bf16.mxu0 %v888
    %1799 = vmatpush1.bf16.msra.mxu0 %v887
    %1800 = vmatprep.subr.bf16.mxu0 %v892
    %1801 = vmatpush1.bf16.msra.mxu0 %v891
    %1802 = vmatprep.subr.bf16.mxu0 %v896
    %1803 = vmatpush1.bf16.msra.mxu0 %v895
    %1804 = vmatprep.subr.bf16.mxu0 %v900
    %1805 = vmatpush1.bf16.msra.mxu0 %v899
    %1806 = vmatprep.mubr.bf16.mxu0 %v1732
    %1807 = vmatmul.mubr.bf16.gmra.mrb[0].mxu0 %v1731
    %v1808 = vpop.f32.mrb[0].mxu0
    %v1809 = vadd.f32 %v977, %v1808
    %v1810 = vpop.f32.mrb[0].mxu0
    %v1811 = vadd.f32 %v981, %v1810
    %v1812 = vpop.f32.mrb[0].mxu0
    %v1813 = vpop.f32.mrb[0].mxu0
    %1814 = vdwg.mxu0
    %v1815 = vxor.u32 %v1768, 2147483648
    %v1816 = vxor.u32 %v1770, 2147483648
    %v1817 = vxor.u32 %v1809, 2147483648
    %v1818 = vxor.u32 %v1811, 2147483648
    %v1819 = vmul.f32 %v1815, 1.442695
    %v1820 = vpow.pop %v1819
    %v1821 = vmul.f32 %v1816, 1.442695
    %v1822 = vpow.pop %v1821
    %v1823 = vmul.f32 %v1817, 1.442695
    %v1824 = vpow.pop %v1823
    %v1825 = vmul.f32 %v1818, 1.442695
    %v1826 = vpow.pop %v1825
    %v1827 = vadd.f32 %v1820, 1.0
    %v1828 = vadd.f32 %v1822, 1.0
    %v1829 = vadd.f32 %v1824, 1.0
    %v1830 = vadd.f32 %v1826, 1.0
    %v1831 = vrcp.pop %v1827
    %v1832 = vmul.f32 1.0, %v1831
    %v1833 = vrcp.pop %v1828
    %v1834 = vmul.f32 1.0, %v1833
    %v1835 = vrcp.pop %v1829
    %v1836 = vmul.f32 1.0, %v1835
    %v1837 = vrcp.pop %v1830
    %v1838 = vmul.f32 1.0, %v1837
    %v1839 = vmul.f32 %v1838, 2.0
    %v1840 = vsub.f32 %v1839, 1.0
    %v1841 = vmul.f32 %v1834, %v1594
    %v1842 = vmul.f32 %v1832, %v1840
    %v1843 = vadd.f32 %v1841, %v1842
    %v1844 = vtanh.pop %v1843
    %v1845 = vmul.f32 %v1836, %v1844
    %s1846 = scalar_lea.vmem [#allocation2], 4
    %v1847 = vld [vmem:[%s1846] ss:$8 sm:$0xf]
    %1848 = vmatprep.subr.bf16.mxu0 %v448
    %1849 = vmatpush1.bf16.msra.mxu0 %v447
    %1850 = vmatprep.subr.bf16.mxu0 %v452
    %1851 = vmatpush1.bf16.msra.mxu0 %v451
    %1852 = vmatprep.subr.bf16.mxu0 %v456
    %1853 = vmatpush1.bf16.msra.mxu0 %v455
    %1854 = vmatprep.subr.bf16.mxu0 %v460
    %1855 = vmatpush1.bf16.msra.mxu0 %v459
    %1856 = vmatprep.subr.bf16.mxu0 %v464
    %1857 = vmatpush1.bf16.msra.mxu0 %v463
    %1858 = vmatprep.subr.bf16.mxu0 %v468
    %1859 = vmatpush1.bf16.msra.mxu0 %v467
    %1860 = vmatprep.subr.bf16.mxu0 %v472
    %1861 = vmatpush1.bf16.msra.mxu0 %v471
    %1862 = vmatprep.subr.bf16.mxu0 %v476
    %1863 = vmatpush1.bf16.msra.mxu0 %v475
    %1864 = vmatprep.subr.bf16.mxu0 0
    %1865 = vmatpush1.bf16.msra.mxu0 0
    %1866 = vmatprep.subr.bf16.mxu0 0
    %1867 = vmatpush1.bf16.msra.mxu0 0
    %1868 = vmatprep.subr.bf16.mxu0 0
    %1869 = vmatpush1.bf16.msra.mxu0 0
    %1870 = vmatprep.subr.bf16.mxu0 0
    %1871 = vmatpush1.bf16.msra.mxu0 0
    %1872 = vmatprep.subr.bf16.mxu0 0
    %1873 = vmatpush1.bf16.msra.mxu0 0
    %1874 = vmatprep.subr.bf16.mxu0 0
    %1875 = vmatpush1.bf16.msra.mxu0 0
    %1876 = vmatprep.subr.bf16.mxu0 0
    %1877 = vmatpush1.bf16.msra.mxu0 0
    %1878 = vmatprep.subr.bf16.mxu0 0
    %1879 = vmatpush1.bf16.msra.mxu0 0
    %1880 = vmatprep.mubr.bf16.mxu0 0
    %1881 = vmatmul.mubr.bf16.gmra.mrb[0].mxu0 %v1731
    %v1882 = vpop.f32.mrb[0].mxu0
    %v1883 = vadd.f32 0.0, %v1882
    %v1884 = vpop.f32.mrb[0].mxu0
    %v1885 = vadd.f32 0.0, %v1884
    %v1886 = vpop.f32.mrb[0].mxu0
    %v1887 = vpop.f32.mrb[0].mxu0
    %1888 = vdwg.mxu0
    %1889 = vmatprep.subr.bf16.mxu0 %v450
    %1890 = vmatpush1.bf16.msra.mxu0 %v449
    %1891 = vmatprep.subr.bf16.mxu0 %v454
    %1892 = vmatpush1.bf16.msra.mxu0 %v453
    %1893 = vmatprep.subr.bf16.mxu0 %v458
    %1894 = vmatpush1.bf16.msra.mxu0 %v457
    %1895 = vmatprep.subr.bf16.mxu0 %v462
    %1896 = vmatpush1.bf16.msra.mxu0 %v461
    %1897 = vmatprep.subr.bf16.mxu0 %v466
    %1898 = vmatpush1.bf16.msra.mxu0 %v465
    %1899 = vmatprep.subr.bf16.mxu0 %v470
    %1900 = vmatpush1.bf16.msra.mxu0 %v469
    %1901 = vmatprep.subr.bf16.mxu0 %v474
    %1902 = vmatpush1.bf16.msra.mxu0 %v473
    %1903 = vmatprep.subr.bf16.mxu0 %v478
    %1904 = vmatpush1.bf16.msra.mxu0 %v477
    %1905 = vmatprep.subr.bf16.mxu0 0
    %1906 = vmatpush1.bf16.msra.mxu0 0
    %1907 = vmatprep.subr.bf16.mxu0 0
    %1908 = vmatpush1.bf16.msra.mxu0 0
    %1909 = vmatprep.subr.bf16.mxu0 0
    %1910 = vmatpush1.bf16.msra.mxu0 0
    %1911 = vmatprep.subr.bf16.mxu0 0
    %1912 = vmatpush1.bf16.msra.mxu0 0
    %1913 = vmatprep.subr.bf16.mxu0 0
    %1914 = vmatpush1.bf16.msra.mxu0 0
    %1915 = vmatprep.subr.bf16.mxu0 0
    %1916 = vmatpush1.bf16.msra.mxu0 0
    %1917 = vmatprep.subr.bf16.mxu0 0
    %1918 = vmatpush1.bf16.msra.mxu0 0
    %1919 = vmatprep.subr.bf16.mxu0 0
    %1920 = vmatpush1.bf16.msra.mxu0 0
    %1921 = vmatprep.mubr.bf16.mxu0 0
    %1922 = vmatmul.mubr.bf16.gmra.mrb[0].mxu0 %v1731
    %v1923 = vpop.f32.mrb[0].mxu0
    %v1924 = vadd.f32 0.0, %v1923
    %v1925 = vpop.f32.mrb[0].mxu0
    %v1926 = vadd.f32 0.0, %v1925
    %v1927 = vpop.f32.mrb[0].mxu0
    %v1928 = vpop.f32.mrb[0].mxu0
    %1929 = vdwg.mxu0
    %v1934 = vcombine.low %v1883, %v1885
    %v1935 = vcombine.low %v1924, %v1926
    %v1937 = vunpack.c.l.s4 1966171168
    %v1938 = vunpack.c.0.s8 %v1937
    %v1939 = vlaneseq
    %v1940 = vshrl.u32 %v1939, 7
    %v1941 = vsub.s32 %v1938, %v1940
    %v1942 = vrot.slane %v1934, %v1941
    %v1944 = vunpack.c.l.s4 1966171168
    %v1945 = vunpack.c.0.s8 %v1944
    %v1946 = vlaneseq
    %v1947 = vshrl.u32 %v1946, 7
    %v1948 = vsub.s32 %v1945, %v1947
    %v1949 = vrot.slane %v1935, %v1948
    %v1950 = vcombine.low %v1942, %v1949
    %v1952 = vunpack.c.l.s4 1966171168
    %v1953 = vunpack.c.0.s8 %v1952
    %v1954 = vlaneseq
    %v1955 = vshrl.u32 %v1954, 7
    %v1956 = vsub.s32 %v1953, %v1955
    %v1957 = vrot.slane %v1950, %v1956
    %v1959 = vadd.f32 %v1847, %v1957
    %v1960 = vxor.u32 %v1959, 2147483648
    %v1961 = vmul.f32 %v1960, 1.442695
    %v1962 = vpow.pop %v1961
    %v1963 = vadd.f32 %v1962, 1.0
    %v1964 = vrcp.pop %v1963
    %v1965 = vmul.f32 1.0, %v1964
    %v1967 = vrot.slane %v1965, 3
    %v1969 = vmul.f32 %v1967, 2.0
    %v1970 = vsub.f32 %v1969, 1.0
    %v1971 = vrot.slane %v1965, 1
    %v1973 = vmul.f32 %v1971, %v1726
    %v1974 = vmul.f32 %v1965, %v1970
    %v1975 = vadd.f32 %v1973, %v1974
    %v1976 = vtanh.pop %v1975
    %v1977 = vrot.slane %v1965, 2
    %v1979 = vmul.f32 %v1977, %v1976
    %v1980 = vpack.c.bf16 %v1979, %v1979
    %v1981 = vpack.c.bf16 %v1845, %v1845
    %1982 = vmatprep.subr.bf16.mxu0 %v838
    %1983 = vmatpush1.bf16.msra.mxu0 %v837
    %1984 = vmatprep.subr.bf16.mxu0 %v842
    %1985 = vmatpush1.bf16.msra.mxu0 %v841
    %1986 = vmatprep.subr.bf16.mxu0 %v846
    %1987 = vmatpush1.bf16.msra.mxu0 %v845
    %1988 = vmatprep.subr.bf16.mxu0 %v850
    %1989 = vmatpush1.bf16.msra.mxu0 %v849
    %1990 = vmatprep.subr.bf16.mxu0 %v854
    %1991 = vmatpush1.bf16.msra.mxu0 %v853
    %1992 = vmatprep.subr.bf16.mxu0 %v858
    %1993 = vmatpush1.bf16.msra.mxu0 %v857
    %1994 = vmatprep.subr.bf16.mxu0 %v862
    %1995 = vmatpush1.bf16.msra.mxu0 %v861
    %1996 = vmatprep.subr.bf16.mxu0 %v866
    %1997 = vmatpush1.bf16.msra.mxu0 %v865
    %1998 = vmatprep.subr.bf16.mxu0 %v870
    %1999 = vmatpush1.bf16.msra.mxu0 %v869
    %2000 = vmatprep.subr.bf16.mxu0 %v874
    %2001 = vmatpush1.bf16.msra.mxu0 %v873
    %2002 = vmatprep.subr.bf16.mxu0 %v878
    %2003 = vmatpush1.bf16.msra.mxu0 %v877
    %2004 = vmatprep.subr.bf16.mxu0 %v882
    %2005 = vmatpush1.bf16.msra.mxu0 %v881
    %2006 = vmatprep.subr.bf16.mxu0 %v886
    %2007 = vmatpush1.bf16.msra.mxu0 %v885
    %2008 = vmatprep.subr.bf16.mxu0 %v890
    %2009 = vmatpush1.bf16.msra.mxu0 %v889
    %2010 = vmatprep.subr.bf16.mxu0 %v894
    %2011 = vmatpush1.bf16.msra.mxu0 %v893
    %2012 = vmatprep.subr.bf16.mxu0 %v898
    %2013 = vmatpush1.bf16.msra.mxu0 %v897
    %2014 = vmatprep.mubr.bf16.mxu0 %v1981
    %2015 = vmatmul.mubr.bf16.gmra.mrb[0].mxu0 %v1980
    %v2016 = vpop.f32.mrb[0].mxu0
    %v2017 = vadd.f32 %v969, %v2016
    %v2018 = vpop.f32.mrb[0].mxu0
    %v2019 = vadd.f32 %v973, %v2018
    %v2020 = vpop.f32.mrb[0].mxu0
    %v2021 = vpop.f32.mrb[0].mxu0
    %2022 = vdwg.mxu0
    %2023 = vmatprep.subr.bf16.mxu0 %v840
    %2024 = vmatpush1.bf16.msra.mxu0 %v839
    %2025 = vmatprep.subr.bf16.mxu0 %v844
    %2026 = vmatpush1.bf16.msra.mxu0 %v843
    %2027 = vmatprep.subr.bf16.mxu0 %v848
    %2028 = vmatpush1.bf16.msra.mxu0 %v847
    %2029 = vmatprep.subr.bf16.mxu0 %v852
    %2030 = vmatpush1.bf16.msra.mxu0 %v851
    %2031 = vmatprep.subr.bf16.mxu0 %v856
    %2032 = vmatpush1.bf16.msra.mxu0 %v855
    %2033 = vmatprep.subr.bf16.mxu0 %v860
    %2034 = vmatpush1.bf16.msra.mxu0 %v859
    %2035 = vmatprep.subr.bf16.mxu0 %v864
    %2036 = vmatpush1.bf16.msra.mxu0 %v863
    %2037 = vmatprep.subr.bf16.mxu0 %v868
    %2038 = vmatpush1.bf16.msra.mxu0 %v867
    %2039 = vmatprep.subr.bf16.mxu0 %v872
    %2040 = vmatpush1.bf16.msra.mxu0 %v871
    %2041 = vmatprep.subr.bf16.mxu0 %v876
    %2042 = vmatpush1.bf16.msra.mxu0 %v875
    %2043 = vmatprep.subr.bf16.mxu0 %v880
    %2044 = vmatpush1.bf16.msra.mxu0 %v879
    %2045 = vmatprep.subr.bf16.mxu0 %v884
    %2046 = vmatpush1.bf16.msra.mxu0 %v883
    %2047 = vmatprep.subr.bf16.mxu0 %v888
    %2048 = vmatpush1.bf16.msra.mxu0 %v887
    %2049 = vmatprep.subr.bf16.mxu0 %v892
    %2050 = vmatpush1.bf16.msra.mxu0 %v891
    %2051 = vmatprep.subr.bf16.mxu0 %v896
    %2052 = vmatpush1.bf16.msra.mxu0 %v895
    %2053 = vmatprep.subr.bf16.mxu0 %v900
    %2054 = vmatpush1.bf16.msra.mxu0 %v899
    %2055 = vmatprep.mubr.bf16.mxu0 %v1981
    %2056 = vmatmul.mubr.bf16.gmra.mrb[0].mxu0 %v1980
    %v2057 = vpop.f32.mrb[0].mxu0
    %v2058 = vadd.f32 %v977, %v2057
    %v2059 = vpop.f32.mrb[0].mxu0
    %v2060 = vadd.f32 %v981, %v2059
    %v2061 = vpop.f32.mrb[0].mxu0
    %v2062 = vpop.f32.mrb[0].mxu0
    %2063 = vdwg.mxu0
    %v2064 = vxor.u32 %v2017, 2147483648
    %v2065 = vxor.u32 %v2019, 2147483648
    %v2066 = vxor.u32 %v2058, 2147483648
    %v2067 = vxor.u32 %v2060, 2147483648
    %v2068 = vmul.f32 %v2064, 1.442695
    %v2069 = vpow.pop %v2068
    %v2070 = vmul.f32 %v2065, 1.442695
    %v2071 = vpow.pop %v2070
    %v2072 = vmul.f32 %v2066, 1.442695
    %v2073 = vpow.pop %v2072
    %v2074 = vmul.f32 %v2067, 1.442695
    %v2075 = vpow.pop %v2074
    %v2076 = vadd.f32 %v2069, 1.0
    %v2077 = vadd.f32 %v2071, 1.0
    %v2078 = vadd.f32 %v2073, 1.0
    %v2079 = vadd.f32 %v2075, 1.0
    %v2080 = vrcp.pop %v2076
    %v2081 = vmul.f32 1.0, %v2080
    %v2082 = vrcp.pop %v2077
    %v2083 = vmul.f32 1.0, %v2082
    %v2084 = vrcp.pop %v2078
    %v2085 = vmul.f32 1.0, %v2084
    %v2086 = vrcp.pop %v2079
    %v2087 = vmul.f32 1.0, %v2086
    %v2088 = vmul.f32 %v2087, 2.0
    %v2089 = vsub.f32 %v2088, 1.0
    %v2090 = vmul.f32 %v2083, %v1843
    %v2091 = vmul.f32 %v2081, %v2089
    %v2092 = vadd.f32 %v2090, %v2091
    %v2093 = vtanh.pop %v2092
    %v2094 = vmul.f32 %v2085, %v2093
    %s2095 = scalar_lea.vmem [#allocation2], 5
    %v2096 = vld [vmem:[%s2095] ss:$8 sm:$0xf]
    %2097 = vmatprep.subr.bf16.mxu0 %v448
    %2098 = vmatpush1.bf16.msra.mxu0 %v447
    %2099 = vmatprep.subr.bf16.mxu0 %v452
    %2100 = vmatpush1.bf16.msra.mxu0 %v451
    %2101 = vmatprep.subr.bf16.mxu0 %v456
    %2102 = vmatpush1.bf16.msra.mxu0 %v455
    %2103 = vmatprep.subr.bf16.mxu0 %v460
    %2104 = vmatpush1.bf16.msra.mxu0 %v459
    %2105 = vmatprep.subr.bf16.mxu0 %v464
    %2106 = vmatpush1.bf16.msra.mxu0 %v463
    %2107 = vmatprep.subr.bf16.mxu0 %v468
    %2108 = vmatpush1.bf16.msra.mxu0 %v467
    %2109 = vmatprep.subr.bf16.mxu0 %v472
    %2110 = vmatpush1.bf16.msra.mxu0 %v471
    %2111 = vmatprep.subr.bf16.mxu0 %v476
    %2112 = vmatpush1.bf16.msra.mxu0 %v475
    %2113 = vmatprep.subr.bf16.mxu0 0
    %2114 = vmatpush1.bf16.msra.mxu0 0
    %2115 = vmatprep.subr.bf16.mxu0 0
    %2116 = vmatpush1.bf16.msra.mxu0 0
    %2117 = vmatprep.subr.bf16.mxu0 0
    %2118 = vmatpush1.bf16.msra.mxu0 0
    %2119 = vmatprep.subr.bf16.mxu0 0
    %2120 = vmatpush1.bf16.msra.mxu0 0
    %2121 = vmatprep.subr.bf16.mxu0 0
    %2122 = vmatpush1.bf16.msra.mxu0 0
    %2123 = vmatprep.subr.bf16.mxu0 0
    %2124 = vmatpush1.bf16.msra.mxu0 0
    %2125 = vmatprep.subr.bf16.mxu0 0
    %2126 = vmatpush1.bf16.msra.mxu0 0
    %2127 = vmatprep.subr.bf16.mxu0 0
    %2128 = vmatpush1.bf16.msra.mxu0 0
    %2129 = vmatprep.mubr.bf16.mxu0 0
    %2130 = vmatmul.mubr.bf16.gmra.mrb[0].mxu0 %v1980
    %v2131 = vpop.f32.mrb[0].mxu0
    %v2132 = vadd.f32 0.0, %v2131
    %v2133 = vpop.f32.mrb[0].mxu0
    %v2134 = vadd.f32 0.0, %v2133
    %v2135 = vpop.f32.mrb[0].mxu0
    %v2136 = vpop.f32.mrb[0].mxu0
    %2137 = vdwg.mxu0
    %2138 = vmatprep.subr.bf16.mxu0 %v450
    %2139 = vmatpush1.bf16.msra.mxu0 %v449
    %2140 = vmatprep.subr.bf16.mxu0 %v454
    %2141 = vmatpush1.bf16.msra.mxu0 %v453
    %2142 = vmatprep.subr.bf16.mxu0 %v458
    %2143 = vmatpush1.bf16.msra.mxu0 %v457
    %2144 = vmatprep.subr.bf16.mxu0 %v462
    %2145 = vmatpush1.bf16.msra.mxu0 %v461
    %2146 = vmatprep.subr.bf16.mxu0 %v466
    %2147 = vmatpush1.bf16.msra.mxu0 %v465
    %2148 = vmatprep.subr.bf16.mxu0 %v470
    %2149 = vmatpush1.bf16.msra.mxu0 %v469
    %2150 = vmatprep.subr.bf16.mxu0 %v474
    %2151 = vmatpush1.bf16.msra.mxu0 %v473
    %2152 = vmatprep.subr.bf16.mxu0 %v478
    %2153 = vmatpush1.bf16.msra.mxu0 %v477
    %2154 = vmatprep.subr.bf16.mxu0 0
    %2155 = vmatpush1.bf16.msra.mxu0 0
    %2156 = vmatprep.subr.bf16.mxu0 0
    %2157 = vmatpush1.bf16.msra.mxu0 0
    %2158 = vmatprep.subr.bf16.mxu0 0
    %2159 = vmatpush1.bf16.msra.mxu0 0
    %2160 = vmatprep.subr.bf16.mxu0 0
    %2161 = vmatpush1.bf16.msra.mxu0 0
    %2162 = vmatprep.subr.bf16.mxu0 0
    %2163 = vmatpush1.bf16.msra.mxu0 0
    %2164 = vmatprep.subr.bf16.mxu0 0
    %2165 = vmatpush1.bf16.msra.mxu0 0
    %2166 = vmatprep.subr.bf16.mxu0 0
    %2167 = vmatpush1.bf16.msra.mxu0 0
    %2168 = vmatprep.subr.bf16.mxu0 0
    %2169 = vmatpush1.bf16.msra.mxu0 0
    %2170 = vmatprep.mubr.bf16.mxu0 0
    %2171 = vmatmul.mubr.bf16.gmra.mrb[0].mxu0 %v1980
    %v2172 = vpop.f32.mrb[0].mxu0
    %v2173 = vadd.f32 0.0, %v2172
    %v2174 = vpop.f32.mrb[0].mxu0
    %v2175 = vadd.f32 0.0, %v2174
    %v2176 = vpop.f32.mrb[0].mxu0
    %v2177 = vpop.f32.mrb[0].mxu0
    %2178 = vdwg.mxu0
    %v2183 = vcombine.low %v2132, %v2134
    %v2184 = vcombine.low %v2173, %v2175
    %v2186 = vunpack.c.l.s4 1966171168
    %v2187 = vunpack.c.0.s8 %v2186
    %v2188 = vlaneseq
    %v2189 = vshrl.u32 %v2188, 7
    %v2190 = vsub.s32 %v2187, %v2189
    %v2191 = vrot.slane %v2183, %v2190
    %v2193 = vunpack.c.l.s4 1966171168
    %v2194 = vunpack.c.0.s8 %v2193
    %v2195 = vlaneseq
    %v2196 = vshrl.u32 %v2195, 7
    %v2197 = vsub.s32 %v2194, %v2196
    %v2198 = vrot.slane %v2184, %v2197
    %v2199 = vcombine.low %v2191, %v2198
    %v2201 = vunpack.c.l.s4 1966171168
    %v2202 = vunpack.c.0.s8 %v2201
    %v2203 = vlaneseq
    %v2204 = vshrl.u32 %v2203, 7
    %v2205 = vsub.s32 %v2202, %v2204
    %v2206 = vrot.slane %v2199, %v2205
    %v2208 = vadd.f32 %v2096, %v2206
    %v2209 = vxor.u32 %v2208, 2147483648
    %v2210 = vmul.f32 %v2209, 1.442695
    %v2211 = vpow.pop %v2210
    %v2212 = vadd.f32 %v2211, 1.0
    %v2213 = vrcp.pop %v2212
    %v2214 = vmul.f32 1.0, %v2213
    %v2216 = vrot.slane %v2214, 3
    %v2218 = vmul.f32 %v2216, 2.0
    %v2219 = vsub.f32 %v2218, 1.0
    %v2220 = vrot.slane %v2214, 1
    %v2222 = vmul.f32 %v2220, %v1975
    %v2223 = vmul.f32 %v2214, %v2219
    %v2224 = vadd.f32 %v2222, %v2223
    %v2225 = vtanh.pop %v2224
    %v2226 = vrot.slane %v2214, 2
    %v2228 = vmul.f32 %v2226, %v2225
    %v2229 = vpack.c.bf16 %v2228, %v2228
    %v2230 = vpack.c.bf16 %v2094, %v2094
    %2231 = vmatprep.subr.bf16.mxu0 %v838
    %2232 = vmatpush1.bf16.msra.mxu0 %v837
    %2233 = vmatprep.subr.bf16.mxu0 %v842
    %2234 = vmatpush1.bf16.msra.mxu0 %v841
    %2235 = vmatprep.subr.bf16.mxu0 %v846
    %2236 = vmatpush1.bf16.msra.mxu0 %v845
    %2237 = vmatprep.subr.bf16.mxu0 %v850
    %2238 = vmatpush1.bf16.msra.mxu0 %v849
    %2239 = vmatprep.subr.bf16.mxu0 %v854
    %2240 = vmatpush1.bf16.msra.mxu0 %v853
    %2241 = vmatprep.subr.bf16.mxu0 %v858
    %2242 = vmatpush1.bf16.msra.mxu0 %v857
    %2243 = vmatprep.subr.bf16.mxu0 %v862
    %2244 = vmatpush1.bf16.msra.mxu0 %v861
    %2245 = vmatprep.subr.bf16.mxu0 %v866
    %2246 = vmatpush1.bf16.msra.mxu0 %v865
    %2247 = vmatprep.subr.bf16.mxu0 %v870
    %2248 = vmatpush1.bf16.msra.mxu0 %v869
    %2249 = vmatprep.subr.bf16.mxu0 %v874
    %2250 = vmatpush1.bf16.msra.mxu0 %v873
    %2251 = vmatprep.subr.bf16.mxu0 %v878
    %2252 = vmatpush1.bf16.msra.mxu0 %v877
    %2253 = vmatprep.subr.bf16.mxu0 %v882
    %2254 = vmatpush1.bf16.msra.mxu0 %v881
    %2255 = vmatprep.subr.bf16.mxu0 %v886
    %2256 = vmatpush1.bf16.msra.mxu0 %v885
    %2257 = vmatprep.subr.bf16.mxu0 %v890
    %2258 = vmatpush1.bf16.msra.mxu0 %v889
    %2259 = vmatprep.subr.bf16.mxu0 %v894
    %2260 = vmatpush1.bf16.msra.mxu0 %v893
    %2261 = vmatprep.subr.bf16.mxu0 %v898
    %2262 = vmatpush1.bf16.msra.mxu0 %v897
    %2263 = vmatprep.mubr.bf16.mxu0 %v2230
    %2264 = vmatmul.mubr.bf16.gmra.mrb[0].mxu0 %v2229
    %v2265 = vpop.f32.mrb[0].mxu0
    %v2266 = vadd.f32 %v969, %v2265
    %v2267 = vpop.f32.mrb[0].mxu0
    %v2268 = vadd.f32 %v973, %v2267
    %v2269 = vpop.f32.mrb[0].mxu0
    %v2270 = vpop.f32.mrb[0].mxu0
    %2271 = vdwg.mxu0
    %2272 = vmatprep.subr.bf16.mxu0 %v840
    %2273 = vmatpush1.bf16.msra.mxu0 %v839
    %2274 = vmatprep.subr.bf16.mxu0 %v844
    %2275 = vmatpush1.bf16.msra.mxu0 %v843
    %2276 = vmatprep.subr.bf16.mxu0 %v848
    %2277 = vmatpush1.bf16.msra.mxu0 %v847
    %2278 = vmatprep.subr.bf16.mxu0 %v852
    %2279 = vmatpush1.bf16.msra.mxu0 %v851
    %2280 = vmatprep.subr.bf16.mxu0 %v856
    %2281 = vmatpush1.bf16.msra.mxu0 %v855
    %2282 = vmatprep.subr.bf16.mxu0 %v860
    %2283 = vmatpush1.bf16.msra.mxu0 %v859
    %2284 = vmatprep.subr.bf16.mxu0 %v864
    %2285 = vmatpush1.bf16.msra.mxu0 %v863
    %2286 = vmatprep.subr.bf16.mxu0 %v868
    %2287 = vmatpush1.bf16.msra.mxu0 %v867
    %2288 = vmatprep.subr.bf16.mxu0 %v872
    %2289 = vmatpush1.bf16.msra.mxu0 %v871
    %2290 = vmatprep.subr.bf16.mxu0 %v876
    %2291 = vmatpush1.bf16.msra.mxu0 %v875
    %2292 = vmatprep.subr.bf16.mxu0 %v880
    %2293 = vmatpush1.bf16.msra.mxu0 %v879
    %2294 = vmatprep.subr.bf16.mxu0 %v884
    %2295 = vmatpush1.bf16.msra.mxu0 %v883
    %2296 = vmatprep.subr.bf16.mxu0 %v888
    %2297 = vmatpush1.bf16.msra.mxu0 %v887
    %2298 = vmatprep.subr.bf16.mxu0 %v892
    %2299 = vmatpush1.bf16.msra.mxu0 %v891
    %2300 = vmatprep.subr.bf16.mxu0 %v896
    %2301 = vmatpush1.bf16.msra.mxu0 %v895
    %2302 = vmatprep.subr.bf16.mxu0 %v900
    %2303 = vmatpush1.bf16.msra.mxu0 %v899
    %2304 = vmatprep.mubr.bf16.mxu0 %v2230
    %2305 = vmatmul.mubr.bf16.gmra.mrb[0].mxu0 %v2229
    %v2306 = vpop.f32.mrb[0].mxu0
    %v2307 = vadd.f32 %v977, %v2306
    %v2308 = vpop.f32.mrb[0].mxu0
    %v2309 = vadd.f32 %v981, %v2308
    %v2310 = vpop.f32.mrb[0].mxu0
    %v2311 = vpop.f32.mrb[0].mxu0
    %2312 = vdwg.mxu0
    %v2313 = vxor.u32 %v2266, 2147483648
    %v2314 = vxor.u32 %v2268, 2147483648
    %v2315 = vxor.u32 %v2307, 2147483648
    %v2316 = vxor.u32 %v2309, 2147483648
    %v2317 = vmul.f32 %v2313, 1.442695
    %v2318 = vpow.pop %v2317
    %v2319 = vmul.f32 %v2314, 1.442695
    %v2320 = vpow.pop %v2319
    %v2321 = vmul.f32 %v2315, 1.442695
    %v2322 = vpow.pop %v2321
    %v2323 = vmul.f32 %v2316, 1.442695
    %v2324 = vpow.pop %v2323
    %v2325 = vadd.f32 %v2318, 1.0
    %v2326 = vadd.f32 %v2320, 1.0
    %v2327 = vadd.f32 %v2322, 1.0
    %v2328 = vadd.f32 %v2324, 1.0
    %v2329 = vrcp.pop %v2325
    %v2330 = vmul.f32 1.0, %v2329
    %v2331 = vrcp.pop %v2326
    %v2332 = vmul.f32 1.0, %v2331
    %v2333 = vrcp.pop %v2327
    %v2334 = vmul.f32 1.0, %v2333
    %v2335 = vrcp.pop %v2328
    %v2336 = vmul.f32 1.0, %v2335
    %v2337 = vmul.f32 %v2336, 2.0
    %v2338 = vsub.f32 %v2337, 1.0
    %v2339 = vmul.f32 %v2332, %v2092
    %v2340 = vmul.f32 %v2330, %v2338
    %v2341 = vadd.f32 %v2339, %v2340
    %v2342 = vtanh.pop %v2341
    %v2343 = vmul.f32 %v2334, %v2342
    %s2344 = scalar_lea.vmem [#allocation2], 6
    %v2345 = vld [vmem:[%s2344] ss:$8 sm:$0xf]
    %2346 = vmatprep.subr.bf16.mxu0 %v448
    %2347 = vmatpush1.bf16.msra.mxu0 %v447
    %2348 = vmatprep.subr.bf16.mxu0 %v452
    %2349 = vmatpush1.bf16.msra.mxu0 %v451
    %2350 = vmatprep.subr.bf16.mxu0 %v456
    %2351 = vmatpush1.bf16.msra.mxu0 %v455
    %2352 = vmatprep.subr.bf16.mxu0 %v460
    %2353 = vmatpush1.bf16.msra.mxu0 %v459
    %2354 = vmatprep.subr.bf16.mxu0 %v464
    %2355 = vmatpush1.bf16.msra.mxu0 %v463
    %2356 = vmatprep.subr.bf16.mxu0 %v468
    %2357 = vmatpush1.bf16.msra.mxu0 %v467
    %2358 = vmatprep.subr.bf16.mxu0 %v472
    %2359 = vmatpush1.bf16.msra.mxu0 %v471
    %2360 = vmatprep.subr.bf16.mxu0 %v476
    %2361 = vmatpush1.bf16.msra.mxu0 %v475
    %2362 = vmatprep.subr.bf16.mxu0 0
    %2363 = vmatpush1.bf16.msra.mxu0 0
    %2364 = vmatprep.subr.bf16.mxu0 0
    %2365 = vmatpush1.bf16.msra.mxu0 0
    %2366 = vmatprep.subr.bf16.mxu0 0
    %2367 = vmatpush1.bf16.msra.mxu0 0
    %2368 = vmatprep.subr.bf16.mxu0 0
    %2369 = vmatpush1.bf16.msra.mxu0 0
    %2370 = vmatprep.subr.bf16.mxu0 0
    %2371 = vmatpush1.bf16.msra.mxu0 0
    %2372 = vmatprep.subr.bf16.mxu0 0
    %2373 = vmatpush1.bf16.msra.mxu0 0
    %2374 = vmatprep.subr.bf16.mxu0 0
    %2375 = vmatpush1.bf16.msra.mxu0 0
    %2376 = vmatprep.subr.bf16.mxu0 0
    %2377 = vmatpush1.bf16.msra.mxu0 0
    %2378 = vmatprep.mubr.bf16.mxu0 0
    %2379 = vmatmul.mubr.bf16.gmra.mrb[0].mxu0 %v2229
    %v2380 = vpop.f32.mrb[0].mxu0
    %v2381 = vadd.f32 0.0, %v2380
    %v2382 = vpop.f32.mrb[0].mxu0
    %v2383 = vadd.f32 0.0, %v2382
    %v2384 = vpop.f32.mrb[0].mxu0
    %v2385 = vpop.f32.mrb[0].mxu0
    %2386 = vdwg.mxu0
    %2387 = vmatprep.subr.bf16.mxu0 %v450
    %2388 = vmatpush1.bf16.msra.mxu0 %v449
    %2389 = vmatprep.subr.bf16.mxu0 %v454
    %2390 = vmatpush1.bf16.msra.mxu0 %v453
    %2391 = vmatprep.subr.bf16.mxu0 %v458
    %2392 = vmatpush1.bf16.msra.mxu0 %v457
    %2393 = vmatprep.subr.bf16.mxu0 %v462
    %2394 = vmatpush1.bf16.msra.mxu0 %v461
    %2395 = vmatprep.subr.bf16.mxu0 %v466
    %2396 = vmatpush1.bf16.msra.mxu0 %v465
    %2397 = vmatprep.subr.bf16.mxu0 %v470
    %2398 = vmatpush1.bf16.msra.mxu0 %v469
    %2399 = vmatprep.subr.bf16.mxu0 %v474
    %2400 = vmatpush1.bf16.msra.mxu0 %v473
    %2401 = vmatprep.subr.bf16.mxu0 %v478
    %2402 = vmatpush1.bf16.msra.mxu0 %v477
    %2403 = vmatprep.subr.bf16.mxu0 0
    %2404 = vmatpush1.bf16.msra.mxu0 0
    %2405 = vmatprep.subr.bf16.mxu0 0
    %2406 = vmatpush1.bf16.msra.mxu0 0
    %2407 = vmatprep.subr.bf16.mxu0 0
    %2408 = vmatpush1.bf16.msra.mxu0 0
    %2409 = vmatprep.subr.bf16.mxu0 0
    %2410 = vmatpush1.bf16.msra.mxu0 0
    %2411 = vmatprep.subr.bf16.mxu0 0
    %2412 = vmatpush1.bf16.msra.mxu0 0
    %2413 = vmatprep.subr.bf16.mxu0 0
    %2414 = vmatpush1.bf16.msra.mxu0 0
    %2415 = vmatprep.subr.bf16.mxu0 0
    %2416 = vmatpush1.bf16.msra.mxu0 0
    %2417 = vmatprep.subr.bf16.mxu0 0
    %2418 = vmatpush1.bf16.msra.mxu0 0
    %2419 = vmatprep.mubr.bf16.mxu0 0
    %2420 = vmatmul.mubr.bf16.gmra.mrb[0].mxu0 %v2229
    %v2421 = vpop.f32.mrb[0].mxu0
    %v2422 = vadd.f32 0.0, %v2421
    %v2423 = vpop.f32.mrb[0].mxu0
    %v2424 = vadd.f32 0.0, %v2423
    %v2425 = vpop.f32.mrb[0].mxu0
    %v2426 = vpop.f32.mrb[0].mxu0
    %2427 = vdwg.mxu0
    %v2432 = vcombine.low %v2381, %v2383
    %v2433 = vcombine.low %v2422, %v2424
    %v2435 = vunpack.c.l.s4 1966171168
    %v2436 = vunpack.c.0.s8 %v2435
    %v2437 = vlaneseq
    %v2438 = vshrl.u32 %v2437, 7
    %v2439 = vsub.s32 %v2436, %v2438
    %v2440 = vrot.slane %v2432, %v2439
    %v2442 = vunpack.c.l.s4 1966171168
    %v2443 = vunpack.c.0.s8 %v2442
    %v2444 = vlaneseq
    %v2445 = vshrl.u32 %v2444, 7
    %v2446 = vsub.s32 %v2443, %v2445
    %v2447 = vrot.slane %v2433, %v2446
    %v2448 = vcombine.low %v2440, %v2447
    %v2450 = vunpack.c.l.s4 1966171168
    %v2451 = vunpack.c.0.s8 %v2450
    %v2452 = vlaneseq
    %v2453 = vshrl.u32 %v2452, 7
    %v2454 = vsub.s32 %v2451, %v2453
    %v2455 = vrot.slane %v2448, %v2454
    %v2457 = vadd.f32 %v2345, %v2455
    %v2458 = vxor.u32 %v2457, 2147483648
    %v2459 = vmul.f32 %v2458, 1.442695
    %v2460 = vpow.pop %v2459
    %v2461 = vadd.f32 %v2460, 1.0
    %v2462 = vrcp.pop %v2461
    %v2463 = vmul.f32 1.0, %v2462
    %v2465 = vrot.slane %v2463, 3
    %v2467 = vmul.f32 %v2465, 2.0
    %v2468 = vsub.f32 %v2467, 1.0
    %v2469 = vrot.slane %v2463, 1
    %v2471 = vmul.f32 %v2469, %v2224
    %v2472 = vmul.f32 %v2463, %v2468
    %v2473 = vadd.f32 %v2471, %v2472
    %v2474 = vtanh.pop %v2473
    %v2475 = vrot.slane %v2463, 2
    %v2477 = vmul.f32 %v2475, %v2474
    %v2478 = vpack.c.bf16 %v2477, %v2477
    %v2479 = vpack.c.bf16 %v2343, %v2343
    %2480 = vmatprep.subr.bf16.mxu0 %v838
    %2481 = vmatpush1.bf16.msra.mxu0 %v837
    %2482 = vmatprep.subr.bf16.mxu0 %v842
    %2483 = vmatpush1.bf16.msra.mxu0 %v841
    %2484 = vmatprep.subr.bf16.mxu0 %v846
    %2485 = vmatpush1.bf16.msra.mxu0 %v845
    %2486 = vmatprep.subr.bf16.mxu0 %v850
    %2487 = vmatpush1.bf16.msra.mxu0 %v849
    %2488 = vmatprep.subr.bf16.mxu0 %v854
    %2489 = vmatpush1.bf16.msra.mxu0 %v853
    %2490 = vmatprep.subr.bf16.mxu0 %v858
    %2491 = vmatpush1.bf16.msra.mxu0 %v857
    %2492 = vmatprep.subr.bf16.mxu0 %v862
    %2493 = vmatpush1.bf16.msra.mxu0 %v861
    %2494 = vmatprep.subr.bf16.mxu0 %v866
    %2495 = vmatpush1.bf16.msra.mxu0 %v865
    %2496 = vmatprep.subr.bf16.mxu0 %v870
    %2497 = vmatpush1.bf16.msra.mxu0 %v869
    %2498 = vmatprep.subr.bf16.mxu0 %v874
    %2499 = vmatpush1.bf16.msra.mxu0 %v873
    %2500 = vmatprep.subr.bf16.mxu0 %v878
    %2501 = vmatpush1.bf16.msra.mxu0 %v877
    %2502 = vmatprep.subr.bf16.mxu0 %v882
    %2503 = vmatpush1.bf16.msra.mxu0 %v881
    %2504 = vmatprep.subr.bf16.mxu0 %v886
    %2505 = vmatpush1.bf16.msra.mxu0 %v885
    %2506 = vmatprep.subr.bf16.mxu0 %v890
    %2507 = vmatpush1.bf16.msra.mxu0 %v889
    %2508 = vmatprep.subr.bf16.mxu0 %v894
    %2509 = vmatpush1.bf16.msra.mxu0 %v893
    %2510 = vmatprep.subr.bf16.mxu0 %v898
    %2511 = vmatpush1.bf16.msra.mxu0 %v897
    %2512 = vmatprep.mubr.bf16.mxu0 %v2479
    %2513 = vmatmul.mubr.bf16.gmra.mrb[0].mxu0 %v2478
    %v2514 = vpop.f32.mrb[0].mxu0
    %v2515 = vadd.f32 %v969, %v2514
    %v2516 = vpop.f32.mrb[0].mxu0
    %v2517 = vadd.f32 %v973, %v2516
    %v2518 = vpop.f32.mrb[0].mxu0
    %v2519 = vpop.f32.mrb[0].mxu0
    %2520 = vdwg.mxu0
    %2521 = vmatprep.subr.bf16.mxu0 %v840
    %2522 = vmatpush1.bf16.msra.mxu0 %v839
    %2523 = vmatprep.subr.bf16.mxu0 %v844
    %2524 = vmatpush1.bf16.msra.mxu0 %v843
    %2525 = vmatprep.subr.bf16.mxu0 %v848
    %2526 = vmatpush1.bf16.msra.mxu0 %v847
    %2527 = vmatprep.subr.bf16.mxu0 %v852
    %2528 = vmatpush1.bf16.msra.mxu0 %v851
    %2529 = vmatprep.subr.bf16.mxu0 %v856
    %2530 = vmatpush1.bf16.msra.mxu0 %v855
    %2531 = vmatprep.subr.bf16.mxu0 %v860
    %2532 = vmatpush1.bf16.msra.mxu0 %v859
    %2533 = vmatprep.subr.bf16.mxu0 %v864
    %2534 = vmatpush1.bf16.msra.mxu0 %v863
    %2535 = vmatprep.subr.bf16.mxu0 %v868
    %2536 = vmatpush1.bf16.msra.mxu0 %v867
    %2537 = vmatprep.subr.bf16.mxu0 %v872
    %2538 = vmatpush1.bf16.msra.mxu0 %v871
    %2539 = vmatprep.subr.bf16.mxu0 %v876
    %2540 = vmatpush1.bf16.msra.mxu0 %v875
    %2541 = vmatprep.subr.bf16.mxu0 %v880
    %2542 = vmatpush1.bf16.msra.mxu0 %v879
    %2543 = vmatprep.subr.bf16.mxu0 %v884
    %2544 = vmatpush1.bf16.msra.mxu0 %v883
    %2545 = vmatprep.subr.bf16.mxu0 %v888
    %2546 = vmatpush1.bf16.msra.mxu0 %v887
    %2547 = vmatprep.subr.bf16.mxu0 %v892
    %2548 = vmatpush1.bf16.msra.mxu0 %v891
    %2549 = vmatprep.subr.bf16.mxu0 %v896
    %2550 = vmatpush1.bf16.msra.mxu0 %v895
    %2551 = vmatprep.subr.bf16.mxu0 %v900
    %2552 = vmatpush1.bf16.msra.mxu0 %v899
    %2553 = vmatprep.mubr.bf16.mxu0 %v2479
    %2554 = vmatmul.mubr.bf16.gmra.mrb[0].mxu0 %v2478
    %v2555 = vpop.f32.mrb[0].mxu0
    %v2556 = vadd.f32 %v977, %v2555
    %v2557 = vpop.f32.mrb[0].mxu0
    %v2558 = vadd.f32 %v981, %v2557
    %v2559 = vpop.f32.mrb[0].mxu0
    %v2560 = vpop.f32.mrb[0].mxu0
    %2561 = vdwg.mxu0
    %v2562 = vxor.u32 %v2515, 2147483648
    %v2563 = vxor.u32 %v2517, 2147483648
    %v2564 = vxor.u32 %v2556, 2147483648
    %v2565 = vxor.u32 %v2558, 2147483648
    %v2566 = vmul.f32 %v2562, 1.442695
    %v2567 = vpow.pop %v2566
    %v2568 = vmul.f32 %v2563, 1.442695
    %v2569 = vpow.pop %v2568
    %v2570 = vmul.f32 %v2564, 1.442695
    %v2571 = vpow.pop %v2570
    %v2572 = vmul.f32 %v2565, 1.442695
    %v2573 = vpow.pop %v2572
    %v2574 = vadd.f32 %v2567, 1.0
    %v2575 = vadd.f32 %v2569, 1.0
    %v2576 = vadd.f32 %v2571, 1.0
    %v2577 = vadd.f32 %v2573, 1.0
    %v2578 = vrcp.pop %v2574
    %v2579 = vmul.f32 1.0, %v2578
    %v2580 = vrcp.pop %v2575
    %v2581 = vmul.f32 1.0, %v2580
    %v2582 = vrcp.pop %v2576
    %v2583 = vmul.f32 1.0, %v2582
    %v2584 = vrcp.pop %v2577
    %v2585 = vmul.f32 1.0, %v2584
    %v2586 = vmul.f32 %v2585, 2.0
    %v2587 = vsub.f32 %v2586, 1.0
    %v2588 = vmul.f32 %v2581, %v2341
    %v2589 = vmul.f32 %v2579, %v2587
    %v2590 = vadd.f32 %v2588, %v2589
    %v2591 = vtanh.pop %v2590
    %v2592 = vmul.f32 %v2583, %v2591
    %s2593 = scalar_lea.vmem [#allocation2], 7
    %v2594 = vld [vmem:[%s2593] ss:$8 sm:$0xf]
    %2595 = vmatprep.subr.bf16.mxu0 %v448
    %2596 = vmatpush1.bf16.msra.mxu0 %v447
    %2597 = vmatprep.subr.bf16.mxu0 %v452
    %2598 = vmatpush1.bf16.msra.mxu0 %v451
    %2599 = vmatprep.subr.bf16.mxu0 %v456
    %2600 = vmatpush1.bf16.msra.mxu0 %v455
    %2601 = vmatprep.subr.bf16.mxu0 %v460
    %2602 = vmatpush1.bf16.msra.mxu0 %v459
    %2603 = vmatprep.subr.bf16.mxu0 %v464
    %2604 = vmatpush1.bf16.msra.mxu0 %v463
    %2605 = vmatprep.subr.bf16.mxu0 %v468
    %2606 = vmatpush1.bf16.msra.mxu0 %v467
    %2607 = vmatprep.subr.bf16.mxu0 %v472
    %2608 = vmatpush1.bf16.msra.mxu0 %v471
    %2609 = vmatprep.subr.bf16.mxu0 %v476
    %2610 = vmatpush1.bf16.msra.mxu0 %v475
    %2611 = vmatprep.subr.bf16.mxu0 0
    %2612 = vmatpush1.bf16.msra.mxu0 0
    %2613 = vmatprep.subr.bf16.mxu0 0
    %2614 = vmatpush1.bf16.msra.mxu0 0
    %2615 = vmatprep.subr.bf16.mxu0 0
    %2616 = vmatpush1.bf16.msra.mxu0 0
    %2617 = vmatprep.subr.bf16.mxu0 0
    %2618 = vmatpush1.bf16.msra.mxu0 0
    %2619 = vmatprep.subr.bf16.mxu0 0
    %2620 = vmatpush1.bf16.msra.mxu0 0
    %2621 = vmatprep.subr.bf16.mxu0 0
    %2622 = vmatpush1.bf16.msra.mxu0 0
    %2623 = vmatprep.subr.bf16.mxu0 0
    %2624 = vmatpush1.bf16.msra.mxu0 0
    %2625 = vmatprep.subr.bf16.mxu0 0
    %2626 = vmatpush1.bf16.msra.mxu0 0
    %2627 = vmatprep.mubr.bf16.mxu0 0
    %2628 = vmatmul.mubr.bf16.gmra.mrb[0].mxu0 %v2478
    %v2629 = vpop.f32.mrb[0].mxu0
    %v2630 = vadd.f32 0.0, %v2629
    %v2631 = vpop.f32.mrb[0].mxu0
    %v2632 = vadd.f32 0.0, %v2631
    %v2633 = vpop.f32.mrb[0].mxu0
    %v2634 = vpop.f32.mrb[0].mxu0
    %2635 = vdwg.mxu0
    %2636 = vmatprep.subr.bf16.mxu0 %v450
    %2637 = vmatpush1.bf16.msra.mxu0 %v449
    %2638 = vmatprep.subr.bf16.mxu0 %v454
    %2639 = vmatpush1.bf16.msra.mxu0 %v453
    %2640 = vmatprep.subr.bf16.mxu0 %v458
    %2641 = vmatpush1.bf16.msra.mxu0 %v457
    %2642 = vmatprep.subr.bf16.mxu0 %v462
    %2643 = vmatpush1.bf16.msra.mxu0 %v461
    %2644 = vmatprep.subr.bf16.mxu0 %v466
    %2645 = vmatpush1.bf16.msra.mxu0 %v465
    %2646 = vmatprep.subr.bf16.mxu0 %v470
    %2647 = vmatpush1.bf16.msra.mxu0 %v469
    %2648 = vmatprep.subr.bf16.mxu0 %v474
    %2649 = vmatpush1.bf16.msra.mxu0 %v473
    %2650 = vmatprep.subr.bf16.mxu0 %v478
    %2651 = vmatpush1.bf16.msra.mxu0 %v477
    %2652 = vmatprep.subr.bf16.mxu0 0
    %2653 = vmatpush1.bf16.msra.mxu0 0
    %2654 = vmatprep.subr.bf16.mxu0 0
    %2655 = vmatpush1.bf16.msra.mxu0 0
    %2656 = vmatprep.subr.bf16.mxu0 0
    %2657 = vmatpush1.bf16.msra.mxu0 0
    %2658 = vmatprep.subr.bf16.mxu0 0
    %2659 = vmatpush1.bf16.msra.mxu0 0
    %2660 = vmatprep.subr.bf16.mxu0 0
    %2661 = vmatpush1.bf16.msra.mxu0 0
    %2662 = vmatprep.subr.bf16.mxu0 0
    %2663 = vmatpush1.bf16.msra.mxu0 0
    %2664 = vmatprep.subr.bf16.mxu0 0
    %2665 = vmatpush1.bf16.msra.mxu0 0
    %2666 = vmatprep.subr.bf16.mxu0 0
    %2667 = vmatpush1.bf16.msra.mxu0 0
    %2668 = vmatprep.mubr.bf16.mxu0 0
    %2669 = vmatmul.mubr.bf16.gmra.mrb[0].mxu0 %v2478
    %v2670 = vpop.f32.mrb[0].mxu0
    %v2671 = vadd.f32 0.0, %v2670
    %v2672 = vpop.f32.mrb[0].mxu0
    %v2673 = vadd.f32 0.0, %v2672
    %v2674 = vpop.f32.mrb[0].mxu0
    %v2675 = vpop.f32.mrb[0].mxu0
    %2676 = vdwg.mxu0
    %v2681 = vcombine.low %v2630, %v2632
    %v2682 = vcombine.low %v2671, %v2673
    %v2684 = vunpack.c.l.s4 1966171168
    %v2685 = vunpack.c.0.s8 %v2684
    %v2686 = vlaneseq
    %v2687 = vshrl.u32 %v2686, 7
    %v2688 = vsub.s32 %v2685, %v2687
    %v2689 = vrot.slane %v2681, %v2688
    %v2691 = vunpack.c.l.s4 1966171168
    %v2692 = vunpack.c.0.s8 %v2691
    %v2693 = vlaneseq
    %v2694 = vshrl.u32 %v2693, 7
    %v2695 = vsub.s32 %v2692, %v2694
    %v2696 = vrot.slane %v2682, %v2695
    %v2697 = vcombine.low %v2689, %v2696
    %v2699 = vunpack.c.l.s4 1966171168
    %v2700 = vunpack.c.0.s8 %v2699
    %v2701 = vlaneseq
    %v2702 = vshrl.u32 %v2701, 7
    %v2703 = vsub.s32 %v2700, %v2702
    %v2704 = vrot.slane %v2697, %v2703
    %v2706 = vadd.f32 %v2594, %v2704
    %v2707 = vxor.u32 %v2706, 2147483648
    %v2708 = vmul.f32 %v2707, 1.442695
    %v2709 = vpow.pop %v2708
    %v2710 = vadd.f32 %v2709, 1.0
    %v2711 = vrcp.pop %v2710
    %v2712 = vmul.f32 1.0, %v2711
    %v2714 = vrot.slane %v2712, 3
    %v2716 = vmul.f32 %v2714, 2.0
    %v2717 = vsub.f32 %v2716, 1.0
    %v2718 = vrot.slane %v2712, 1
    %v2720 = vmul.f32 %v2718, %v2473
    %v2721 = vmul.f32 %v2712, %v2717
    %v2722 = vadd.f32 %v2720, %v2721
    %v2723 = vtanh.pop %v2722
    %v2724 = vrot.slane %v2712, 2
    %v2726 = vmul.f32 %v2724, %v2723
    %v2727 = vpack.c.bf16 %v2726, %v2726
    %v2728 = vpack.c.bf16 %v2592, %v2592
    %2729 = vmatprep.subr.bf16.mxu0 %v838
    %2730 = vmatpush1.bf16.msra.mxu0 %v837
    %2731 = vmatprep.subr.bf16.mxu0 %v842
    %2732 = vmatpush1.bf16.msra.mxu0 %v841
    %2733 = vmatprep.subr.bf16.mxu0 %v846
    %2734 = vmatpush1.bf16.msra.mxu0 %v845
    %2735 = vmatprep.subr.bf16.mxu0 %v850
    %2736 = vmatpush1.bf16.msra.mxu0 %v849
    %2737 = vmatprep.subr.bf16.mxu0 %v854
    %2738 = vmatpush1.bf16.msra.mxu0 %v853
    %2739 = vmatprep.subr.bf16.mxu0 %v858
    %2740 = vmatpush1.bf16.msra.mxu0 %v857
    %2741 = vmatprep.subr.bf16.mxu0 %v862
    %2742 = vmatpush1.bf16.msra.mxu0 %v861
    %2743 = vmatprep.subr.bf16.mxu0 %v866
    %2744 = vmatpush1.bf16.msra.mxu0 %v865
    %2745 = vmatprep.subr.bf16.mxu0 %v870
    %2746 = vmatpush1.bf16.msra.mxu0 %v869
    %2747 = vmatprep.subr.bf16.mxu0 %v874
    %2748 = vmatpush1.bf16.msra.mxu0 %v873
    %2749 = vmatprep.subr.bf16.mxu0 %v878
    %2750 = vmatpush1.bf16.msra.mxu0 %v877
    %2751 = vmatprep.subr.bf16.mxu0 %v882
    %2752 = vmatpush1.bf16.msra.mxu0 %v881
    %2753 = vmatprep.subr.bf16.mxu0 %v886
    %2754 = vmatpush1.bf16.msra.mxu0 %v885
    %2755 = vmatprep.subr.bf16.mxu0 %v890
    %2756 = vmatpush1.bf16.msra.mxu0 %v889
    %2757 = vmatprep.subr.bf16.mxu0 %v894
    %2758 = vmatpush1.bf16.msra.mxu0 %v893
    %2759 = vmatprep.subr.bf16.mxu0 %v898
    %2760 = vmatpush1.bf16.msra.mxu0 %v897
    %2761 = vmatprep.mubr.bf16.mxu0 %v2728
    %2762 = vmatmul.mubr.bf16.gmra.mrb[0].mxu0 %v2727
    %v2763 = vpop.f32.mrb[0].mxu0
    %v2764 = vadd.f32 %v969, %v2763
    %v2765 = vpop.f32.mrb[0].mxu0
    %v2766 = vadd.f32 %v973, %v2765
    %v2767 = vpop.f32.mrb[0].mxu0
    %v2768 = vpop.f32.mrb[0].mxu0
    %2769 = vdwg.mxu0
    %2770 = vmatprep.subr.bf16.mxu0 %v840
    %2771 = vmatpush1.bf16.msra.mxu0 %v839
    %2772 = vmatprep.subr.bf16.mxu0 %v844
    %2773 = vmatpush1.bf16.msra.mxu0 %v843
    %2774 = vmatprep.subr.bf16.mxu0 %v848
    %2775 = vmatpush1.bf16.msra.mxu0 %v847
    %2776 = vmatprep.subr.bf16.mxu0 %v852
    %2777 = vmatpush1.bf16.msra.mxu0 %v851
    %2778 = vmatprep.subr.bf16.mxu0 %v856
    %2779 = vmatpush1.bf16.msra.mxu0 %v855
    %2780 = vmatprep.subr.bf16.mxu0 %v860
    %2781 = vmatpush1.bf16.msra.mxu0 %v859
    %2782 = vmatprep.subr.bf16.mxu0 %v864
    %2783 = vmatpush1.bf16.msra.mxu0 %v863
    %2784 = vmatprep.subr.bf16.mxu0 %v868
    %2785 = vmatpush1.bf16.msra.mxu0 %v867
    %2786 = vmatprep.subr.bf16.mxu0 %v872
    %2787 = vmatpush1.bf16.msra.mxu0 %v871
    %2788 = vmatprep.subr.bf16.mxu0 %v876
    %2789 = vmatpush1.bf16.msra.mxu0 %v875
    %2790 = vmatprep.subr.bf16.mxu0 %v880
    %2791 = vmatpush1.bf16.msra.mxu0 %v879
    %2792 = vmatprep.subr.bf16.mxu0 %v884
    %2793 = vmatpush1.bf16.msra.mxu0 %v883
    %2794 = vmatprep.subr.bf16.mxu0 %v888
    %2795 = vmatpush1.bf16.msra.mxu0 %v887
    %2796 = vmatprep.subr.bf16.mxu0 %v892
    %2797 = vmatpush1.bf16.msra.mxu0 %v891
    %2798 = vmatprep.subr.bf16.mxu0 %v896
    %2799 = vmatpush1.bf16.msra.mxu0 %v895
    %2800 = vmatprep.subr.bf16.mxu0 %v900
    %2801 = vmatpush1.bf16.msra.mxu0 %v899
    %2802 = vmatprep.mubr.bf16.mxu0 %v2728
    %2803 = vmatmul.mubr.bf16.gmra.mrb[0].mxu0 %v2727
    %v2804 = vpop.f32.mrb[0].mxu0
    %v2805 = vadd.f32 %v977, %v2804
    %v2806 = vpop.f32.mrb[0].mxu0
    %v2807 = vadd.f32 %v981, %v2806
    %v2808 = vpop.f32.mrb[0].mxu0
    %v2809 = vpop.f32.mrb[0].mxu0
    %2810 = vdwg.mxu0
    %v2811 = vxor.u32 %v2764, 2147483648
    %v2812 = vxor.u32 %v2766, 2147483648
    %v2813 = vxor.u32 %v2805, 2147483648
    %v2814 = vxor.u32 %v2807, 2147483648
    %v2815 = vmul.f32 %v2811, 1.442695
    %v2816 = vpow.pop %v2815
    %v2817 = vmul.f32 %v2812, 1.442695
    %v2818 = vpow.pop %v2817
    %v2819 = vmul.f32 %v2813, 1.442695
    %v2820 = vpow.pop %v2819
    %v2821 = vmul.f32 %v2814, 1.442695
    %v2822 = vpow.pop %v2821
    %v2823 = vadd.f32 %v2816, 1.0
    %v2824 = vadd.f32 %v2818, 1.0
    %v2825 = vadd.f32 %v2820, 1.0
    %v2826 = vadd.f32 %v2822, 1.0
    %v2827 = vrcp.pop %v2823
    %v2828 = vmul.f32 1.0, %v2827
    %v2829 = vrcp.pop %v2824
    %v2830 = vmul.f32 1.0, %v2829
    %v2831 = vrcp.pop %v2825
    %v2832 = vmul.f32 1.0, %v2831
    %v2833 = vrcp.pop %v2826
    %v2834 = vmul.f32 1.0, %v2833
    %v2835 = vmul.f32 %v2834, 2.0
    %v2836 = vsub.f32 %v2835, 1.0
    %v2837 = vmul.f32 %v2830, %v2590
    %v2838 = vmul.f32 %v2828, %v2836
    %v2839 = vadd.f32 %v2837, %v2838
    %v2840 = vtanh.pop %v2839
    %v2841 = vmul.f32 %v2832, %v2840
    %v2842 = vld [vmem:[%s6] sm:$0x1]
    %v2843 = vmul.f32 %v2841, %v2842
    %vm2844 = vcmask 1040384
    %v2845 = vsel %vm2844, %v2843, 0.0
    %2846 = vadd.xlane.f32.xlu0 %v2845
    %v2847 = vpop.xlane.xlu0 %2846
    %v2848 = vld [vmem:[#allocation3] sm:$0x1]
    %v2849 = vadd.f32 %v2847, %v2848
    %vm2850 = vcmask 0
    %2851 = vst.msk [vmem:[#allocation9] sm:$0x1] %vm2850, %v2849
    %vm2852 = vcmask 253952
    %2853 = vst.msk [vmem:[#allocation10] sm:$0x1] %vm2852, %v2841
    %2854 = vst.msk [vmem:[#allocation12] sm:$0x1] %vm2852, %v2722
    %2855 = vst.msk [vmem:[#allocation12 + $0x1] sm:$0x1] %vm2852, %v2839
    // Predicated region
    $region42: #{lstm_forward.1} parent=1 // pred_check
      _
    $region43: #{lstm_forward.1} parent=1 // pred_check_branch
      %2857 = sbr.rel (0) target = $region45
    $region44: #{lstm_forward.1} parent=1 // pred_region
      %s2859 = ssub.s32 16, 16
      %2860 = vsyncadd [#allocation6], %s2859
      %s2862 = sshll.u32 [#allocation9], 4
      %s2863 = int_to_ptr.vmem [resolvable:$true] %s2862
      %2865 = dma.vmem_to_hbm [thread:$0]  %s2863, 16, %s8, [#allocation6]
    $region45: #{lstm_forward.1} parent=1 // pred_fallthru
      _
    // Predicated region
    $region46: #{lstm_forward.1} parent=1 // pred_check
      _
    $region47: #{lstm_forward.1} parent=1 // pred_check_branch
      %2867 = sbr.rel (0) target = $region49
    $region48: #{lstm_forward.1} parent=1 // pred_region
      %s2869 = ssub.s32 16, 16
      %2870 = vsyncadd [#allocation11], %s2869
      %s2872 = sshll.u32 [#allocation10], 4
      %s2873 = int_to_ptr.vmem [resolvable:$true] %s2872
      %2875 = dma.vmem_to_hbm [thread:$0]  %s2873, 16, %s9, [#allocation11]
    $region49: #{lstm_forward.1} parent=1 // pred_fallthru
      _
    // Predicated region
    $region50: #{lstm_forward.1} parent=1 // pred_check
      _
    $region51: #{lstm_forward.1} parent=1 // pred_check_branch
      %2877 = sbr.rel (0) target = $region53
    $region52: #{lstm_forward.1} parent=1 // pred_region
      %s2879 = ssub.s32 32, 32
      %2880 = vsyncadd [#allocation11], %s2879
      %s2882 = sshll.u32 [#allocation12], 4
      %s2883 = int_to_ptr.vmem [resolvable:$true] %s2882
      %2885 = dma.vmem_to_hbm [thread:$0]  %s2883, 32, %s10, [#allocation11]
    $region53: #{lstm_forward.1} parent=1 // pred_fallthru
      _
    // Predicated region
    $region54: #{lstm_forward.1} parent=1 // pred_check
      _
    $region55: #{lstm_forward.1} parent=1 // pred_check_branch
      %2887 = sbr.rel (0) target = $region57
    $region56: #{lstm_forward.1} parent=1 // pred_region
      %2888 = dma.done [#allocation6], 16
    $region57: #{lstm_forward.1} parent=1 // pred_fallthru
      _
    // Predicated region
    $region58: #{lstm_forward.1} parent=1 // pred_check
      _
    $region59: #{lstm_forward.1} parent=1 // pred_check_branch
      %2890 = sbr.rel (0) target = $region61
    $region60: #{lstm_forward.1} parent=1 // pred_region
      %2891 = dma.done [#allocation11], 16
    $region61: #{lstm_forward.1} parent=1 // pred_fallthru
      _
    // Predicated region
    $region62: #{lstm_forward.1} parent=1 // pred_check
      _
    $region63: #{lstm_forward.1} parent=1 // pred_check_branch
      %2893 = sbr.rel (0) target = $region65
    $region64: #{lstm_forward.1} parent=1 // pred_region
      %2894 = dma.done [#allocation11], 32
    $region65: #{lstm_forward.1} parent=1 // pred_fallthru
      _
    %2895 = vsyncpa [#allocation5], 1
    %2896 = vsyncpa [#allocation8], 1
    %2897 = vsyncpa [#allocation6], 1
    %2898 = vsyncpa [#allocation11], 1

</llo_original>
